<compile_context>
chip_gen: v7x
topology: tpu7x:2x2x1
jax: 0.10.0
libtpu: 0.0.40
codegen_flags: <defaults>
</compile_context>

<pallas_src>
import functools

import jax
import jax.numpy as jnp
from jax.experimental import pallas as pl
from jax.experimental.pallas import tpu as pltpu


# ----------------------------- device-aware sizing ---------------------------

def _query_vmem_bytes():
    try:
        return int(pltpu.get_tpu_info().vmem_capacity_bytes)
    except Exception:
        return 64 * 1024 * 1024  # conservative (v7x-sized) fallback


_VMEM_CAP = _query_vmem_bytes()
_BIG_VMEM = _VMEM_CAP >= (96 << 20)           # v5e / v6e (128 MiB) vs v7x (64 MiB)
_VMEM_LIMIT = min(int(_VMEM_CAP * 3 // 4), 100 * 1024 * 1024)
_TM = 512 if _BIG_VMEM else 256               # GEMM M tile
_TK = 512                                     # GEMM K tile cap
_TM_EW = 1024 if _BIG_VMEM else 512           # elementwise M tile


def _round_up(x, m):
    return ((x + m - 1) // m) * m


def _pick_ktile(k, cap):
    """Return (padded_k, tile_k). tile_k is a multiple of 128 unless it spans all of K."""
    if k <= cap:
        return k, k
    for t in (cap, 384, 256, 128):
        if t <= cap and k % t == 0:
            return k, t
    kp = _round_up(k, 128)
    return kp, 128


# ----------------------------- Pallas kernels -------------------------------

def _gemm_fused_kernel(has_pro, m_real, tm, *args):
    """[optional BN+ReLU prologue] -> X @ W (K-tiled, fp32 acc) -> [BN-stats epilogue]."""
    if has_pro:
        x_ref, w_ref, sc_ref, sh_ref, o_ref, s_ref, q_ref, acc_ref = args
    else:
        x_ref, w_ref, o_ref, s_ref, q_ref, acc_ref = args

    kk = pl.program_id(1)

    @pl.when(kk == 0)
    def _():
        acc_ref[...] = jnp.zeros_like(acc_ref)

    x = x_ref[...]
    if has_pro:
        # BN-apply + ReLU of the previous layer, fused as prologue (VPU work hidden
        # under the MXU).
        x = jnp.maximum(x * sc_ref[...] + sh_ref[...], 0.0)
        if m_real % tm != 0:
            # padded tail rows would otherwise pollute the fused BN statistics
            rows = pl.program_id(0) * tm + jax.lax.broadcasted_iota(
                jnp.int32, (tm, 1), 0)
            x = jnp.where(rows < m_real, x, 0.0)

    acc_ref[...] += jnp.dot(x, w_ref[...], preferred_element_type=jnp.float32)

    @pl.when(kk == pl.num_programs(1) - 1)
    def _():
        y = acc_ref[...]
        o_ref[...] = y
        # per-M-tile BN partial stats (epilogue); cross-tile reduce happens outside.
        s_ref[...] = jnp.sum(y, axis=0, keepdims=True)[None]
        q_ref[...] = jnp.sum(y * y, axis=0, keepdims=True)[None]


def _conv3x3_kernel(s, ho, wo, c, *args):
    """One image per grid step: BN1+ReLU prologue, in-VMEM zero-pad, 9-tap dot
    accumulation (no HBM im2col), BN2-stats epilogue."""
    nph = s * s
    phase_refs = args[:nph]
    w_ref, sc_ref, sh_ref = args[nph:nph + 3]
    o_ref, sum_ref, sq_ref = args[nph + 3:nph + 6]
    pad_ref = args[nph + 6]

    pad_ref[...] = jnp.zeros_like(pad_ref)
    scale = sc_ref[...]            # (1, c)
    shift = sh_ref[...]

    # Activate each stride-phase and place it into its zero-padded VMEM plane.
    for pr in range(s):
        for pc in range(s):
            p = pr * s + pc
            ro = 1 if pr == 0 else 0
            co = 1 if pc == 0 else 0
            a = jnp.maximum(phase_refs[p][0] * scale + shift, 0.0)   # (ho, wo, c)
            pad_ref[p, ro:ro + ho, co:co + wo, :] = a

    # 9 taps, all contiguous static slices of the padded phase planes.
    acc = jnp.zeros((ho * wo, c), jnp.float32)
    for dy in range(3):
        for dx in range(3):
            p = (dy % s) * s + (dx % s)
            ro, co = dy // s, dx // s
            patch = pad_ref[p, ro:ro + ho, co:co + wo, :]
            acc += jnp.dot(patch.reshape(ho * wo, c), w_ref[dy * 3 + dx],
                           preferred_element_type=jnp.float32)

    o_ref[...] = acc[None]
    sum_ref[...] = jnp.sum(acc, axis=0, keepdims=True)[None]
    sq_ref[...] = jnp.sum(acc * acc, axis=0, keepdims=True)[None]


def _bn_add_relu_kernel(x_ref, sc_ref, s3_ref, b3_ref, ssc_ref, bsc_ref, o_ref):
    y = (x_ref[...] * s3_ref[...] + b3_ref[...]
         + sc_ref[...] * ssc_ref[...] + bsc_ref[...])
    o_ref[...] = jnp.maximum(y, 0.0)


# ----------------------------- pallas_call wrappers ---------------------------

def pallas_gemm_fused(x, w, scale_in=None, shift_in=None):
    """y = (relu(x*scale_in+shift_in) if prologue else x) @ w.
    Returns (y, per-channel sum of y, per-channel sum of y^2)."""
    m, k = x.shape
    n = w.shape[1]
    has_pro = scale_in is not None

    tm = min(_TM, _round_up(m, 8))
    mp = _round_up(m, tm)
    kp, tk = _pick_ktile(k, _TK)

    if mp != m:
        x = jnp.pad(x, ((0, mp - m), (0, 0)))
    if kp != k:
        x = jnp.pad(x, ((0, 0), (0, kp - k)))
        w = jnp.pad(w, ((0, kp - k), (0, 0)))
        if has_pro:
            scale_in = jnp.pad(scale_in, ((0, 0), (0, kp - k)))
            shift_in = jnp.pad(shift_in, ((0, 0), (0, kp - k)))

    nm, nk = mp // tm, kp // tk

    in_specs = [pl.BlockSpec((tm, tk), lambda i, kk: (i, kk)),
                pl.BlockSpec((tk, n), lambda i, kk: (kk, 0))]
    inputs = [x, w]
    if has_pro:
        in_specs += [pl.BlockSpec((1, tk), lambda i, kk: (0, kk)),
                     pl.BlockSpec((1, tk), lambda i, kk: (0, kk))]
        inputs += [scale_in, shift_in]

    out_shape = (jax.ShapeDtypeStruct((mp, n), jnp.float32),
                 jax.ShapeDtypeStruct((nm, 1, n), jnp.float32),
                 jax.ShapeDtypeStruct((nm, 1, n), jnp.float32))
    out_specs = (pl.BlockSpec((tm, n), lambda i, kk: (i, 0)),
                 pl.BlockSpec((1, 1, n), lambda i, kk: (i, 0, 0)),
                 pl.BlockSpec((1, 1, n), lambda i, kk: (i, 0, 0)))

    y, ps, pq = pl.pallas_call(
        functools.partial(_gemm_fused_kernel, has_pro, m, tm),
        out_shape=out_shape,
        grid=(nm, nk),
        in_specs=in_specs,
        out_specs=out_specs,
        scratch_shapes=[pltpu.VMEM((tm, n), jnp.float32)],
        compiler_params=pltpu.CompilerParams(
            dimension_semantics=("parallel", "arbitrary"),
            vmem_limit_bytes=_VMEM_LIMIT),
    )(*inputs)

    if mp != m:
        y = y[:m]
    return y, jnp.sum(ps, axis=0), jnp.sum(pq, axis=0)


def pallas_conv3x3(y1_nhwc, w2_oihw, scale1, shift1, stride):
    """3x3 conv (pad=1, given stride) with fused BN1+ReLU prologue and BN2-stats
    epilogue.  Input y1 is the raw (pre-BN) conv1 output in NHWC."""
    n, h, w, c = y1_nhwc.shape
    s = stride
    ho = (h - 1) // s + 1
    wo = (w - 1) // s + 1

    # stride-phase views (pure strided slices in XLA; total bytes == 1x y1, not 9x)
    phases = []
    for pr in range(s):
        for pc in range(s):
            r0 = (pr - 1) % s
            c0 = (pc - 1) % s
            phases.append(y1_nhwc[:, r0::s, c0::s, :])          # (n, ho, wo, c)

    w_taps = jnp.transpose(w2_oihw, (2, 3, 1, 0)).reshape(9, c, c)   # HWIO -> (9,Cin,Cout)

    e = 2 // s
    in_specs = ([pl.BlockSpec((1, ho, wo, c), lambda b: (b, 0, 0, 0))
                 for _ in range(s * s)]
                + [pl.BlockSpec((9, c, c), lambda b: (0, 0, 0)),
                   pl.BlockSpec((1, c), lambda b: (0, 0)),
                   pl.BlockSpec((1, c), lambda b: (0, 0))])
    out_shape = (jax.ShapeDtypeStruct((n, ho * wo, c), jnp.float32),
                 jax.ShapeDtypeStruct((n, 1, c), jnp.float32),
                 jax.ShapeDtypeStruct((n, 1, c), jnp.float32))
    out_specs = (pl.BlockSpec((1, ho * wo, c), lambda b: (b, 0, 0)),
                 pl.BlockSpec((1, 1, c), lambda b: (b, 0, 0)),
                 pl.BlockSpec((1, 1, c), lambda b: (b, 0, 0)))

    y2, ps, pq = pl.pallas_call(
        functools.partial(_conv3x3_kernel, s, ho, wo, c),
        out_shape=out_shape,
        grid=(n,),
        in_specs=in_specs,
        out_specs=out_specs,
        scratch_shapes=[pltpu.VMEM((s * s, ho + e, wo + e, c), jnp.float32)],
        compiler_params=pltpu.CompilerParams(
            dimension_semantics=("parallel",),
            vmem_limit_bytes=_VMEM_LIMIT),
    )(*phases, w_taps, scale1, shift1)

    return (y2.reshape(n * ho * wo, c),
            jnp.sum(ps, axis=0),
            jnp.sum(pq, axis=0))


def pallas_bn_add_relu(x3, xsc, s3, b3, ssc, bsc):
    m, c = x3.shape
    tm = min(_TM_EW, _round_up(m, 8))
    mp = _round_up(m, tm)
    if mp != m:
        x3 = jnp.pad(x3, ((0, mp - m), (0, 0)))
        xsc = jnp.pad(xsc, ((0, mp - m), (0, 0)))
    out = pl.pallas_call(
        _bn_add_relu_kernel,
        out_shape=jax.ShapeDtypeStruct((mp, c), jnp.float32),
        grid=(mp // tm,),
        in_specs=[pl.BlockSpec((tm, c), lambda i: (i, 0)),
                  pl.BlockSpec((tm, c), lambda i: (i, 0)),
                  pl.BlockSpec((1, c), lambda i: (0, 0)),
                  pl.BlockSpec((1, c), lambda i: (0, 0)),
                  pl.BlockSpec((1, c), lambda i: (0, 0)),
                  pl.BlockSpec((1, c), lambda i: (0, 0))],
        out_specs=pl.BlockSpec((tm, c), lambda i: (i, 0)),
        compiler_params=pltpu.CompilerParams(
            dimension_semantics=("parallel",),
            vmem_limit_bytes=_VMEM_LIMIT),
    )(x3, xsc, s3, b3, ssc, bsc)
    return out[:m] if mp != m else out


def _bn_scale_shift(ssum, ssq, count, gamma, beta, eps=1e-5):
    """Training-mode BN: batch mean / biased variance folded into affine scale/shift."""
    mean = ssum / count
    var = ssq / count - mean * mean
    # TODO(synk): one-pass variance can lose precision at very large M; switch to a
    # shifted / two-pass accumulation if tolerance issues appear at production scale.
    scale = gamma.reshape(1, -1) / jnp.sqrt(var + eps)
    shift = beta.reshape(1, -1) - mean * scale
    return scale, shift
    # TODO(synk): running_mean/running_var updates (training side-effect) are not
    # reproduced; only the forward output is.


# ----------------------------- module forward --------------------------------

def res_bottleneck_block(x_nchw, p, downsample):
    n, cin, h, w = x_nchw.shape
    cmid = p["w1"].shape[0]
    cout = p["w3"].shape[0]
    s = 2 if downsample else 1
    ho = (h - 1) // s + 1
    wo = (w - 1) // s + 1
    if s == 2:
        assert h % 2 == 0 and w % 2 == 0, "stride-2 path assumes even spatial dims"

    # TODO(synk): these two NCHW<->NHWC transposes disappear if the surrounding model
    # runs NHWC end-to-end.
    x = jnp.transpose(x_nchw, (0, 2, 3, 1))
    x_flat = x.reshape(n * h * w, cin)

    # conv1 (1x1; bias dropped - cancelled by training-mode BN) + fused BN1-stats
    w1m = jnp.transpose(p["w1"][:, :, 0, 0])                   # (Cin, Cmid)
    y1, s1, q1 = pallas_gemm_fused(x_flat, w1m)
    sc1, sh1 = _bn_scale_shift(s1, q1, float(n * h * w), p["g1"], p["be1"])

    # conv2 (3x3, stride s, pad 1): fused BN1+ReLU prologue, in-VMEM tap accumulation,
    # BN2-stats epilogue (no 9x im2col in HBM)
    y2, s2, q2 = pallas_conv3x3(y1.reshape(n, h, w, cmid), p["w2"], sc1, sh1, s)
    sc2, sh2 = _bn_scale_shift(s2, q2, float(n * ho * wo), p["g2"], p["be2"])

    # conv3 (1x1): fused BN2+ReLU prologue + BN3-stats epilogue
    w3m = jnp.transpose(p["w3"][:, :, 0, 0])                   # (Cmid, Cout)
    y3, s3, q3 = pallas_gemm_fused(y2, w3m, sc2, sh2)
    sc3, sh3 = _bn_scale_shift(s3, q3, float(n * ho * wo), p["g3"], p["be3"])

    # shortcut branch
    if downsample or cin != cout:
        xs = x[:, ::s, ::s, :].reshape(n * ho * wo, cin)
        wscm = jnp.transpose(p["wsc"][:, :, 0, 0])
        ysc, ss, qs = pallas_gemm_fused(xs, wscm)
        scsc, shsc = _bn_scale_shift(ss, qs, float(n * ho * wo), p["gsc"], p["besc"])
    else:
        ysc = x_flat
        scsc = jnp.ones((1, cout), jnp.float32)
        shsc = jnp.zeros((1, cout), jnp.float32)

    # final fused BN3-apply + BN_sc-apply + residual add + ReLU
    out = pallas_bn_add_relu(y3, ysc, sc3, sh3, scsc, shsc)
    out = out.reshape(n, ho, wo, cout)
    return jnp.transpose(out, (0, 3, 1, 2))                    # back to NCHW


# ----------------------------- pure-JAX reference ----------------------------

def reference(x_nchw, p, downsample):
    s = 2 if downsample else 1

    def conv(x, w, b, stride, pad):
        y = jax.lax.conv_general_dilated(
            x, w, (stride, stride), ((pad, pad), (pad, pad)),
            dimension_numbers=("NCHW", "OIHW", "NCHW"))
        return y + b.reshape(1, -1, 1, 1)

    def bn(x, g, b, eps=1e-5):
        mean = jnp.mean(x, axis=(0, 2, 3), keepdims=True)
        var = jnp.mean((x - mean) ** 2, axis=(0, 2, 3), keepdims=True)
        return (x - mean) / jnp.sqrt(var + eps) * g.reshape(1, -1, 1, 1) + b.reshape(1, -1, 1, 1)

    cin, cout = x_nchw.shape[1], p["w3"].shape[0]
    y = jax.nn.relu(bn(conv(x_nchw, p["w1"], p["b1"], 1, 0), p["g1"], p["be1"]))
    y = jax.nn.relu(bn(conv(y, p["w2"], p["b2"], s, 1), p["g2"], p["be2"]))
    y = bn(conv(y, p["w3"], p["b3"], 1, 0), p["g3"], p["be3"])
    if downsample or cin != cout:
        sc = bn(conv(x_nchw, p["wsc"], p["bsc"], s, 0), p["gsc"], p["besc"])
    else:
        sc = x_nchw
    return jax.nn.relu(y + sc)


# ----------------------------- main -------------------------------------------

def init_params(key, cin, cout):
    cmid = cout // 4
    ks = jax.random.split(key, 16)
    f32 = jnp.float32

    def nrm(k, shape, scale=0.1):
        return scale * jax.random.normal(k, shape, f32)

    return {
        "w1": nrm(ks[0], (cmid, cin, 1, 1)),  "b1": nrm(ks[1], (cmid,)),
        "w2": nrm(ks[2], (cmid, cmid, 3, 3)), "b2": nrm(ks[3], (cmid,)),
        "w3": nrm(ks[4], (cout, cmid, 1, 1)), "b3": nrm(ks[5], (cout,)),
        "wsc": nrm(ks[6], (cout, cin, 1, 1)), "bsc": nrm(ks[7], (cout,)),
        "g1": 1.0 + nrm(ks[8], (cmid,)),  "be1": nrm(ks[9], (cmid,)),
        "g2": 1.0 + nrm(ks[10], (cmid,)), "be2": nrm(ks[11], (cmid,)),
        "g3": 1.0 + nrm(ks[12], (cout,)), "be3": nrm(ks[13], (cout,)),
        "gsc": 1.0 + nrm(ks[14], (cout,)), "besc": nrm(ks[15], (cout,)),
    }


if __name__ == "__main__":
    N, Cin, H, W = 2, 4, 16, 16
    Cout = 8
    downsample = True

    key = jax.random.PRNGKey(0)
    kx, kp = jax.random.split(key)
    x = jax.random.normal(kx, (N, Cin, H, W), jnp.float32)
    params = init_params(kp, Cin, Cout)

    fwd = jax.jit(res_bottleneck_block, static_argnums=(2,))
    out = jax.block_until_ready(fwd(x, params, downsample))

    ref = jax.block_until_ready(reference(x, params, downsample))
    assert out.shape == ref.shape, (out.shape, ref.shape)
    max_err = float(jnp.max(jnp.abs(out - ref)))
    assert max_err < 1e-3, f"max abs error {max_err}"

    print("KERNEL_OK")
</pallas_src>

<mosaic_0001>
module attributes {stable_mosaic.version = 11 : i64} {
  func.func @_gemm_fused_kernel(%arg0: i32, %arg1: i32, %arg2: memref<256x4xf32, #tpu.memory_space<vmem>>, %arg3: memref<4x2xf32, #tpu.memory_space<vmem>>, %arg4: memref<256x2xf32, #tpu.memory_space<vmem>>, %arg5: memref<1x1x2xf32, #tpu.memory_space<vmem>>, %arg6: memref<1x1x2xf32, #tpu.memory_space<vmem>>, %arg7: memref<256x2xf32, #tpu.memory_space<vmem>>) attributes {dimension_semantics = [#tpu.dimension_semantics<parallel>, #tpu.dimension_semantics<arbitrary>], iteration_bounds = array<i64: 2, 1>, scalar_prefetch = 0 : i64, scratch_operands = 1 : i64, tpu.core_type = #tpu.core_type<tc>, window_params = [{transform_indices = @transform_0, window_bounds = array<i64: 256, 4>}, {transform_indices = @transform_1, window_bounds = array<i64: 4, 2>}, {transform_indices = @transform_2, window_bounds = array<i64: 256, 2>}, {transform_indices = @transform_3, window_bounds = array<i64: 1, 1, 2>}, {transform_indices = @transform_4, window_bounds = array<i64: 1, 1, 2>}]} {
    %c0_i32 = arith.constant 0 : i32
    %0 = arith.cmpi eq, %arg1, %c0_i32 : i32
    %1 = arith.extui %0 : i1 to i32
    %c0_i32_0 = arith.constant 0 : i32
    %2 = arith.cmpi ne, %1, %c0_i32_0 : i32
    scf.if %2 {
      %cst_10 = arith.constant 0.000000e+00 : f32
      %12 = vector.broadcast %cst_10 : f32 to vector<256x2xf32>
      %c0_11 = arith.constant 0 : index
      %c0_12 = arith.constant 0 : index
      %13 = vector.load %arg7[%c0_11, %c0_12] : memref<256x2xf32, #tpu.memory_space<vmem>>, vector<256x2xf32>
      tpu.vector_store %arg7[%c0_11, %c0_12], %12 {strides = array<i32>} : memref<256x2xf32, #tpu.memory_space<vmem>>, vector<256x2xf32>,
    } else {
    }
    %c0 = arith.constant 0 : index
    %c0_1 = arith.constant 0 : index
    %3 = vector.load %arg2[%c0, %c0_1] : memref<256x4xf32, #tpu.memory_space<vmem>>, vector<256x4xf32>
    %c0_2 = arith.constant 0 : index
    %c0_3 = arith.constant 0 : index
    %4 = vector.load %arg7[%c0_2, %c0_3] : memref<256x2xf32, #tpu.memory_space<vmem>>, vector<256x2xf32>
    %c0_4 = arith.constant 0 : index
    %c0_5 = arith.constant 0 : index
    %5 = vector.load %arg3[%c0_4, %c0_5] : memref<4x2xf32, #tpu.memory_space<vmem>>, vector<4x2xf32>
    %cst = arith.constant dense<0.000000e+00> : vector<256x2xf32>
    %6 = tpu.matmul %3, %5, %cst {dimension_numbers = #tpu.dot_dimension_numbers<[1], [0], [0], [1], [0, 0, 1, 1], [], []>} : vector<256x4xf32>, vector<4x2xf32>, vector<256x2xf32> -> vector<256x2xf32>
    %7 = arith.addf %4, %6 : vector<256x2xf32>
    %c0_6 = arith.constant 0 : index
    %c0_7 = arith.constant 0 : index
    %8 = vector.load %arg7[%c0_6, %c0_7] : memref<256x2xf32, #tpu.memory_space<vmem>>, vector<256x2xf32>
    tpu.vector_store %arg7[%c0_6, %c0_7], %7 {strides = array<i32>} : memref<256x2xf32, #tpu.memory_space<vmem>>, vector<256x2xf32>,
    %c0_i32_8 = arith.constant 0 : i32
    %9 = arith.cmpi eq, %arg1, %c0_i32_8 : i32
    %10 = arith.extui %9 : i1 to i32
    %c0_i32_9 = arith.constant 0 : i32
    %11 = arith.cmpi ne, %10, %c0_i32_9 : i32
    scf.if %11 {
      %c0_10 = arith.constant 0 : index
      %c0_11 = arith.constant 0 : index
      %12 = vector.load %arg7[%c0_10, %c0_11] : memref<256x2xf32, #tpu.memory_space<vmem>>, vector<256x2xf32>
      %c0_12 = arith.constant 0 : index
      %c0_13 = arith.constant 0 : index
      %13 = vector.load %arg4[%c0_12, %c0_13] : memref<256x2xf32, #tpu.memory_space<vmem>>, vector<256x2xf32>
      tpu.vector_store %arg4[%c0_12, %c0_13], %12 {strides = array<i32>} : memref<256x2xf32, #tpu.memory_space<vmem>>, vector<256x2xf32>,
      %cst_14 = arith.constant dense<0.000000e+00> : vector<2xf32>
      %14 = vector.multi_reduction <add>, %12, %cst_14 [0] : vector<256x2xf32> to vector<2xf32>
      %15 = vector.shape_cast %14 : vector<2xf32> to vector<1x2xf32>
      %16 = vector.shape_cast %15 : vector<1x2xf32> to vector<1x1x2xf32>
      %c0_15 = arith.constant 0 : index
      %c0_16 = arith.constant 0 : index
      %c0_17 = arith.constant 0 : index
      %17 = vector.load %arg5[%c0_15, %c0_16, %c0_17] : memref<1x1x2xf32, #tpu.memory_space<vmem>>, vector<1x1x2xf32>
      tpu.vector_store %arg5[%c0_15, %c0_16, %c0_17], %16 {strides = array<i32>} : memref<1x1x2xf32, #tpu.memory_space<vmem>>, vector<1x1x2xf32>,
      %18 = arith.mulf %12, %12 : vector<256x2xf32>
      %cst_18 = arith.constant dense<0.000000e+00> : vector<2xf32>
      %19 = vector.multi_reduction <add>, %18, %cst_18 [0] : vector<256x2xf32> to vector<2xf32>
      %20 = vector.shape_cast %19 : vector<2xf32> to vector<1x2xf32>
      %21 = vector.shape_cast %20 : vector<1x2xf32> to vector<1x1x2xf32>
      %c0_19 = arith.constant 0 : index
      %c0_20 = arith.constant 0 : index
      %c0_21 = arith.constant 0 : index
      %22 = vector.load %arg6[%c0_19, %c0_20, %c0_21] : memref<1x1x2xf32, #tpu.memory_space<vmem>>, vector<1x1x2xf32>
      tpu.vector_store %arg6[%c0_19, %c0_20, %c0_21], %21 {strides = array<i32>} : memref<1x1x2xf32, #tpu.memory_space<vmem>>, vector<1x1x2xf32>,
    } else {
    }
    return
  }
  func.func @transform_0(%arg0: i32, %arg1: i32) -> (i32, i32) {
    %c0_i32 = arith.constant 0 : i32
    return %arg0, %arg1 : i32, i32
  }
  func.func @transform_1(%arg0: i32, %arg1: i32) -> (i32, i32) {
    %c0_i32 = arith.constant 0 : i32
    %c0_i32_0 = arith.constant 0 : i32
    return %arg1, %c0_i32 : i32, i32
  }
  func.func @transform_2(%arg0: i32, %arg1: i32) -> (i32, i32) {
    %c0_i32 = arith.constant 0 : i32
    %c0_i32_0 = arith.constant 0 : i32
    return %arg0, %c0_i32 : i32, i32
  }
  func.func @transform_3(%arg0: i32, %arg1: i32) -> (i32, i32, i32) {
    %c0_i32 = arith.constant 0 : i32
    %c0_i32_0 = arith.constant 0 : i32
    %c0_i32_1 = arith.constant 0 : i32
    return %arg0, %c0_i32, %c0_i32_0 : i32, i32, i32
  }
  func.func @transform_4(%arg0: i32, %arg1: i32) -> (i32, i32, i32) {
    %c0_i32 = arith.constant 0 : i32
    %c0_i32_0 = arith.constant 0 : i32
    %c0_i32_1 = arith.constant 0 : i32
    return %arg0, %c0_i32, %c0_i32_0 : i32, i32, i32
  }
}

module attributes {stable_mosaic.version = 11 : i64} {
  func.func @_gemm_fused_kernel(%arg0: i32, %arg1: i32, %arg2: memref<128x2xf32, #tpu.memory_space<vmem>>, %arg3: memref<2x8xf32, #tpu.memory_space<vmem>>, %arg4: memref<1x2xf32, #tpu.memory_space<vmem>>, %arg5: memref<1x2xf32, #tpu.memory_space<vmem>>, %arg6: memref<128x8xf32, #tpu.memory_space<vmem>>, %arg7: memref<1x1x8xf32, #tpu.memory_space<vmem>>, %arg8: memref<1x1x8xf32, #tpu.memory_space<vmem>>, %arg9: memref<128x8xf32, #tpu.memory_space<vmem>>) attributes {dimension_semantics = [#tpu.dimension_semantics<parallel>, #tpu.dimension_semantics<arbitrary>], iteration_bounds = array<i64: 1, 1>, scalar_prefetch = 0 : i64, scratch_operands = 1 : i64, tpu.core_type = #tpu.core_type<tc>, window_params = [{transform_indices = @transform_0, window_bounds = array<i64: 128, 2>}, {transform_indices = @transform_1, window_bounds = array<i64: 2, 8>}, {transform_indices = @transform_2, window_bounds = array<i64: 1, 2>}, {transform_indices = @transform_3, window_bounds = array<i64: 1, 2>}, {transform_indices = @transform_4, window_bounds = array<i64: 128, 8>}, {transform_indices = @transform_5, window_bounds = array<i64: 1, 1, 8>}, {transform_indices = @transform_6, window_bounds = array<i64: 1, 1, 8>}]} {
    %c0_i32 = arith.constant 0 : i32
    %0 = arith.cmpi eq, %arg1, %c0_i32 : i32
    %1 = arith.extui %0 : i1 to i32
    %c0_i32_0 = arith.constant 0 : i32
    %2 = arith.cmpi ne, %1, %c0_i32_0 : i32
    scf.if %2 {
      %cst_15 = arith.constant 0.000000e+00 : f32
      %20 = vector.broadcast %cst_15 : f32 to vector<128x8xf32>
      %c0_16 = arith.constant 0 : index
      %c0_17 = arith.constant 0 : index
      %21 = vector.load %arg9[%c0_16, %c0_17] : memref<128x8xf32, #tpu.memory_space<vmem>>, vector<128x8xf32>
      tpu.vector_store %arg9[%c0_16, %c0_17], %20 {strides = array<i32>} : memref<128x8xf32, #tpu.memory_space<vmem>>, vector<128x8xf32>,
    } else {
    }
    %c0 = arith.constant 0 : index
    %c0_1 = arith.constant 0 : index
    %3 = vector.load %arg2[%c0, %c0_1] : memref<128x2xf32, #tpu.memory_space<vmem>>, vector<128x2xf32>
    %c0_2 = arith.constant 0 : index
    %c0_3 = arith.constant 0 : index
    %4 = vector.load %arg4[%c0_2, %c0_3] : memref<1x2xf32, #tpu.memory_space<vmem>>, vector<1x2xf32>
    %5 = vector.broadcast %4 : vector<1x2xf32> to vector<128x2xf32>
    %6 = arith.mulf %3, %5 : vector<128x2xf32>
    %c0_4 = arith.constant 0 : index
    %c0_5 = arith.constant 0 : index
    %7 = vector.load %arg5[%c0_4, %c0_5] : memref<1x2xf32, #tpu.memory_space<vmem>>, vector<1x2xf32>
    %8 = vector.broadcast %7 : vector<1x2xf32> to vector<128x2xf32>
    %9 = arith.addf %6, %8 : vector<128x2xf32>
    %cst = arith.constant 0.000000e+00 : f32
    %10 = vector.broadcast %cst : f32 to vector<128x2xf32>
    %11 = arith.maximumf %9, %10 : vector<128x2xf32>
    %c0_6 = arith.constant 0 : index
    %c0_7 = arith.constant 0 : index
    %12 = vector.load %arg9[%c0_6, %c0_7] : memref<128x8xf32, #tpu.memory_space<vmem>>, vector<128x8xf32>
    %c0_8 = arith.constant 0 : index
    %c0_9 = arith.constant 0 : index
    %13 = vector.load %arg3[%c0_8, %c0_9] : memref<2x8xf32, #tpu.memory_space<vmem>>, vector<2x8xf32>
    %cst_10 = arith.constant dense<0.000000e+00> : vector<128x8xf32>
    %14 = tpu.matmul %11, %13, %cst_10 {dimension_numbers = #tpu.dot_dimension_numbers<[1], [0], [0], [1], [0, 0, 1, 1], [], []>} : vector<128x2xf32>, vector<2x8xf32>, vector<128x8xf32> -> vector<128x8xf32>
    %15 = arith.addf %12, %14 : vector<128x8xf32>
    %c0_11 = arith.constant 0 : index
    %c0_12 = arith.constant 0 : index
    %16 = vector.load %arg9[%c0_11, %c0_12] : memref<128x8xf32, #tpu.memory_space<vmem>>, vector<128x8xf32>
    tpu.vector_store %arg9[%c0_11, %c0_12], %15 {strides = array<i32>} : memref<128x8xf32, #tpu.memory_space<vmem>>, vector<128x8xf32>,
    %c0_i32_13 = arith.constant 0 : i32
    %17 = arith.cmpi eq, %arg1, %c0_i32_13 : i32
    %18 = arith.extui %17 : i1 to i32
    %c0_i32_14 = arith.constant 0 : i32
    %19 = arith.cmpi ne, %18, %c0_i32_14 : i32
    scf.if %19 {
      %c0_15 = arith.constant 0 : index
      %c0_16 = arith.constant 0 : index
      %20 = vector.load %arg9[%c0_15, %c0_16] : memref<128x8xf32, #tpu.memory_space<vmem>>, vector<128x8xf32>
      %c0_17 = arith.constant 0 : index
      %c0_18 = arith.constant 0 : index
      %21 = vector.load %arg6[%c0_17, %c0_18] : memref<128x8xf32, #tpu.memory_space<vmem>>, vector<128x8xf32>
      tpu.vector_store %arg6[%c0_17, %c0_18], %20 {strides = array<i32>} : memref<128x8xf32, #tpu.memory_space<vmem>>, vector<128x8xf32>,
      %cst_19 = arith.constant dense<0.000000e+00> : vector<8xf32>
      %22 = vector.multi_reduction <add>, %20, %cst_19 [0] : vector<128x8xf32> to vector<8xf32>
      %23 = vector.shape_cast %22 : vector<8xf32> to vector<1x8xf32>
      %24 = vector.shape_cast %23 : vector<1x8xf32> to vector<1x1x8xf32>
      %c0_20 = arith.constant 0 : index
      %c0_21 = arith.constant 0 : index
      %c0_22 = arith.constant 0 : index
      %25 = vector.load %arg7[%c0_20, %c0_21, %c0_22] : memref<1x1x8xf32, #tpu.memory_space<vmem>>, vector<1x1x8xf32>
      tpu.vector_store %arg7[%c0_20, %c0_21, %c0_22], %24 {strides = array<i32>} : memref<1x1x8xf32, #tpu.memory_space<vmem>>, vector<1x1x8xf32>,
      %26 = arith.mulf %20, %20 : vector<128x8xf32>
      %cst_23 = arith.constant dense<0.000000e+00> : vector<8xf32>
      %27 = vector.multi_reduction <add>, %26, %cst_23 [0] : vector<128x8xf32> to vector<8xf32>
      %28 = vector.shape_cast %27 : vector<8xf32> to vector<1x8xf32>
      %29 = vector.shape_cast %28 : vector<1x8xf32> to vector<1x1x8xf32>
      %c0_24 = arith.constant 0 : index
      %c0_25 = arith.constant 0 : index
      %c0_26 = arith.constant 0 : index
      %30 = vector.load %arg8[%c0_24, %c0_25, %c0_26] : memref<1x1x8xf32, #tpu.memory_space<vmem>>, vector<1x1x8xf32>
      tpu.vector_store %arg8[%c0_24, %c0_25, %c0_26], %29 {strides = array<i32>} : memref<1x1x8xf32, #tpu.memory_space<vmem>>, vector<1x1x8xf32>,
    } else {
    }
    return
  }
  func.func @transform_0(%arg0: i32, %arg1: i32) -> (i32, i32) {
    %c0_i32 = arith.constant 0 : i32
    return %arg0, %arg1 : i32, i32
  }
  func.func @transform_1(%arg0: i32, %arg1: i32) -> (i32, i32) {
    %c0_i32 = arith.constant 0 : i32
    %c0_i32_0 = arith.constant 0 : i32
    return %arg1, %c0_i32 : i32, i32
  }
  func.func @transform_2(%arg0: i32, %arg1: i32) -> (i32, i32) {
    %c0_i32 = arith.constant 0 : i32
    %c0_i32_0 = arith.constant 0 : i32
    return %c0_i32, %arg1 : i32, i32
  }
  func.func @transform_3(%arg0: i32, %arg1: i32) -> (i32, i32) {
    %c0_i32 = arith.constant 0 : i32
    %c0_i32_0 = arith.constant 0 : i32
    return %c0_i32, %arg1 : i32, i32
  }
  func.func @transform_4(%arg0: i32, %arg1: i32) -> (i32, i32) {
    %c0_i32 = arith.constant 0 : i32
    %c0_i32_0 = arith.constant 0 : i32
    return %arg0, %c0_i32 : i32, i32
  }
  func.func @transform_5(%arg0: i32, %arg1: i32) -> (i32, i32, i32) {
    %c0_i32 = arith.constant 0 : i32
    %c0_i32_0 = arith.constant 0 : i32
    %c0_i32_1 = arith.constant 0 : i32
    return %arg0, %c0_i32, %c0_i32_0 : i32, i32, i32
  }
  func.func @transform_6(%arg0: i32, %arg1: i32) -> (i32, i32, i32) {
    %c0_i32 = arith.constant 0 : i32
    %c0_i32_0 = arith.constant 0 : i32
    %c0_i32_1 = arith.constant 0 : i32
    return %arg0, %c0_i32, %c0_i32_0 : i32, i32, i32
  }
}

module attributes {stable_mosaic.version = 11 : i64} {
  func.func @_conv3x3_kernel(%arg0: i32, %arg1: memref<1x8x8x2xf32, #tpu.memory_space<vmem>>, %arg2: memref<1x8x8x2xf32, #tpu.memory_space<vmem>>, %arg3: memref<1x8x8x2xf32, #tpu.memory_space<vmem>>, %arg4: memref<1x8x8x2xf32, #tpu.memory_space<vmem>>, %arg5: memref<9x2x2xf32, #tpu.memory_space<vmem>>, %arg6: memref<1x2xf32, #tpu.memory_space<vmem>>, %arg7: memref<1x2xf32, #tpu.memory_space<vmem>>, %arg8: memref<1x64x2xf32, #tpu.memory_space<vmem>>, %arg9: memref<1x1x2xf32, #tpu.memory_space<vmem>>, %arg10: memref<1x1x2xf32, #tpu.memory_space<vmem>>, %arg11: memref<4x9x9x2xf32, #tpu.memory_space<vmem>>) attributes {dimension_semantics = [#tpu.dimension_semantics<parallel>], iteration_bounds = array<i64: 2>, scalar_prefetch = 0 : i64, scratch_operands = 1 : i64, tpu.core_type = #tpu.core_type<tc>, window_params = [{transform_indices = @transform_0, window_bounds = array<i64: 1, 8, 8, 2>}, {transform_indices = @transform_1, window_bounds = array<i64: 1, 8, 8, 2>}, {transform_indices = @transform_2, window_bounds = array<i64: 1, 8, 8, 2>}, {transform_indices = @transform_3, window_bounds = array<i64: 1, 8, 8, 2>}, {pipeline_mode = #tpu.pipeline_mode<synchronous>, transform_indices = @transform_4, window_bounds = array<i64: 9, 2, 2>}, {pipeline_mode = #tpu.pipeline_mode<synchronous>, transform_indices = @transform_5, window_bounds = array<i64: 1, 2>}, {pipeline_mode = #tpu.pipeline_mode<synchronous>, transform_indices = @transform_6, window_bounds = array<i64: 1, 2>}, {transform_indices = @transform_7, window_bounds = array<i64: 1, 64, 2>}, {transform_indices = @transform_8, window_bounds = array<i64: 1, 1, 2>}, {transform_indices = @transform_9, window_bounds = array<i64: 1, 1, 2>}]} {
    %cst = arith.constant 0.000000e+00 : f32
    %0 = vector.broadcast %cst : f32 to vector<4x9x9x2xf32>
    %c0 = arith.constant 0 : index
    %c0_0 = arith.constant 0 : index
    %c0_1 = arith.constant 0 : index
    %c0_2 = arith.constant 0 : index
    %1 = vector.load %arg11[%c0, %c0_0, %c0_1, %c0_2] : memref<4x9x9x2xf32, #tpu.memory_space<vmem>>, vector<4x9x9x2xf32>
    tpu.vector_store %arg11[%c0, %c0_0, %c0_1, %c0_2], %0 {strides = array<i32>} : memref<4x9x9x2xf32, #tpu.memory_space<vmem>>, vector<4x9x9x2xf32>,
    %c0_3 = arith.constant 0 : index
    %c0_4 = arith.constant 0 : index
    %2 = vector.load %arg6[%c0_3, %c0_4] : memref<1x2xf32, #tpu.memory_space<vmem>>, vector<1x2xf32>
    %c0_5 = arith.constant 0 : index
    %c0_6 = arith.constant 0 : index
    %3 = vector.load %arg7[%c0_5, %c0_6] : memref<1x2xf32, #tpu.memory_space<vmem>>, vector<1x2xf32>
    %c0_7 = arith.constant 0 : index
    %c0_8 = arith.constant 0 : index
    %c0_9 = arith.constant 0 : index
    %c0_10 = arith.constant 0 : index
    %4 = vector.load %arg1[%c0_7, %c0_8, %c0_9, %c0_10] : memref<1x8x8x2xf32, #tpu.memory_space<vmem>>, vector<1x8x8x2xf32>
    %5 = vector.shape_cast %4 : vector<1x8x8x2xf32> to vector<8x8x2xf32>
    %6 = vector.shape_cast %2 : vector<1x2xf32> to vector<1x1x2xf32>
    %7 = vector.broadcast %6 : vector<1x1x2xf32> to vector<8x8x2xf32>
    %8 = arith.mulf %5, %7 : vector<8x8x2xf32>
    %9 = vector.shape_cast %3 : vector<1x2xf32> to vector<1x1x2xf32>
    %10 = vector.broadcast %9 : vector<1x1x2xf32> to vector<8x8x2xf32>
    %11 = arith.addf %8, %10 : vector<8x8x2xf32>
    %cst_11 = arith.constant 0.000000e+00 : f32
    %12 = vector.broadcast %cst_11 : f32 to vector<8x8x2xf32>
    %13 = arith.maximumf %11, %12 : vector<8x8x2xf32>
    %c0_12 = arith.constant 0 : index
    %c1 = arith.constant 1 : index
    %c1_13 = arith.constant 1 : index
    %c0_14 = arith.constant 0 : index
    %14 = vector.load %arg11[%c0_12, %c1, %c1_13, %c0_14] : memref<4x9x9x2xf32, #tpu.memory_space<vmem>>, vector<1x8x8x2xf32>
    %15 = vector.shape_cast %14 : vector<1x8x8x2xf32> to vector<8x8x2xf32>
    %16 = vector.shape_cast %13 : vector<8x8x2xf32> to vector<1x8x8x2xf32>
    tpu.vector_store %arg11[%c0_12, %c1, %c1_13, %c0_14], %16 {strides = array<i32>} : memref<4x9x9x2xf32, #tpu.memory_space<vmem>>, vector<1x8x8x2xf32>,
    %c0_15 = arith.constant 0 : index
    %c0_16 = arith.constant 0 : index
    %c0_17 = arith.constant 0 : index
    %c0_18 = arith.constant 0 : index
    %17 = vector.load %arg2[%c0_15, %c0_16, %c0_17, %c0_18] : memref<1x8x8x2xf32, #tpu.memory_space<vmem>>, vector<1x8x8x2xf32>
    %18 = vector.shape_cast %17 : vector<1x8x8x2xf32> to vector<8x8x2xf32>
    %19 = vector.shape_cast %2 : vector<1x2xf32> to vector<1x1x2xf32>
    %20 = vector.broadcast %19 : vector<1x1x2xf32> to vector<8x8x2xf32>
    %21 = arith.mulf %18, %20 : vector<8x8x2xf32>
    %22 = vector.shape_cast %3 : vector<1x2xf32> to vector<1x1x2xf32>
    %23 = vector.broadcast %22 : vector<1x1x2xf32> to vector<8x8x2xf32>
    %24 = arith.addf %21, %23 : vector<8x8x2xf32>
    %cst_19 = arith.constant 0.000000e+00 : f32
    %25 = vector.broadcast %cst_19 : f32 to vector<8x8x2xf32>
    %26 = arith.maximumf %24, %25 : vector<8x8x2xf32>
    %c1_20 = arith.constant 1 : index
    %c1_21 = arith.constant 1 : index
    %c0_22 = arith.constant 0 : index
    %c0_23 = arith.constant 0 : index
    %27 = vector.load %arg11[%c1_20, %c1_21, %c0_22, %c0_23] : memref<4x9x9x2xf32, #tpu.memory_space<vmem>>, vector<1x8x8x2xf32>
    %28 = vector.shape_cast %27 : vector<1x8x8x2xf32> to vector<8x8x2xf32>
    %29 = vector.shape_cast %26 : vector<8x8x2xf32> to vector<1x8x8x2xf32>
    tpu.vector_store %arg11[%c1_20, %c1_21, %c0_22, %c0_23], %29 {strides = array<i32>} : memref<4x9x9x2xf32, #tpu.memory_space<vmem>>, vector<1x8x8x2xf32>,
    %c0_24 = arith.constant 0 : index
    %c0_25 = arith.constant 0 : index
    %c0_26 = arith.constant 0 : index
    %c0_27 = arith.constant 0 : index
    %30 = vector.load %arg3[%c0_24, %c0_25, %c0_26, %c0_27] : memref<1x8x8x2xf32, #tpu.memory_space<vmem>>, vector<1x8x8x2xf32>
    %31 = vector.shape_cast %30 : vector<1x8x8x2xf32> to vector<8x8x2xf32>
    %32 = vector.shape_cast %2 : vector<1x2xf32> to vector<1x1x2xf32>
    %33 = vector.broadcast %32 : vector<1x1x2xf32> to vector<8x8x2xf32>
    %34 = arith.mulf %31, %33 : vector<8x8x2xf32>
    %35 = vector.shape_cast %3 : vector<1x2xf32> to vector<1x1x2xf32>
    %36 = vector.broadcast %35 : vector<1x1x2xf32> to vector<8x8x2xf32>
    %37 = arith.addf %34, %36 : vector<8x8x2xf32>
    %cst_28 = arith.constant 0.000000e+00 : f32
    %38 = vector.broadcast %cst_28 : f32 to vector<8x8x2xf32>
    %39 = arith.maximumf %37, %38 : vector<8x8x2xf32>
    %c2 = arith.constant 2 : index
    %c0_29 = arith.constant 0 : index
    %c1_30 = arith.constant 1 : index
    %c0_31 = arith.constant 0 : index
    %40 = vector.load %arg11[%c2, %c0_29, %c1_30, %c0_31] : memref<4x9x9x2xf32, #tpu.memory_space<vmem>>, vector<1x8x8x2xf32>
    %41 = vector.shape_cast %40 : vector<1x8x8x2xf32> to vector<8x8x2xf32>
    %42 = vector.shape_cast %39 : vector<8x8x2xf32> to vector<1x8x8x2xf32>
    tpu.vector_store %arg11[%c2, %c0_29, %c1_30, %c0_31], %42 {strides = array<i32>} : memref<4x9x9x2xf32, #tpu.memory_space<vmem>>, vector<1x8x8x2xf32>,
    %c0_32 = arith.constant 0 : index
    %c0_33 = arith.constant 0 : index
    %c0_34 = arith.constant 0 : index
    %c0_35 = arith.constant 0 : index
    %43 = vector.load %arg4[%c0_32, %c0_33, %c0_34, %c0_35] : memref<1x8x8x2xf32, #tpu.memory_space<vmem>>, vector<1x8x8x2xf32>
    %44 = vector.shape_cast %43 : vector<1x8x8x2xf32> to vector<8x8x2xf32>
    %45 = vector.shape_cast %2 : vector<1x2xf32> to vector<1x1x2xf32>
    %46 = vector.broadcast %45 : vector<1x1x2xf32> to vector<8x8x2xf32>
    %47 = arith.mulf %44, %46 : vector<8x8x2xf32>
    %48 = vector.shape_cast %3 : vector<1x2xf32> to vector<1x1x2xf32>
    %49 = vector.broadcast %48 : vector<1x1x2xf32> to vector<8x8x2xf32>
    %50 = arith.addf %47, %49 : vector<8x8x2xf32>
    %cst_36 = arith.constant 0.000000e+00 : f32
    %51 = vector.broadcast %cst_36 : f32 to vector<8x8x2xf32>
    %52 = arith.maximumf %50, %51 : vector<8x8x2xf32>
    %c3 = arith.constant 3 : index
    %c0_37 = arith.constant 0 : index
    %c0_38 = arith.constant 0 : index
    %c0_39 = arith.constant 0 : index
    %53 = vector.load %arg11[%c3, %c0_37, %c0_38, %c0_39] : memref<4x9x9x2xf32, #tpu.memory_space<vmem>>, vector<1x8x8x2xf32>
    %54 = vector.shape_cast %53 : vector<1x8x8x2xf32> to vector<8x8x2xf32>
    %55 = vector.shape_cast %52 : vector<8x8x2xf32> to vector<1x8x8x2xf32>
    tpu.vector_store %arg11[%c3, %c0_37, %c0_38, %c0_39], %55 {strides = array<i32>} : memref<4x9x9x2xf32, #tpu.memory_space<vmem>>, vector<1x8x8x2xf32>,
    %cst_40 = arith.constant 0.000000e+00 : f32
    %56 = vector.broadcast %cst_40 : f32 to vector<64x2xf32>
    %c0_41 = arith.constant 0 : index
    %c0_42 = arith.constant 0 : index
    %c0_43 = arith.constant 0 : index
    %c0_44 = arith.constant 0 : index
    %57 = vector.load %arg11[%c0_41, %c0_42, %c0_43, %c0_44] : memref<4x9x9x2xf32, #tpu.memory_space<vmem>>, vector<1x8x8x2xf32>
    %58 = vector.shape_cast %57 : vector<1x8x8x2xf32> to vector<8x8x2xf32>
    %59 = vector.shape_cast %58 : vector<8x8x2xf32> to vector<64x2xf32>
    %c0_45 = arith.constant 0 : index
    %c0_46 = arith.constant 0 : index
    %c0_47 = arith.constant 0 : index
    %60 = vector.load %arg5[%c0_45, %c0_46, %c0_47] : memref<9x2x2xf32, #tpu.memory_space<vmem>>, vector<1x2x2xf32>
    %61 = vector.shape_cast %60 : vector<1x2x2xf32> to vector<2x2xf32>
    %cst_48 = arith.constant dense<0.000000e+00> : vector<64x2xf32>
    %62 = tpu.matmul %59, %61, %cst_48 {dimension_numbers = #tpu.dot_dimension_numbers<[1], [0], [0], [1], [0, 0, 1, 1], [], []>} : vector<64x2xf32>, vector<2x2xf32>, vector<64x2xf32> -> vector<64x2xf32>
    %63 = arith.addf %56, %62 : vector<64x2xf32>
    %c1_49 = arith.constant 1 : index
    %c0_50 = arith.constant 0 : index
    %c0_51 = arith.constant 0 : index
    %c0_52 = arith.constant 0 : index
    %64 = vector.load %arg11[%c1_49, %c0_50, %c0_51, %c0_52] : memref<4x9x9x2xf32, #tpu.memory_space<vmem>>, vector<1x8x8x2xf32>
    %65 = vector.shape_cast %64 : vector<1x8x8x2xf32> to vector<8x8x2xf32>
    %66 = vector.shape_cast %65 : vector<8x8x2xf32> to vector<64x2xf32>
    %c1_53 = arith.constant 1 : index
    %c0_54 = arith.constant 0 : index
    %c0_55 = arith.constant 0 : index
    %67 = vector.load %arg5[%c1_53, %c0_54, %c0_55] : memref<9x2x2xf32, #tpu.memory_space<vmem>>, vector<1x2x2xf32>
    %68 = vector.shape_cast %67 : vector<1x2x2xf32> to vector<2x2xf32>
    %cst_56 = arith.constant dense<0.000000e+00> : vector<64x2xf32>
    %69 = tpu.matmul %66, %68, %cst_56 {dimension_numbers = #tpu.dot_dimension_numbers<[1], [0], [0], [1], [0, 0, 1, 1], [], []>} : vector<64x2xf32>, vector<2x2xf32>, vector<64x2xf32> -> vector<64x2xf32>
    %70 = arith.addf %63, %69 : vector<64x2xf32>
    %c0_57 = arith.constant 0 : index
    %c0_58 = arith.constant 0 : index
    %c1_59 = arith.constant 1 : index
    %c0_60 = arith.constant 0 : index
    %71 = vector.load %arg11[%c0_57, %c0_58, %c1_59, %c0_60] : memref<4x9x9x2xf32, #tpu.memory_space<vmem>>, vector<1x8x8x2xf32>
    %72 = vector.shape_cast %71 : vector<1x8x8x2xf32> to vector<8x8x2xf32>
    %73 = vector.shape_cast %72 : vector<8x8x2xf32> to vector<64x2xf32>
    %c2_61 = arith.constant 2 : index
    %c0_62 = arith.constant 0 : index
    %c0_63 = arith.constant 0 : index
    %74 = vector.load %arg5[%c2_61, %c0_62, %c0_63] : memref<9x2x2xf32, #tpu.memory_space<vmem>>, vector<1x2x2xf32>
    %75 = vector.shape_cast %74 : vector<1x2x2xf32> to vector<2x2xf32>
    %cst_64 = arith.constant dense<0.000000e+00> : vector<64x2xf32>
    %76 = tpu.matmul %73, %75, %cst_64 {dimension_numbers = #tpu.dot_dimension_numbers<[1], [0], [0], [1], [0, 0, 1, 1], [], []>} : vector<64x2xf32>, vector<2x2xf32>, vector<64x2xf32> -> vector<64x2xf32>
    %77 = arith.addf %70, %76 : vector<64x2xf32>
    %c2_65 = arith.constant 2 : index
    %c0_66 = arith.constant 0 : index
    %c0_67 = arith.constant 0 : index
    %c0_68 = arith.constant 0 : index
    %78 = vector.load %arg11[%c2_65, %c0_66, %c0_67, %c0_68] : memref<4x9x9x2xf32, #tpu.memory_space<vmem>>, vector<1x8x8x2xf32>
    %79 = vector.shape_cast %78 : vector<1x8x8x2xf32> to vector<8x8x2xf32>
    %80 = vector.shape_cast %79 : vector<8x8x2xf32> to vector<64x2xf32>
    %c3_69 = arith.constant 3 : index
    %c0_70 = arith.constant 0 : index
    %c0_71 = arith.constant 0 : index
    %81 = vector.load %arg5[%c3_69, %c0_70, %c0_71] : memref<9x2x2xf32, #tpu.memory_space<vmem>>, vector<1x2x2xf32>
    %82 = vector.shape_cast %81 : vector<1x2x2xf32> to vector<2x2xf32>
    %cst_72 = arith.constant dense<0.000000e+00> : vector<64x2xf32>
    %83 = tpu.matmul %80, %82, %cst_72 {dimension_numbers = #tpu.dot_dimension_numbers<[1], [0], [0], [1], [0, 0, 1, 1], [], []>} : vector<64x2xf32>, vector<2x2xf32>, vector<64x2xf32> -> vector<64x2xf32>
    %84 = arith.addf %77, %83 : vector<64x2xf32>
    %c3_73 = arith.constant 3 : index
    %c0_74 = arith.constant 0 : index
    %c0_75 = arith.constant 0 : index
    %c0_76 = arith.constant 0 : index
    %85 = vector.load %arg11[%c3_73, %c0_74, %c0_75, %c0_76] : memref<4x9x9x2xf32, #tpu.memory_space<vmem>>, vector<1x8x8x2xf32>
    %86 = vector.shape_cast %85 : vector<1x8x8x2xf32> to vector<8x8x2xf32>
    %87 = vector.shape_cast %86 : vector<8x8x2xf32> to vector<64x2xf32>
    %c4 = arith.constant 4 : index
    %c0_77 = arith.constant 0 : index
    %c0_78 = arith.constant 0 : index
    %88 = vector.load %arg5[%c4, %c0_77, %c0_78] : memref<9x2x2xf32, #tpu.memory_space<vmem>>, vector<1x2x2xf32>
    %89 = vector.shape_cast %88 : vector<1x2x2xf32> to vector<2x2xf32>
    %cst_79 = arith.constant dense<0.000000e+00> : vector<64x2xf32>
    %90 = tpu.matmul %87, %89, %cst_79 {dimension_numbers = #tpu.dot_dimension_numbers<[1], [0], [0], [1], [0, 0, 1, 1], [], []>} : vector<64x2xf32>, vector<2x2xf32>, vector<64x2xf32> -> vector<64x2xf32>
    %91 = arith.addf %84, %90 : vector<64x2xf32>
    %c2_80 = arith.constant 2 : index
    %c0_81 = arith.constant 0 : index
    %c1_82 = arith.constant 1 : index
    %c0_83 = arith.constant 0 : index
    %92 = vector.load %arg11[%c2_80, %c0_81, %c1_82, %c0_83] : memref<4x9x9x2xf32, #tpu.memory_space<vmem>>, vector<1x8x8x2xf32>
    %93 = vector.shape_cast %92 : vector<1x8x8x2xf32> to vector<8x8x2xf32>
    %94 = vector.shape_cast %93 : vector<8x8x2xf32> to vector<64x2xf32>
    %c5 = arith.constant 5 : index
    %c0_84 = arith.constant 0 : index
    %c0_85 = arith.constant 0 : index
    %95 = vector.load %arg5[%c5, %c0_84, %c0_85] : memref<9x2x2xf32, #tpu.memory_space<vmem>>, vector<1x2x2xf32>
    %96 = vector.shape_cast %95 : vector<1x2x2xf32> to vector<2x2xf32>
    %cst_86 = arith.constant dense<0.000000e+00> : vector<64x2xf32>
    %97 = tpu.matmul %94, %96, %cst_86 {dimension_numbers = #tpu.dot_dimension_numbers<[1], [0], [0], [1], [0, 0, 1, 1], [], []>} : vector<64x2xf32>, vector<2x2xf32>, vector<64x2xf32> -> vector<64x2xf32>
    %98 = arith.addf %91, %97 : vector<64x2xf32>
    %c0_87 = arith.constant 0 : index
    %c1_88 = arith.constant 1 : index
    %c0_89 = arith.constant 0 : index
    %c0_90 = arith.constant 0 : index
    %99 = vector.load %arg11[%c0_87, %c1_88, %c0_89, %c0_90] : memref<4x9x9x2xf32, #tpu.memory_space<vmem>>, vector<1x8x8x2xf32>
    %100 = vector.shape_cast %99 : vector<1x8x8x2xf32> to vector<8x8x2xf32>
    %101 = vector.shape_cast %100 : vector<8x8x2xf32> to vector<64x2xf32>
    %c6 = arith.constant 6 : index
    %c0_91 = arith.constant 0 : index
    %c0_92 = arith.constant 0 : index
    %102 = vector.load %arg5[%c6, %c0_91, %c0_92] : memref<9x2x2xf32, #tpu.memory_space<vmem>>, vector<1x2x2xf32>
    %103 = vector.shape_cast %102 : vector<1x2x2xf32> to vector<2x2xf32>
    %cst_93 = arith.constant dense<0.000000e+00> : vector<64x2xf32>
    %104 = tpu.matmul %101, %103, %cst_93 {dimension_numbers = #tpu.dot_dimension_numbers<[1], [0], [0], [1], [0, 0, 1, 1], [], []>} : vector<64x2xf32>, vector<2x2xf32>, vector<64x2xf32> -> vector<64x2xf32>
    %105 = arith.addf %98, %104 : vector<64x2xf32>
    %c1_94 = arith.constant 1 : index
    %c1_95 = arith.constant 1 : index
    %c0_96 = arith.constant 0 : index
    %c0_97 = arith.constant 0 : index
    %106 = vector.load %arg11[%c1_94, %c1_95, %c0_96, %c0_97] : memref<4x9x9x2xf32, #tpu.memory_space<vmem>>, vector<1x8x8x2xf32>
    %107 = vector.shape_cast %106 : vector<1x8x8x2xf32> to vector<8x8x2xf32>
    %108 = vector.shape_cast %107 : vector<8x8x2xf32> to vector<64x2xf32>
    %c7 = arith.constant 7 : index
    %c0_98 = arith.constant 0 : index
    %c0_99 = arith.constant 0 : index
    %109 = vector.load %arg5[%c7, %c0_98, %c0_99] : memref<9x2x2xf32, #tpu.memory_space<vmem>>, vector<1x2x2xf32>
    %110 = vector.shape_cast %109 : vector<1x2x2xf32> to vector<2x2xf32>
    %cst_100 = arith.constant dense<0.000000e+00> : vector<64x2xf32>
    %111 = tpu.matmul %108, %110, %cst_100 {dimension_numbers = #tpu.dot_dimension_numbers<[1], [0], [0], [1], [0, 0, 1, 1], [], []>} : vector<64x2xf32>, vector<2x2xf32>, vector<64x2xf32> -> vector<64x2xf32>
    %112 = arith.addf %105, %111 : vector<64x2xf32>
    %c0_101 = arith.constant 0 : index
    %c1_102 = arith.constant 1 : index
    %c1_103 = arith.constant 1 : index
    %c0_104 = arith.constant 0 : index
    %113 = vector.load %arg11[%c0_101, %c1_102, %c1_103, %c0_104] : memref<4x9x9x2xf32, #tpu.memory_space<vmem>>, vector<1x8x8x2xf32>
    %114 = vector.shape_cast %113 : vector<1x8x8x2xf32> to vector<8x8x2xf32>
    %115 = vector.shape_cast %114 : vector<8x8x2xf32> to vector<64x2xf32>
    %c8 = arith.constant 8 : index
    %c0_105 = arith.constant 0 : index
    %c0_106 = arith.constant 0 : index
    %116 = vector.load %arg5[%c8, %c0_105, %c0_106] : memref<9x2x2xf32, #tpu.memory_space<vmem>>, vector<1x2x2xf32>
    %117 = vector.shape_cast %116 : vector<1x2x2xf32> to vector<2x2xf32>
    %cst_107 = arith.constant dense<0.000000e+00> : vector<64x2xf32>
    %118 = tpu.matmul %115, %117, %cst_107 {dimension_numbers = #tpu.dot_dimension_numbers<[1], [0], [0], [1], [0, 0, 1, 1], [], []>} : vector<64x2xf32>, vector<2x2xf32>, vector<64x2xf32> -> vector<64x2xf32>
    %119 = arith.addf %112, %118 : vector<64x2xf32>
    %120 = vector.shape_cast %119 : vector<64x2xf32> to vector<1x64x2xf32>
    %c0_108 = arith.constant 0 : index
    %c0_109 = arith.constant 0 : index
    %c0_110 = arith.constant 0 : index
    %121 = vector.load %arg8[%c0_108, %c0_109, %c0_110] : memref<1x64x2xf32, #tpu.memory_space<vmem>>, vector<1x64x2xf32>
    tpu.vector_store %arg8[%c0_108, %c0_109, %c0_110], %120 {strides = array<i32>} : memref<1x64x2xf32, #tpu.memory_space<vmem>>, vector<1x64x2xf32>,
    %cst_111 = arith.constant dense<0.000000e+00> : vector<2xf32>
    %122 = vector.multi_reduction <add>, %119, %cst_111 [0] : vector<64x2xf32> to vector<2xf32>
    %123 = vector.shape_cast %122 : vector<2xf32> to vector<1x2xf32>
    %124 = vector.shape_cast %123 : vector<1x2xf32> to vector<1x1x2xf32>
    %c0_112 = arith.constant 0 : index
    %c0_113 = arith.constant 0 : index
    %c0_114 = arith.constant 0 : index
    %125 = vector.load %arg9[%c0_112, %c0_113, %c0_114] : memref<1x1x2xf32, #tpu.memory_space<vmem>>, vector<1x1x2xf32>
    tpu.vector_store %arg9[%c0_112, %c0_113, %c0_114], %124 {strides = array<i32>} : memref<1x1x2xf32, #tpu.memory_space<vmem>>, vector<1x1x2xf32>,
    %126 = arith.mulf %119, %119 : vector<64x2xf32>
    %cst_115 = arith.constant dense<0.000000e+00> : vector<2xf32>
    %127 = vector.multi_reduction <add>, %126, %cst_115 [0] : vector<64x2xf32> to vector<2xf32>
    %128 = vector.shape_cast %127 : vector<2xf32> to vector<1x2xf32>
    %129 = vector.shape_cast %128 : vector<1x2xf32> to vector<1x1x2xf32>
    %c0_116 = arith.constant 0 : index
    %c0_117 = arith.constant 0 : index
    %c0_118 = arith.constant 0 : index
    %130 = vector.load %arg10[%c0_116, %c0_117, %c0_118] : memref<1x1x2xf32, #tpu.memory_space<vmem>>, vector<1x1x2xf32>
    tpu.vector_store %arg10[%c0_116, %c0_117, %c0_118], %129 {strides = array<i32>} : memref<1x1x2xf32, #tpu.memory_space<vmem>>, vector<1x1x2xf32>,
    return
  }
  func.func @transform_0(%arg0: i32) -> (i32, i32, i32, i32) {
    %c0_i32 = arith.constant 0 : i32
    %c0_i32_0 = arith.constant 0 : i32
    %c0_i32_1 = arith.constant 0 : i32
    %c0_i32_2 = arith.constant 0 : i32
    return %arg0, %c0_i32, %c0_i32_0, %c0_i32_1 : i32, i32, i32, i32
  }
  func.func @transform_1(%arg0: i32) -> (i32, i32, i32, i32) {
    %c0_i32 = arith.constant 0 : i32
    %c0_i32_0 = arith.constant 0 : i32
    %c0_i32_1 = arith.constant 0 : i32
    %c0_i32_2 = arith.constant 0 : i32
    return %arg0, %c0_i32, %c0_i32_0, %c0_i32_1 : i32, i32, i32, i32
  }
  func.func @transform_2(%arg0: i32) -> (i32, i32, i32, i32) {
    %c0_i32 = arith.constant 0 : i32
    %c0_i32_0 = arith.constant 0 : i32
    %c0_i32_1 = arith.constant 0 : i32
    %c0_i32_2 = arith.constant 0 : i32
    return %arg0, %c0_i32, %c0_i32_0, %c0_i32_1 : i32, i32, i32, i32
  }
  func.func @transform_3(%arg0: i32) -> (i32, i32, i32, i32) {
    %c0_i32 = arith.constant 0 : i32
    %c0_i32_0 = arith.constant 0 : i32
    %c0_i32_1 = arith.constant 0 : i32
    %c0_i32_2 = arith.constant 0 : i32
    return %arg0, %c0_i32, %c0_i32_0, %c0_i32_1 : i32, i32, i32, i32
  }
  func.func @transform_4(%arg0: i32) -> (i32, i32, i32) {
    %c0_i32 = arith.constant 0 : i32
    %c0_i32_0 = arith.constant 0 : i32
    %c0_i32_1 = arith.constant 0 : i32
    %c0_i32_2 = arith.constant 0 : i32
    return %c0_i32, %c0_i32_0, %c0_i32_1 : i32, i32, i32
  }
  func.func @transform_5(%arg0: i32) -> (i32, i32) {
    %c0_i32 = arith.constant 0 : i32
    %c0_i32_0 = arith.constant 0 : i32
    %c0_i32_1 = arith.constant 0 : i32
    return %c0_i32, %c0_i32_0 : i32, i32
  }
  func.func @transform_6(%arg0: i32) -> (i32, i32) {
    %c0_i32 = arith.constant 0 : i32
    %c0_i32_0 = arith.constant 0 : i32
    %c0_i32_1 = arith.constant 0 : i32
    return %c0_i32, %c0_i32_0 : i32, i32
  }
  func.func @transform_7(%arg0: i32) -> (i32, i32, i32) {
    %c0_i32 = arith.constant 0 : i32
    %c0_i32_0 = arith.constant 0 : i32
    %c0_i32_1 = arith.constant 0 : i32
    return %arg0, %c0_i32, %c0_i32_0 : i32, i32, i32
  }
  func.func @transform_8(%arg0: i32) -> (i32, i32, i32) {
    %c0_i32 = arith.constant 0 : i32
    %c0_i32_0 = arith.constant 0 : i32
    %c0_i32_1 = arith.constant 0 : i32
    return %arg0, %c0_i32, %c0_i32_0 : i32, i32, i32
  }
  func.func @transform_9(%arg0: i32) -> (i32, i32, i32) {
    %c0_i32 = arith.constant 0 : i32
    %c0_i32_0 = arith.constant 0 : i32
    %c0_i32_1 = arith.constant 0 : i32
    return %arg0, %c0_i32, %c0_i32_0 : i32, i32, i32
  }
}

module attributes {stable_mosaic.version = 11 : i64} {
  func.func @_gemm_fused_kernel(%arg0: i32, %arg1: i32, %arg2: memref<128x4xf32, #tpu.memory_space<vmem>>, %arg3: memref<4x8xf32, #tpu.memory_space<vmem>>, %arg4: memref<128x8xf32, #tpu.memory_space<vmem>>, %arg5: memref<1x1x8xf32, #tpu.memory_space<vmem>>, %arg6: memref<1x1x8xf32, #tpu.memory_space<vmem>>, %arg7: memref<128x8xf32, #tpu.memory_space<vmem>>) attributes {dimension_semantics = [#tpu.dimension_semantics<parallel>, #tpu.dimension_semantics<arbitrary>], iteration_bounds = array<i64: 1, 1>, scalar_prefetch = 0 : i64, scratch_operands = 1 : i64, tpu.core_type = #tpu.core_type<tc>, window_params = [{transform_indices = @transform_0, window_bounds = array<i64: 128, 4>}, {transform_indices = @transform_1, window_bounds = array<i64: 4, 8>}, {transform_indices = @transform_2, window_bounds = array<i64: 128, 8>}, {transform_indices = @transform_3, window_bounds = array<i64: 1, 1, 8>}, {transform_indices = @transform_4, window_bounds = array<i64: 1, 1, 8>}]} {
    %c0_i32 = arith.constant 0 : i32
    %0 = arith.cmpi eq, %arg1, %c0_i32 : i32
    %1 = arith.extui %0 : i1 to i32
    %c0_i32_0 = arith.constant 0 : i32
    %2 = arith.cmpi ne, %1, %c0_i32_0 : i32
    scf.if %2 {
      %cst_10 = arith.constant 0.000000e+00 : f32
      %12 = vector.broadcast %cst_10 : f32 to vector<128x8xf32>
      %c0_11 = arith.constant 0 : index
      %c0_12 = arith.constant 0 : index
      %13 = vector.load %arg7[%c0_11, %c0_12] : memref<128x8xf32, #tpu.memory_space<vmem>>, vector<128x8xf32>
      tpu.vector_store %arg7[%c0_11, %c0_12], %12 {strides = array<i32>} : memref<128x8xf32, #tpu.memory_space<vmem>>, vector<128x8xf32>,
    } else {
    }
    %c0 = arith.constant 0 : index
    %c0_1 = arith.constant 0 : index
    %3 = vector.load %arg2[%c0, %c0_1] : memref<128x4xf32, #tpu.memory_space<vmem>>, vector<128x4xf32>
    %c0_2 = arith.constant 0 : index
    %c0_3 = arith.constant 0 : index
    %4 = vector.load %arg7[%c0_2, %c0_3] : memref<128x8xf32, #tpu.memory_space<vmem>>, vector<128x8xf32>
    %c0_4 = arith.constant 0 : index
    %c0_5 = arith.constant 0 : index
    %5 = vector.load %arg3[%c0_4, %c0_5] : memref<4x8xf32, #tpu.memory_space<vmem>>, vector<4x8xf32>
    %cst = arith.constant dense<0.000000e+00> : vector<128x8xf32>
    %6 = tpu.matmul %3, %5, %cst {dimension_numbers = #tpu.dot_dimension_numbers<[1], [0], [0], [1], [0, 0, 1, 1], [], []>} : vector<128x4xf32>, vector<4x8xf32>, vector<128x8xf32> -> vector<128x8xf32>
    %7 = arith.addf %4, %6 : vector<128x8xf32>
    %c0_6 = arith.constant 0 : index
    %c0_7 = arith.constant 0 : index
    %8 = vector.load %arg7[%c0_6, %c0_7] : memref<128x8xf32, #tpu.memory_space<vmem>>, vector<128x8xf32>
    tpu.vector_store %arg7[%c0_6, %c0_7], %7 {strides = array<i32>} : memref<128x8xf32, #tpu.memory_space<vmem>>, vector<128x8xf32>,
    %c0_i32_8 = arith.constant 0 : i32
    %9 = arith.cmpi eq, %arg1, %c0_i32_8 : i32
    %10 = arith.extui %9 : i1 to i32
    %c0_i32_9 = arith.constant 0 : i32
    %11 = arith.cmpi ne, %10, %c0_i32_9 : i32
    scf.if %11 {
      %c0_10 = arith.constant 0 : index
      %c0_11 = arith.constant 0 : index
      %12 = vector.load %arg7[%c0_10, %c0_11] : memref<128x8xf32, #tpu.memory_space<vmem>>, vector<128x8xf32>
      %c0_12 = arith.constant 0 : index
      %c0_13 = arith.constant 0 : index
      %13 = vector.load %arg4[%c0_12, %c0_13] : memref<128x8xf32, #tpu.memory_space<vmem>>, vector<128x8xf32>
      tpu.vector_store %arg4[%c0_12, %c0_13], %12 {strides = array<i32>} : memref<128x8xf32, #tpu.memory_space<vmem>>, vector<128x8xf32>,
      %cst_14 = arith.constant dense<0.000000e+00> : vector<8xf32>
      %14 = vector.multi_reduction <add>, %12, %cst_14 [0] : vector<128x8xf32> to vector<8xf32>
      %15 = vector.shape_cast %14 : vector<8xf32> to vector<1x8xf32>
      %16 = vector.shape_cast %15 : vector<1x8xf32> to vector<1x1x8xf32>
      %c0_15 = arith.constant 0 : index
      %c0_16 = arith.constant 0 : index
      %c0_17 = arith.constant 0 : index
      %17 = vector.load %arg5[%c0_15, %c0_16, %c0_17] : memref<1x1x8xf32, #tpu.memory_space<vmem>>, vector<1x1x8xf32>
      tpu.vector_store %arg5[%c0_15, %c0_16, %c0_17], %16 {strides = array<i32>} : memref<1x1x8xf32, #tpu.memory_space<vmem>>, vector<1x1x8xf32>,
      %18 = arith.mulf %12, %12 : vector<128x8xf32>
      %cst_18 = arith.constant dense<0.000000e+00> : vector<8xf32>
      %19 = vector.multi_reduction <add>, %18, %cst_18 [0] : vector<128x8xf32> to vector<8xf32>
      %20 = vector.shape_cast %19 : vector<8xf32> to vector<1x8xf32>
      %21 = vector.shape_cast %20 : vector<1x8xf32> to vector<1x1x8xf32>
      %c0_19 = arith.constant 0 : index
      %c0_20 = arith.constant 0 : index
      %c0_21 = arith.constant 0 : index
      %22 = vector.load %arg6[%c0_19, %c0_20, %c0_21] : memref<1x1x8xf32, #tpu.memory_space<vmem>>, vector<1x1x8xf32>
      tpu.vector_store %arg6[%c0_19, %c0_20, %c0_21], %21 {strides = array<i32>} : memref<1x1x8xf32, #tpu.memory_space<vmem>>, vector<1x1x8xf32>,
    } else {
    }
    return
  }
  func.func @transform_0(%arg0: i32, %arg1: i32) -> (i32, i32) {
    %c0_i32 = arith.constant 0 : i32
    return %arg0, %arg1 : i32, i32
  }
  func.func @transform_1(%arg0: i32, %arg1: i32) -> (i32, i32) {
    %c0_i32 = arith.constant 0 : i32
    %c0_i32_0 = arith.constant 0 : i32
    return %arg1, %c0_i32 : i32, i32
  }
  func.func @transform_2(%arg0: i32, %arg1: i32) -> (i32, i32) {
    %c0_i32 = arith.constant 0 : i32
    %c0_i32_0 = arith.constant 0 : i32
    return %arg0, %c0_i32 : i32, i32
  }
  func.func @transform_3(%arg0: i32, %arg1: i32) -> (i32, i32, i32) {
    %c0_i32 = arith.constant 0 : i32
    %c0_i32_0 = arith.constant 0 : i32
    %c0_i32_1 = arith.constant 0 : i32
    return %arg0, %c0_i32, %c0_i32_0 : i32, i32, i32
  }
  func.func @transform_4(%arg0: i32, %arg1: i32) -> (i32, i32, i32) {
    %c0_i32 = arith.constant 0 : i32
    %c0_i32_0 = arith.constant 0 : i32
    %c0_i32_1 = arith.constant 0 : i32
    return %arg0, %c0_i32, %c0_i32_0 : i32, i32, i32
  }
}

module attributes {stable_mosaic.version = 11 : i64} {
  func.func @_bn_add_relu_kernel(%arg0: i32, %arg1: memref<128x8xf32, #tpu.memory_space<vmem>>, %arg2: memref<128x8xf32, #tpu.memory_space<vmem>>, %arg3: memref<1x8xf32, #tpu.memory_space<vmem>>, %arg4: memref<1x8xf32, #tpu.memory_space<vmem>>, %arg5: memref<1x8xf32, #tpu.memory_space<vmem>>, %arg6: memref<1x8xf32, #tpu.memory_space<vmem>>, %arg7: memref<128x8xf32, #tpu.memory_space<vmem>>) attributes {dimension_semantics = [#tpu.dimension_semantics<parallel>], iteration_bounds = array<i64: 1>, scalar_prefetch = 0 : i64, scratch_operands = 0 : i64, tpu.core_type = #tpu.core_type<tc>, window_params = [{transform_indices = @transform_0, window_bounds = array<i64: 128, 8>}, {transform_indices = @transform_1, window_bounds = array<i64: 128, 8>}, {pipeline_mode = #tpu.pipeline_mode<synchronous>, transform_indices = @transform_2, window_bounds = array<i64: 1, 8>}, {pipeline_mode = #tpu.pipeline_mode<synchronous>, transform_indices = @transform_3, window_bounds = array<i64: 1, 8>}, {pipeline_mode = #tpu.pipeline_mode<synchronous>, transform_indices = @transform_4, window_bounds = array<i64: 1, 8>}, {pipeline_mode = #tpu.pipeline_mode<synchronous>, transform_indices = @transform_5, window_bounds = array<i64: 1, 8>}, {transform_indices = @transform_6, window_bounds = array<i64: 128, 8>}]} {
    %c0 = arith.constant 0 : index
    %c0_0 = arith.constant 0 : index
    %0 = vector.load %arg1[%c0, %c0_0] : memref<128x8xf32, #tpu.memory_space<vmem>>, vector<128x8xf32>
    %c0_1 = arith.constant 0 : index
    %c0_2 = arith.constant 0 : index
    %1 = vector.load %arg3[%c0_1, %c0_2] : memref<1x8xf32, #tpu.memory_space<vmem>>, vector<1x8xf32>
    %2 = vector.broadcast %1 : vector<1x8xf32> to vector<128x8xf32>
    %3 = arith.mulf %0, %2 : vector<128x8xf32>
    %c0_3 = arith.constant 0 : index
    %c0_4 = arith.constant 0 : index
    %4 = vector.load %arg4[%c0_3, %c0_4] : memref<1x8xf32, #tpu.memory_space<vmem>>, vector<1x8xf32>
    %5 = vector.broadcast %4 : vector<1x8xf32> to vector<128x8xf32>
    %6 = arith.addf %3, %5 : vector<128x8xf32>
    %c0_5 = arith.constant 0 : index
    %c0_6 = arith.constant 0 : index
    %7 = vector.load %arg2[%c0_5, %c0_6] : memref<128x8xf32, #tpu.memory_space<vmem>>, vector<128x8xf32>
    %c0_7 = arith.constant 0 : index
    %c0_8 = arith.constant 0 : index
    %8 = vector.load %arg5[%c0_7, %c0_8] : memref<1x8xf32, #tpu.memory_space<vmem>>, vector<1x8xf32>
    %9 = vector.broadcast %8 : vector<1x8xf32> to vector<128x8xf32>
    %10 = arith.mulf %7, %9 : vector<128x8xf32>
    %11 = arith.addf %6, %10 : vector<128x8xf32>
    %c0_9 = arith.constant 0 : index
    %c0_10 = arith.constant 0 : index
    %12 = vector.load %arg6[%c0_9, %c0_10] : memref<1x8xf32, #tpu.memory_space<vmem>>, vector<1x8xf32>
    %13 = vector.broadcast %12 : vector<1x8xf32> to vector<128x8xf32>
    %14 = arith.addf %11, %13 : vector<128x8xf32>
    %cst = arith.constant 0.000000e+00 : f32
    %15 = vector.broadcast %cst : f32 to vector<128x8xf32>
    %16 = arith.maximumf %14, %15 : vector<128x8xf32>
    %c0_11 = arith.constant 0 : index
    %c0_12 = arith.constant 0 : index
    %17 = vector.load %arg7[%c0_11, %c0_12] : memref<128x8xf32, #tpu.memory_space<vmem>>, vector<128x8xf32>
    tpu.vector_store %arg7[%c0_11, %c0_12], %16 {strides = array<i32>} : memref<128x8xf32, #tpu.memory_space<vmem>>, vector<128x8xf32>,
    return
  }
  func.func @transform_0(%arg0: i32) -> (i32, i32) {
    %c0_i32 = arith.constant 0 : i32
    %c0_i32_0 = arith.constant 0 : i32
    return %arg0, %c0_i32 : i32, i32
  }
  func.func @transform_1(%arg0: i32) -> (i32, i32) {
    %c0_i32 = arith.constant 0 : i32
    %c0_i32_0 = arith.constant 0 : i32
    return %arg0, %c0_i32 : i32, i32
  }
  func.func @transform_2(%arg0: i32) -> (i32, i32) {
    %c0_i32 = arith.constant 0 : i32
    %c0_i32_0 = arith.constant 0 : i32
    %c0_i32_1 = arith.constant 0 : i32
    return %c0_i32, %c0_i32_0 : i32, i32
  }
  func.func @transform_3(%arg0: i32) -> (i32, i32) {
    %c0_i32 = arith.constant 0 : i32
    %c0_i32_0 = arith.constant 0 : i32
    %c0_i32_1 = arith.constant 0 : i32
    return %c0_i32, %c0_i32_0 : i32, i32
  }
  func.func @transform_4(%arg0: i32) -> (i32, i32) {
    %c0_i32 = arith.constant 0 : i32
    %c0_i32_0 = arith.constant 0 : i32
    %c0_i32_1 = arith.constant 0 : i32
    return %c0_i32, %c0_i32_0 : i32, i32
  }
  func.func @transform_5(%arg0: i32) -> (i32, i32) {
    %c0_i32 = arith.constant 0 : i32
    %c0_i32_0 = arith.constant 0 : i32
    %c0_i32_1 = arith.constant 0 : i32
    return %c0_i32, %c0_i32_0 : i32, i32
  }
  func.func @transform_6(%arg0: i32) -> (i32, i32) {
    %c0_i32 = arith.constant 0 : i32
    %c0_i32_0 = arith.constant 0 : i32
    return %arg0, %c0_i32 : i32, i32
  }
}

</mosaic_0001>

<llo_original>
// kernel: res_bottleneck_block.5
$region0: #{res_bottleneck_block.5}
  #allocation0 [shape = 'u32[]', space=smem, size = 0x4, offset = 0x4, fixed_abs, tag = 'smem constant byte address 0x4 - core index']
  #allocation1 [shape = 'u32[144,128]{1,0:T(1,128)}', space=vmem, size = 0x12000, scoped, tag = 'internal scratch']
  #allocation2 [shape = 'f32[256,2]{1,0:T(8,128)}', space=vmem, size = 0x20000, scoped, tag = 'scratch operand']
  %s0 = inlined_call_operand.vmem [shape: f32[512,4], index: 0, kind: input, shape index: {}]
  %s1 = inlined_call_operand.vmem [shape: f32[4,2], index: 1, kind: input, shape index: {}]
  %s2 = inlined_call_operand.vmem [shape: f32[512,2], index: 2, kind: output, shape index: {0}]
  %s3 = inlined_call_operand.vmem [shape: f32[2,1,2], index: 3, kind: output, shape index: {1}]
  %s4 = inlined_call_operand.vmem [shape: f32[2,1,2], index: 4, kind: output, shape index: {2}]
  %5 = xla_tuple %s2, %s3, %s4
  %s6 = sld [smem:[#allocation0]]
  $region65: #{res_bottleneck_block.5} parent=0
    _
  %s8 = ssub.s32 1, %s6
  %s9 = scalar_select 0, %s8, %s6
  loop: start=0, step=1, limit=4
  $region2: #{res_bottleneck_block.5} parent=0 // loop_pre_header
    _
  $region3: #{res_bottleneck_block.5} parent=0 // loop_header
    %s11 = sphi 0, %s15
    %p12 = scmp.ge.s32.totalorder %s11, 4
    %s18 = sphi 0, %s30
    %s19 = sphi 0, %s26
    %s20 = sphi 0, %s18
    %s21 = sphi 0, %s19
    %s22 = sphi 0, %s20
    %s23 = sphi 0, %s21
    %s35 = sphi 0, %s37
    %s38 = sphi 0, %s35
    %s39 = sphi 0, %s38
    %s55 = sphi 0, %s39
    %s61 = sphi 0, %s63
    %s64 = sphi 0, %s61
    %s65 = sphi 0, %s64
    %s81 = sphi 0, %s65
    %s87 = sphi 0, %s89
    %s90 = sphi 0, %s87
    %s91 = sphi 0, %s90
    %s107 = sphi 0, %s91
    %s113 = sphi 0, %s115
    %s116 = sphi 0, %s113
    %s117 = sphi 0, %s116
    %s133 = sphi 0, %s117
    %s139 = sphi 0, %s141
    %s142 = sphi 0, %s139
    %s143 = sphi 0, %s142
    %s159 = sphi 0, %s143
  $region4: #{res_bottleneck_block.5} parent=0 // loop_header_branch
    %14 = sbr.rel (%p12) target = $region8
  $region5: #{res_bottleneck_block.5} parent=0 // loop_body
    %s16 = ssub.s32 %s11, 1
    %s17 = ssub.s32 %s11, 2
    %s24 = sadd.s32 1, %s19
    %p25 = scmp.ge.s32.totalorder %s24, 1
    %s26 = scalar_select %p25, 0, %s24
    %s27 = sadd.s32 1, %s18
    %s28 = scalar_select %p25, %s27, %s18
    %p29 = scmp.ge.s32.totalorder %s28, 2
    %s30 = scalar_select %p29, 0, %s28
    %s31 = ssub.s32 %s18, %s30
    %s32 = ssub.s32 %s19, %s26
    %s33 = sor.u32 %s31, %s32
    %p34 = scmp.eq.s32.totalorder %s33, 0
    %s36 = sadd.s32 %s35, 1
    %s37 = scalar_select %p34, %s35, %s36
    %p40 = pneg %p34
    %p41 = scmp.eq.s32.totalorder %s11, 1
    %p42 = por %p40, %p41
    %p43 = scmp.ne.s32.totalorder %s35, %s38
    %p44 = scmp.eq.s32.totalorder %s11, 0
    %p45 = por %p43, %p44
    %p46 = scmp.ne.s32.totalorder %s35, %s38
    %p47 = scmp.eq.s32.totalorder %s16, 1
    %p48 = por %p46, %p47
    %p49 = scmp.ne.s32.totalorder %s38, %s39
    %p50 = scmp.eq.s32.totalorder %s16, 0
    %p51 = por %p49, %p50
    %p52 = scmp.ne.s32.totalorder %s38, %s39
    %p53 = scmp.eq.s32.totalorder %s17, 1
    %p54 = por %p52, %p53
    %p56 = scmp.ne.s32.totalorder %s39, %s55
    %p57 = scmp.eq.s32.totalorder %s17, 0
    %p58 = por %p56, %p57
    %s59 = ssub.s32 %s19, %s26
    %p60 = scmp.eq.s32.totalorder %s59, 0
    %s62 = sadd.s32 %s61, 1
    %s63 = scalar_select %p60, %s61, %s62
    %p66 = pneg %p60
    %p67 = scmp.eq.s32.totalorder %s11, 1
    %p68 = por %p66, %p67
    %p69 = scmp.ne.s32.totalorder %s61, %s64
    %p70 = scmp.eq.s32.totalorder %s11, 0
    %p71 = por %p69, %p70
    %p72 = scmp.ne.s32.totalorder %s61, %s64
    %p73 = scmp.eq.s32.totalorder %s16, 1
    %p74 = por %p72, %p73
    %p75 = scmp.ne.s32.totalorder %s64, %s65
    %p76 = scmp.eq.s32.totalorder %s16, 0
    %p77 = por %p75, %p76
    %p78 = scmp.ne.s32.totalorder %s64, %s65
    %p79 = scmp.eq.s32.totalorder %s17, 1
    %p80 = por %p78, %p79
    %p82 = scmp.ne.s32.totalorder %s65, %s81
    %p83 = scmp.eq.s32.totalorder %s17, 0
    %p84 = por %p82, %p83
    %s85 = ssub.s32 %s18, %s30
    %p86 = scmp.eq.s32.totalorder %s85, 0
    %s88 = sadd.s32 %s87, 1
    %s89 = scalar_select %p86, %s87, %s88
    %p92 = pneg %p86
    %p93 = scmp.eq.s32.totalorder %s11, 1
    %p94 = por %p92, %p93
    %p95 = scmp.ne.s32.totalorder %s87, %s90
    %p96 = scmp.eq.s32.totalorder %s11, 0
    %p97 = por %p95, %p96
    %p98 = scmp.ne.s32.totalorder %s87, %s90
    %p99 = scmp.eq.s32.totalorder %s16, 1
    %p100 = por %p98, %p99
    %p101 = scmp.ne.s32.totalorder %s90, %s91
    %p102 = scmp.eq.s32.totalorder %s16, 0
    %p103 = por %p101, %p102
    %p104 = scmp.ne.s32.totalorder %s90, %s91
    %p105 = scmp.eq.s32.totalorder %s17, 1
    %p106 = por %p104, %p105
    %p108 = scmp.ne.s32.totalorder %s91, %s107
    %p109 = scmp.eq.s32.totalorder %s17, 0
    %p110 = por %p108, %p109
    %s111 = ssub.s32 %s18, %s30
    %p112 = scmp.eq.s32.totalorder %s111, 0
    %s114 = sadd.s32 %s113, 1
    %s115 = scalar_select %p112, %s113, %s114
    %p118 = pneg %p112
    %p119 = scmp.eq.s32.totalorder %s11, 1
    %p120 = por %p118, %p119
    %p121 = scmp.ne.s32.totalorder %s113, %s116
    %p122 = scmp.eq.s32.totalorder %s11, 0
    %p123 = por %p121, %p122
    %p124 = scmp.ne.s32.totalorder %s113, %s116
    %p125 = scmp.eq.s32.totalorder %s16, 1
    %p126 = por %p124, %p125
    %p127 = scmp.ne.s32.totalorder %s116, %s117
    %p128 = scmp.eq.s32.totalorder %s16, 0
    %p129 = por %p127, %p128
    %p130 = scmp.ne.s32.totalorder %s116, %s117
    %p131 = scmp.eq.s32.totalorder %s17, 1
    %p132 = por %p130, %p131
    %p134 = scmp.ne.s32.totalorder %s117, %s133
    %p135 = scmp.eq.s32.totalorder %s17, 0
    %p136 = por %p134, %p135
    %s137 = ssub.s32 %s18, %s30
    %p138 = scmp.eq.s32.totalorder %s137, 0
    %s140 = sadd.s32 %s139, 1
    %s141 = scalar_select %p138, %s139, %s140
    %p144 = pneg %p138
    %p145 = scmp.eq.s32.totalorder %s11, 1
    %p146 = por %p144, %p145
    %p147 = scmp.ne.s32.totalorder %s139, %s142
    %p148 = scmp.eq.s32.totalorder %s11, 0
    %p149 = por %p147, %p148
    %p150 = scmp.ne.s32.totalorder %s139, %s142
    %p151 = scmp.eq.s32.totalorder %s16, 1
    %p152 = por %p150, %p151
    %p153 = scmp.ne.s32.totalorder %s142, %s143
    %p154 = scmp.eq.s32.totalorder %s16, 0
    %p155 = por %p153, %p154
    %p156 = scmp.ne.s32.totalorder %s142, %s143
    %p157 = scmp.eq.s32.totalorder %s17, 1
    %p158 = por %p156, %p157
    %p160 = scmp.ne.s32.totalorder %s143, %s159
    %p161 = scmp.eq.s32.totalorder %s17, 0
    %p162 = por %p160, %p161
    %p163 = scmp.le.s32.totalorder 1, %s11
    %p164 = scmp.lt.s32.totalorder %s11, 3
    %p165 = pnand %p163, %p164
    %p166 = pneg %p165
    // Predicated region
    $region9: #{res_bottleneck_block.5} parent=5 // pred_check
      _
    $region10: #{res_bottleneck_block.5} parent=5 // pred_check_branch
      %168 = sbr.rel (%p165) target = $region12
    $region11: #{res_bottleneck_block.5} parent=5 // pred_region
      %s169 = ssub.s32 %s11, 1
      // Predicated region
      $region13: #{res_bottleneck_block.5} parent=11 // pred_check
        %p170 = pneg %p77
      $region14: #{res_bottleneck_block.5} parent=11 // pred_check_branch
        %172 = sbr.rel (%p170) target = $region16
      $region15: #{res_bottleneck_block.5} parent=11 // pred_region
        %p173 = scmp.lt.s32.totalorder %s21, 0
        %s174 = scalar_select %p173, %s21, 0
        %s175 = smul.addr %s174, 4
        %s176 = scalar_lea.vmem %s1, %s175
      $region16: #{res_bottleneck_block.5} parent=11 // pred_fallthru
        _
    $region12: #{res_bottleneck_block.5} parent=5 // pred_fallthru
      _
    %p177 = scmp.lt.s32.totalorder %s11, 2
    // Predicated region
    $region17: #{res_bottleneck_block.5} parent=5 // pred_check
      %p178 = pneg %p177
    $region18: #{res_bottleneck_block.5} parent=5 // pred_check_branch
      %180 = sbr.rel (%p178) target = $region20
    $region19: #{res_bottleneck_block.5} parent=5 // pred_region
      // Predicated region
      $region21: #{res_bottleneck_block.5} parent=19 // pred_check
        %p181 = pneg %p45
      $region22: #{res_bottleneck_block.5} parent=19 // pred_check_branch
        %183 = sbr.rel (%p181) target = $region24
      $region23: #{res_bottleneck_block.5} parent=19 // pred_region
        %s184 = smul.u32 32, %s18
        %p185 = scmp.lt.s32.totalorder %s184, 63
        %s186 = scalar_select %p185, %s184, 63
        %p187 = scmp.lt.s32.totalorder %s19, 0
        %s188 = scalar_select %p187, %s19, 0
        %s189 = sadd.s32 %s188, %s186
        %s190 = smul.addr %s189, 8
        %s191 = scalar_lea.vmem %s0, %s190
        %s192 = smul.u32 32, %s18
      $region24: #{res_bottleneck_block.5} parent=19 // pred_fallthru
        _
    $region20: #{res_bottleneck_block.5} parent=5 // pred_fallthru
      _
    %p193 = scmp.le.s32.totalorder 1, %s11
    %p194 = scmp.lt.s32.totalorder %s11, 3
    %p195 = pnand %p193, %p194
    %p196 = pneg %p195
    // Predicated region
    $region25: #{res_bottleneck_block.5} parent=5 // pred_check
      _
    $region26: #{res_bottleneck_block.5} parent=5 // pred_check_branch
      %198 = sbr.rel (%p195) target = $region28
    $region27: #{res_bottleneck_block.5} parent=5 // pred_region
      %s199 = ssub.s32 %s11, 1
      %s200 = smul.u32 32, %s20
      %p201 = scmp.lt.s32.totalorder %s200, 63
      %s202 = scalar_select %p201, %s200, 63
      %p203 = scmp.lt.s32.totalorder %s21, 0
      %s204 = scalar_select %p203, %s21, 0
      %s205 = sadd.s32 %s204, %s202
      %s206 = smul.addr %s205, 8
      %s207 = scalar_lea.vmem %s0, %s206
      %p208 = pneg %p51
      %p209 = pneg %p48
      %p210 = scmp.lt.s32.totalorder %s21, 0
      %s211 = scalar_select %p210, %s21, 0
      %s212 = smul.addr %s211, 4
      %s213 = scalar_lea.vmem %s1, %s212
      %p214 = pneg %p77
      %p215 = pneg %p74
      %p216 = pneg %p103
      %p217 = pneg %p100
      %s218 = smul.u32 32, %s20
      %p219 = scmp.lt.s32.totalorder %s218, 63
      %s220 = scalar_select %p219, %s218, 63
      %s221 = smul.addr %s220, 8
      %s222 = scalar_lea.vmem %s2, %s221
      %p223 = pneg %p129
      %p224 = pneg %p126
      %p225 = scmp.lt.s32.totalorder %s20, 1
      %s226 = scalar_select %p225, %s20, 1
      %s227 = scalar_lea.vmem %s3, %s226
      %p228 = pneg %p155
      %p229 = pneg %p152
      %p230 = scmp.lt.s32.totalorder %s20, 1
      %s231 = scalar_select %p230, %s20, 1
      %s232 = scalar_lea.vmem %s4, %s231
      %s233 = smul.u32 32, %s20
      %p234 = scmp.lt.s32.totalorder %s233, 63
      %s235 = scalar_select %p234, %s233, 63
      %p236 = scmp.lt.s32.totalorder %s21, 0
      %s237 = scalar_select %p236, %s21, 0
      %s238 = sadd.s32 %s237, %s235
      %s239 = smul.addr %s238, 8
      %s240 = scalar_lea.vmem %s0, %s239
      %s241 = smul.u32 32, %s20
      %p242 = scmp.lt.s32.totalorder %s21, 0
      %s243 = scalar_select %p242, %s21, 0
      %s244 = smul.addr %s243, 4
      %s245 = scalar_lea.vmem %s1, %s244
      %s246 = smul.u32 32, %s20
      %p247 = scmp.lt.s32.totalorder %s246, 63
      %s248 = scalar_select %p247, %s246, 63
      %s249 = smul.addr %s248, 8
      %s250 = scalar_lea.vmem %s2, %s249
      %s251 = smul.u32 32, %s20
      %p252 = scmp.lt.s32.totalorder %s20, 1
      %s253 = scalar_select %p252, %s20, 1
      %s254 = scalar_lea.vmem %s3, %s253
      %p255 = scmp.lt.s32.totalorder %s20, 1
      %s256 = scalar_select %p255, %s20, 1
      %s257 = scalar_lea.vmem %s4, %s256
      %p258 = scmp.eq.s32.totalorder %s21, 0
      // Predicated region
      $region29: #{res_bottleneck_block.5} parent=27 // pred_check
        %p259 = pneg %p258
      $region30: #{res_bottleneck_block.5} parent=27 // pred_check_branch
        %261 = sbr.rel (%p259) target = $region32
      $region31: #{res_bottleneck_block.5} parent=27 // pred_region
        %vm262 = vcmask 15360
        %263 = vst.msk [vmem:[#allocation2] sm:$0xff] %vm262, 0.0
        %264 = vst.msk [vmem:[#allocation2 + $0x8] sm:$0xff] %vm262, 0.0
        %265 = vst.msk [vmem:[#allocation2 + $0x10] sm:$0xff] %vm262, 0.0
        %266 = vst.msk [vmem:[#allocation2 + $0x18] sm:$0xff] %vm262, 0.0
        %267 = vst.msk [vmem:[#allocation2 + $0x20] sm:$0xff] %vm262, 0.0
        %268 = vst.msk [vmem:[#allocation2 + $0x28] sm:$0xff] %vm262, 0.0
        %269 = vst.msk [vmem:[#allocation2 + $0x30] sm:$0xff] %vm262, 0.0
        %270 = vst.msk [vmem:[#allocation2 + $0x38] sm:$0xff] %vm262, 0.0
        %271 = vst.msk [vmem:[#allocation2 + $0x40] sm:$0xff] %vm262, 0.0
        %272 = vst.msk [vmem:[#allocation2 + $0x48] sm:$0xff] %vm262, 0.0
        %273 = vst.msk [vmem:[#allocation2 + $0x50] sm:$0xff] %vm262, 0.0
        %274 = vst.msk [vmem:[#allocation2 + $0x58] sm:$0xff] %vm262, 0.0
        %275 = vst.msk [vmem:[#allocation2 + $0x60] sm:$0xff] %vm262, 0.0
        %276 = vst.msk [vmem:[#allocation2 + $0x68] sm:$0xff] %vm262, 0.0
        %277 = vst.msk [vmem:[#allocation2 + $0x70] sm:$0xff] %vm262, 0.0
        %278 = vst.msk [vmem:[#allocation2 + $0x78] sm:$0xff] %vm262, 0.0
        %279 = vst.msk [vmem:[#allocation2 + $0x80] sm:$0xff] %vm262, 0.0
        %280 = vst.msk [vmem:[#allocation2 + $0x88] sm:$0xff] %vm262, 0.0
        %281 = vst.msk [vmem:[#allocation2 + $0x90] sm:$0xff] %vm262, 0.0
        %282 = vst.msk [vmem:[#allocation2 + $0x98] sm:$0xff] %vm262, 0.0
        %283 = vst.msk [vmem:[#allocation2 + $0xa0] sm:$0xff] %vm262, 0.0
        %284 = vst.msk [vmem:[#allocation2 + $0xa8] sm:$0xff] %vm262, 0.0
        %285 = vst.msk [vmem:[#allocation2 + $0xb0] sm:$0xff] %vm262, 0.0
        %286 = vst.msk [vmem:[#allocation2 + $0xb8] sm:$0xff] %vm262, 0.0
        %287 = vst.msk [vmem:[#allocation2 + $0xc0] sm:$0xff] %vm262, 0.0
        %288 = vst.msk [vmem:[#allocation2 + $0xc8] sm:$0xff] %vm262, 0.0
        %289 = vst.msk [vmem:[#allocation2 + $0xd0] sm:$0xff] %vm262, 0.0
        %290 = vst.msk [vmem:[#allocation2 + $0xd8] sm:$0xff] %vm262, 0.0
        %291 = vst.msk [vmem:[#allocation2 + $0xe0] sm:$0xff] %vm262, 0.0
        %292 = vst.msk [vmem:[#allocation2 + $0xe8] sm:$0xff] %vm262, 0.0
        %293 = vst.msk [vmem:[#allocation2 + $0xf0] sm:$0xff] %vm262, 0.0
        %294 = vst.msk [vmem:[#allocation2 + $0xf8] sm:$0xff] %vm262, 0.0
      $region32: #{res_bottleneck_block.5} parent=27 // pred_fallthru
        _
      %v295 = vld [vmem:[%s240] sm:$0xff]
      %v296 = vld [vmem:[%s240 + $0x8] sm:$0xff]
      %v297 = vld [vmem:[%s240 + $0x10] sm:$0xff]
      %v298 = vld [vmem:[%s240 + $0x18] sm:$0xff]
      %v299 = vld [vmem:[%s240 + $0x20] sm:$0xff]
      %v300 = vld [vmem:[%s240 + $0x28] sm:$0xff]
      %v301 = vld [vmem:[%s240 + $0x30] sm:$0xff]
      %v302 = vld [vmem:[%s240 + $0x38] sm:$0xff]
      %v303 = vld [vmem:[%s240 + $0x40] sm:$0xff]
      %v304 = vld [vmem:[%s240 + $0x48] sm:$0xff]
      %v305 = vld [vmem:[%s240 + $0x50] sm:$0xff]
      %v306 = vld [vmem:[%s240 + $0x58] sm:$0xff]
      %v307 = vld [vmem:[%s240 + $0x60] sm:$0xff]
      %v308 = vld [vmem:[%s240 + $0x68] sm:$0xff]
      %v309 = vld [vmem:[%s240 + $0x70] sm:$0xff]
      %v310 = vld [vmem:[%s240 + $0x78] sm:$0xff]
      %v311 = vld [vmem:[%s240 + $0x80] sm:$0xff]
      %v312 = vld [vmem:[%s240 + $0x88] sm:$0xff]
      %v313 = vld [vmem:[%s240 + $0x90] sm:$0xff]
      %v314 = vld [vmem:[%s240 + $0x98] sm:$0xff]
      %v315 = vld [vmem:[%s240 + $0xa0] sm:$0xff]
      %v316 = vld [vmem:[%s240 + $0xa8] sm:$0xff]
      %v317 = vld [vmem:[%s240 + $0xb0] sm:$0xff]
      %v318 = vld [vmem:[%s240 + $0xb8] sm:$0xff]
      %v319 = vld [vmem:[%s240 + $0xc0] sm:$0xff]
      %v320 = vld [vmem:[%s240 + $0xc8] sm:$0xff]
      %v321 = vld [vmem:[%s240 + $0xd0] sm:$0xff]
      %v322 = vld [vmem:[%s240 + $0xd8] sm:$0xff]
      %v323 = vld [vmem:[%s240 + $0xe0] sm:$0xff]
      %v324 = vld [vmem:[%s240 + $0xe8] sm:$0xff]
      %v325 = vld [vmem:[%s240 + $0xf0] sm:$0xff]
      %v326 = vld [vmem:[%s240 + $0xf8] sm:$0xff]
      %v327 = vld [vmem:[#allocation2] sm:$0xff]
      %v328 = vld [vmem:[#allocation2 + $0x8] sm:$0xff]
      %v329 = vld [vmem:[#allocation2 + $0x10] sm:$0xff]
      %v330 = vld [vmem:[#allocation2 + $0x18] sm:$0xff]
      %v331 = vld [vmem:[#allocation2 + $0x20] sm:$0xff]
      %v332 = vld [vmem:[#allocation2 + $0x28] sm:$0xff]
      %v333 = vld [vmem:[#allocation2 + $0x30] sm:$0xff]
      %v334 = vld [vmem:[#allocation2 + $0x38] sm:$0xff]
      %v335 = vld [vmem:[#allocation2 + $0x40] sm:$0xff]
      %v336 = vld [vmem:[#allocation2 + $0x48] sm:$0xff]
      %v337 = vld [vmem:[#allocation2 + $0x50] sm:$0xff]
      %v338 = vld [vmem:[#allocation2 + $0x58] sm:$0xff]
      %v339 = vld [vmem:[#allocation2 + $0x60] sm:$0xff]
      %v340 = vld [vmem:[#allocation2 + $0x68] sm:$0xff]
      %v341 = vld [vmem:[#allocation2 + $0x70] sm:$0xff]
      %v342 = vld [vmem:[#allocation2 + $0x78] sm:$0xff]
      %v343 = vld [vmem:[#allocation2 + $0x80] sm:$0xff]
      %v344 = vld [vmem:[#allocation2 + $0x88] sm:$0xff]
      %v345 = vld [vmem:[#allocation2 + $0x90] sm:$0xff]
      %v346 = vld [vmem:[#allocation2 + $0x98] sm:$0xff]
      %v347 = vld [vmem:[#allocation2 + $0xa0] sm:$0xff]
      %v348 = vld [vmem:[#allocation2 + $0xa8] sm:$0xff]
      %v349 = vld [vmem:[#allocation2 + $0xb0] sm:$0xff]
      %v350 = vld [vmem:[#allocation2 + $0xb8] sm:$0xff]
      %v351 = vld [vmem:[#allocation2 + $0xc0] sm:$0xff]
      %v352 = vld [vmem:[#allocation2 + $0xc8] sm:$0xff]
      %v353 = vld [vmem:[#allocation2 + $0xd0] sm:$0xff]
      %v354 = vld [vmem:[#allocation2 + $0xd8] sm:$0xff]
      %v355 = vld [vmem:[#allocation2 + $0xe0] sm:$0xff]
      %v356 = vld [vmem:[#allocation2 + $0xe8] sm:$0xff]
      %v357 = vld [vmem:[#allocation2 + $0xf0] sm:$0xff]
      %v358 = vld [vmem:[#allocation2 + $0xf8] sm:$0xff]
      %v359 = vld [vmem:[%s245] sm:$0xf]
      %vm360 = vcmask 31744
      %v362 = vsel %vm360, %v295, 0
      %v365 = vsel %vm360, %v296, 0
      %v368 = vsel %vm360, %v297, 0
      %v371 = vsel %vm360, %v298, 0
      %v374 = vsel %vm360, %v299, 0
      %v377 = vsel %vm360, %v300, 0
      %v380 = vsel %vm360, %v301, 0
      %v383 = vsel %vm360, %v302, 0
      %v386 = vsel %vm360, %v303, 0
      %v389 = vsel %vm360, %v304, 0
      %v392 = vsel %vm360, %v305, 0
      %v395 = vsel %vm360, %v306, 0
      %v398 = vsel %vm360, %v307, 0
      %v401 = vsel %vm360, %v308, 0
      %v404 = vsel %vm360, %v309, 0
      %v407 = vsel %vm360, %v310, 0
      %v410 = vsel %vm360, %v311, 0
      %v413 = vsel %vm360, %v312, 0
      %v416 = vsel %vm360, %v313, 0
      %v419 = vsel %vm360, %v314, 0
      %v422 = vsel %vm360, %v315, 0
      %v425 = vsel %vm360, %v316, 0
      %v428 = vsel %vm360, %v317, 0
      %v431 = vsel %vm360, %v318, 0
      %v434 = vsel %vm360, %v319, 0
      %v437 = vsel %vm360, %v320, 0
      %v440 = vsel %vm360, %v321, 0
      %v443 = vsel %vm360, %v322, 0
      %v446 = vsel %vm360, %v323, 0
      %v449 = vsel %vm360, %v324, 0
      %v452 = vsel %vm360, %v325, 0
      %v455 = vsel %vm360, %v326, 0
      %vm457 = vcmask 1043456
      %v459 = vsel %vm457, %v359, 0
      %461 = vmatprep.subr.mxu0 0.0
      %462 = vmatpush1.msra.mxu0 %v459
      %463 = vmatprep.subr.mxu0 0.0
      %464 = vmatpush1.msra.mxu0 0.0
      %465 = vmatprep.subr.mxu0 0.0
      %466 = vmatpush1.msra.mxu0 0.0
      %467 = vmatprep.subr.mxu0 0.0
      %468 = vmatpush1.msra.mxu0 0.0
      %469 = vmatprep.subr.mxu0 0.0
      %470 = vmatpush1.msra.mxu0 0.0
      %471 = vmatprep.subr.mxu0 0.0
      %472 = vmatpush1.msra.mxu0 0.0
      %473 = vmatprep.subr.mxu0 0.0
      %474 = vmatpush1.msra.mxu0 0.0
      %475 = vmatprep.subr.mxu0 0.0
      %476 = vmatpush1.msra.mxu0 0.0
      %477 = vmatprep.subr.mxu0 0.0
      %478 = vmatpush1.msra.mxu0 0.0
      %479 = vmatprep.subr.mxu0 0.0
      %480 = vmatpush1.msra.mxu0 0.0
      %481 = vmatprep.subr.mxu0 0.0
      %482 = vmatpush1.msra.mxu0 0.0
      %483 = vmatprep.subr.mxu0 0.0
      %484 = vmatpush1.msra.mxu0 0.0
      %485 = vmatprep.subr.mxu0 0.0
      %486 = vmatpush1.msra.mxu0 0.0
      %487 = vmatprep.subr.mxu0 0.0
      %488 = vmatpush1.msra.mxu0 0.0
      %489 = vmatprep.subr.mxu0 0.0
      %490 = vmatpush1.msra.mxu0 0.0
      %491 = vmatprep.subr.mxu0 0.0
      %492 = vmatpush1.msra.mxu0 0.0
      %493 = vmatprep.subr.mxu0 0.0
      %494 = vmatpush1.msra.mxu0 0.0
      %495 = vmatprep.subr.mxu0 0.0
      %496 = vmatpush1.msra.mxu0 0.0
      %497 = vmatprep.subr.mxu0 0.0
      %498 = vmatpush1.msra.mxu0 0.0
      %499 = vmatprep.subr.mxu0 0.0
      %500 = vmatpush1.msra.mxu0 0.0
      %501 = vmatprep.subr.mxu0 0.0
      %502 = vmatpush1.msra.mxu0 0.0
      %503 = vmatprep.subr.mxu0 0.0
      %504 = vmatpush1.msra.mxu0 0.0
      %505 = vmatprep.subr.mxu0 0.0
      %506 = vmatpush1.msra.mxu0 0.0
      %507 = vmatprep.subr.mxu0 0.0
      %508 = vmatpush1.msra.mxu0 0.0
      %509 = vmatprep.subr.mxu0 0.0
      %510 = vmatpush1.msra.mxu0 0.0
      %511 = vmatprep.subr.mxu0 0.0
      %512 = vmatpush1.msra.mxu0 0.0
      %513 = vmatprep.subr.mxu0 0.0
      %514 = vmatpush1.msra.mxu0 0.0
      %515 = vmatprep.subr.mxu0 0.0
      %516 = vmatpush1.msra.mxu0 0.0
      %517 = vmatprep.subr.mxu0 0.0
      %518 = vmatpush1.msra.mxu0 0.0
      %519 = vmatprep.subr.mxu0 0.0
      %520 = vmatpush1.msra.mxu0 0.0
      %521 = vmatprep.subr.mxu0 0.0
      %522 = vmatpush1.msra.mxu0 0.0
      %523 = vmatprep.subr.mxu0 0.0
      %524 = vmatpush1.msra.mxu0 0.0
      %525 = vmatprep.mubr.f32.mxu0 0.0
      %526 = vmatmul.mubr.f32.gmra.mrb[0].mxu0 %v362
      %v527 = vpop.f32.mrb[0].mxu0
      %v528 = vadd.f32 0.0, %v527
      %v529 = vpop.f32.mrb[0].mxu0
      %530 = vmatprep.mubr.f32.mxu0 0.0
      %531 = vmatmul.mubr.f32.gmra.mrb[0].mxu0 %v365
      %v532 = vpop.f32.mrb[0].mxu0
      %v533 = vadd.f32 0.0, %v532
      %v534 = vpop.f32.mrb[0].mxu0
      %535 = vmatprep.mubr.f32.mxu0 0.0
      %536 = vmatmul.mubr.f32.gmra.mrb[0].mxu0 %v368
      %v537 = vpop.f32.mrb[0].mxu0
      %v538 = vadd.f32 0.0, %v537
      %v539 = vpop.f32.mrb[0].mxu0
      %540 = vmatprep.mubr.f32.mxu0 0.0
      %541 = vmatmul.mubr.f32.gmra.mrb[0].mxu0 %v371
      %v542 = vpop.f32.mrb[0].mxu0
      %v543 = vadd.f32 0.0, %v542
      %v544 = vpop.f32.mrb[0].mxu0
      %545 = vmatprep.mubr.f32.mxu0 0.0
      %546 = vmatmul.mubr.f32.gmra.mrb[0].mxu0 %v374
      %v547 = vpop.f32.mrb[0].mxu0
      %v548 = vadd.f32 0.0, %v547
      %v549 = vpop.f32.mrb[0].mxu0
      %550 = vmatprep.mubr.f32.mxu0 0.0
      %551 = vmatmul.mubr.f32.gmra.mrb[0].mxu0 %v377
      %v552 = vpop.f32.mrb[0].mxu0
      %v553 = vadd.f32 0.0, %v552
      %v554 = vpop.f32.mrb[0].mxu0
      %555 = vmatprep.mubr.f32.mxu0 0.0
      %556 = vmatmul.mubr.f32.gmra.mrb[0].mxu0 %v380
      %v557 = vpop.f32.mrb[0].mxu0
      %v558 = vadd.f32 0.0, %v557
      %v559 = vpop.f32.mrb[0].mxu0
      %560 = vmatprep.mubr.f32.mxu0 0.0
      %561 = vmatmul.mubr.f32.gmra.mrb[0].mxu0 %v383
      %v562 = vpop.f32.mrb[0].mxu0
      %v563 = vadd.f32 0.0, %v562
      %v564 = vpop.f32.mrb[0].mxu0
      %565 = vmatprep.mubr.f32.mxu0 0.0
      %566 = vmatmul.mubr.f32.gmra.mrb[0].mxu0 %v386
      %v567 = vpop.f32.mrb[0].mxu0
      %v568 = vadd.f32 0.0, %v567
      %v569 = vpop.f32.mrb[0].mxu0
      %570 = vmatprep.mubr.f32.mxu0 0.0
      %571 = vmatmul.mubr.f32.gmra.mrb[0].mxu0 %v389
      %v572 = vpop.f32.mrb[0].mxu0
      %v573 = vadd.f32 0.0, %v572
      %v574 = vpop.f32.mrb[0].mxu0
      %575 = vmatprep.mubr.f32.mxu0 0.0
      %576 = vmatmul.mubr.f32.gmra.mrb[0].mxu0 %v392
      %v577 = vpop.f32.mrb[0].mxu0
      %v578 = vadd.f32 0.0, %v577
      %v579 = vpop.f32.mrb[0].mxu0
      %580 = vmatprep.mubr.f32.mxu0 0.0
      %581 = vmatmul.mubr.f32.gmra.mrb[0].mxu0 %v395
      %v582 = vpop.f32.mrb[0].mxu0
      %v583 = vadd.f32 0.0, %v582
      %v584 = vpop.f32.mrb[0].mxu0
      %585 = vmatprep.mubr.f32.mxu0 0.0
      %586 = vmatmul.mubr.f32.gmra.mrb[0].mxu0 %v398
      %v587 = vpop.f32.mrb[0].mxu0
      %v588 = vadd.f32 0.0, %v587
      %v589 = vpop.f32.mrb[0].mxu0
      %590 = vmatprep.mubr.f32.mxu0 0.0
      %591 = vmatmul.mubr.f32.gmra.mrb[0].mxu0 %v401
      %v592 = vpop.f32.mrb[0].mxu0
      %v593 = vadd.f32 0.0, %v592
      %v594 = vpop.f32.mrb[0].mxu0
      %595 = vmatprep.mubr.f32.mxu0 0.0
      %596 = vmatmul.mubr.f32.gmra.mrb[0].mxu0 %v404
      %v597 = vpop.f32.mrb[0].mxu0
      %v598 = vadd.f32 0.0, %v597
      %v599 = vpop.f32.mrb[0].mxu0
      %600 = vmatprep.mubr.f32.mxu0 0.0
      %601 = vmatmul.mubr.f32.gmra.mrb[0].mxu0 %v407
      %v602 = vpop.f32.mrb[0].mxu0
      %v603 = vadd.f32 0.0, %v602
      %v604 = vpop.f32.mrb[0].mxu0
      %605 = vmatprep.mubr.f32.mxu0 0.0
      %606 = vmatmul.mubr.f32.gmra.mrb[0].mxu0 %v410
      %v607 = vpop.f32.mrb[0].mxu0
      %v608 = vadd.f32 0.0, %v607
      %v609 = vpop.f32.mrb[0].mxu0
      %610 = vmatprep.mubr.f32.mxu0 0.0
      %611 = vmatmul.mubr.f32.gmra.mrb[0].mxu0 %v413
      %v612 = vpop.f32.mrb[0].mxu0
      %v613 = vadd.f32 0.0, %v612
      %v614 = vpop.f32.mrb[0].mxu0
      %615 = vmatprep.mubr.f32.mxu0 0.0
      %616 = vmatmul.mubr.f32.gmra.mrb[0].mxu0 %v416
      %v617 = vpop.f32.mrb[0].mxu0
      %v618 = vadd.f32 0.0, %v617
      %v619 = vpop.f32.mrb[0].mxu0
      %620 = vmatprep.mubr.f32.mxu0 0.0
      %621 = vmatmul.mubr.f32.gmra.mrb[0].mxu0 %v419
      %v622 = vpop.f32.mrb[0].mxu0
      %v623 = vadd.f32 0.0, %v622
      %v624 = vpop.f32.mrb[0].mxu0
      %625 = vmatprep.mubr.f32.mxu0 0.0
      %626 = vmatmul.mubr.f32.gmra.mrb[0].mxu0 %v422
      %v627 = vpop.f32.mrb[0].mxu0
      %v628 = vadd.f32 0.0, %v627
      %v629 = vpop.f32.mrb[0].mxu0
      %630 = vmatprep.mubr.f32.mxu0 0.0
      %631 = vmatmul.mubr.f32.gmra.mrb[0].mxu0 %v425
      %v632 = vpop.f32.mrb[0].mxu0
      %v633 = vadd.f32 0.0, %v632
      %v634 = vpop.f32.mrb[0].mxu0
      %635 = vmatprep.mubr.f32.mxu0 0.0
      %636 = vmatmul.mubr.f32.gmra.mrb[0].mxu0 %v428
      %v637 = vpop.f32.mrb[0].mxu0
      %v638 = vadd.f32 0.0, %v637
      %v639 = vpop.f32.mrb[0].mxu0
      %640 = vmatprep.mubr.f32.mxu0 0.0
      %641 = vmatmul.mubr.f32.gmra.mrb[0].mxu0 %v431
      %v642 = vpop.f32.mrb[0].mxu0
      %v643 = vadd.f32 0.0, %v642
      %v644 = vpop.f32.mrb[0].mxu0
      %645 = vmatprep.mubr.f32.mxu0 0.0
      %646 = vmatmul.mubr.f32.gmra.mrb[0].mxu0 %v434
      %v647 = vpop.f32.mrb[0].mxu0
      %v648 = vadd.f32 0.0, %v647
      %v649 = vpop.f32.mrb[0].mxu0
      %650 = vmatprep.mubr.f32.mxu0 0.0
      %651 = vmatmul.mubr.f32.gmra.mrb[0].mxu0 %v437
      %v652 = vpop.f32.mrb[0].mxu0
      %v653 = vadd.f32 0.0, %v652
      %v654 = vpop.f32.mrb[0].mxu0
      %655 = vmatprep.mubr.f32.mxu0 0.0
      %656 = vmatmul.mubr.f32.gmra.mrb[0].mxu0 %v440
      %v657 = vpop.f32.mrb[0].mxu0
      %v658 = vadd.f32 0.0, %v657
      %v659 = vpop.f32.mrb[0].mxu0
      %660 = vmatprep.mubr.f32.mxu0 0.0
      %661 = vmatmul.mubr.f32.gmra.mrb[0].mxu0 %v443
      %v662 = vpop.f32.mrb[0].mxu0
      %v663 = vadd.f32 0.0, %v662
      %v664 = vpop.f32.mrb[0].mxu0
      %665 = vmatprep.mubr.f32.mxu0 0.0
      %666 = vmatmul.mubr.f32.gmra.mrb[0].mxu0 %v446
      %v667 = vpop.f32.mrb[0].mxu0
      %v668 = vadd.f32 0.0, %v667
      %v669 = vpop.f32.mrb[0].mxu0
      %670 = vmatprep.mubr.f32.mxu0 0.0
      %671 = vmatmul.mubr.f32.gmra.mrb[0].mxu0 %v449
      %v672 = vpop.f32.mrb[0].mxu0
      %v673 = vadd.f32 0.0, %v672
      %v674 = vpop.f32.mrb[0].mxu0
      %675 = vmatprep.mubr.f32.mxu0 0.0
      %676 = vmatmul.mubr.f32.gmra.mrb[0].mxu0 %v452
      %v677 = vpop.f32.mrb[0].mxu0
      %v678 = vadd.f32 0.0, %v677
      %v679 = vpop.f32.mrb[0].mxu0
      %680 = vmatprep.mubr.f32.mxu0 0.0
      %681 = vmatmul.mubr.f32.gmra.mrb[0].mxu0 %v455
      %v682 = vpop.f32.mrb[0].mxu0
      %v683 = vadd.f32 0.0, %v682
      %v684 = vpop.f32.mrb[0].mxu0
      %685 = vdwg.mxu0
      %v686 = vadd.f32 %v327, %v528
      %v687 = vadd.f32 %v328, %v533
      %v688 = vadd.f32 %v329, %v538
      %v689 = vadd.f32 %v330, %v543
      %v690 = vadd.f32 %v331, %v548
      %v691 = vadd.f32 %v332, %v553
      %v692 = vadd.f32 %v333, %v558
      %v693 = vadd.f32 %v334, %v563
      %v694 = vadd.f32 %v335, %v568
      %v695 = vadd.f32 %v336, %v573
      %v696 = vadd.f32 %v337, %v578
      %v697 = vadd.f32 %v338, %v583
      %v698 = vadd.f32 %v339, %v588
      %v699 = vadd.f32 %v340, %v593
      %v700 = vadd.f32 %v341, %v598
      %v701 = vadd.f32 %v342, %v603
      %v702 = vadd.f32 %v343, %v608
      %v703 = vadd.f32 %v344, %v613
      %v704 = vadd.f32 %v345, %v618
      %v705 = vadd.f32 %v346, %v623
      %v706 = vadd.f32 %v347, %v628
      %v707 = vadd.f32 %v348, %v633
      %v708 = vadd.f32 %v349, %v638
      %v709 = vadd.f32 %v350, %v643
      %v710 = vadd.f32 %v351, %v648
      %v711 = vadd.f32 %v352, %v653
      %v712 = vadd.f32 %v353, %v658
      %v713 = vadd.f32 %v354, %v663
      %v714 = vadd.f32 %v355, %v668
      %v715 = vadd.f32 %v356, %v673
      %v716 = vadd.f32 %v357, %v678
      %v717 = vadd.f32 %v358, %v683
      %vm718 = vcmask 15360
      %719 = vst.msk [vmem:[#allocation2] sm:$0xff] %vm718, %v686
      %720 = vst.msk [vmem:[#allocation2 + $0x8] sm:$0xff] %vm718, %v687
      %721 = vst.msk [vmem:[#allocation2 + $0x10] sm:$0xff] %vm718, %v688
      %722 = vst.msk [vmem:[#allocation2 + $0x18] sm:$0xff] %vm718, %v689
      %723 = vst.msk [vmem:[#allocation2 + $0x20] sm:$0xff] %vm718, %v690
      %724 = vst.msk [vmem:[#allocation2 + $0x28] sm:$0xff] %vm718, %v691
      %725 = vst.msk [vmem:[#allocation2 + $0x30] sm:$0xff] %vm718, %v692
      %726 = vst.msk [vmem:[#allocation2 + $0x38] sm:$0xff] %vm718, %v693
      %727 = vst.msk [vmem:[#allocation2 + $0x40] sm:$0xff] %vm718, %v694
      %728 = vst.msk [vmem:[#allocation2 + $0x48] sm:$0xff] %vm718, %v695
      %729 = vst.msk [vmem:[#allocation2 + $0x50] sm:$0xff] %vm718, %v696
      %730 = vst.msk [vmem:[#allocation2 + $0x58] sm:$0xff] %vm718, %v697
      %731 = vst.msk [vmem:[#allocation2 + $0x60] sm:$0xff] %vm718, %v698
      %732 = vst.msk [vmem:[#allocation2 + $0x68] sm:$0xff] %vm718, %v699
      %733 = vst.msk [vmem:[#allocation2 + $0x70] sm:$0xff] %vm718, %v700
      %734 = vst.msk [vmem:[#allocation2 + $0x78] sm:$0xff] %vm718, %v701
      %735 = vst.msk [vmem:[#allocation2 + $0x80] sm:$0xff] %vm718, %v702
      %736 = vst.msk [vmem:[#allocation2 + $0x88] sm:$0xff] %vm718, %v703
      %737 = vst.msk [vmem:[#allocation2 + $0x90] sm:$0xff] %vm718, %v704
      %738 = vst.msk [vmem:[#allocation2 + $0x98] sm:$0xff] %vm718, %v705
      %739 = vst.msk [vmem:[#allocation2 + $0xa0] sm:$0xff] %vm718, %v706
      %740 = vst.msk [vmem:[#allocation2 + $0xa8] sm:$0xff] %vm718, %v707
      %741 = vst.msk [vmem:[#allocation2 + $0xb0] sm:$0xff] %vm718, %v708
      %742 = vst.msk [vmem:[#allocation2 + $0xb8] sm:$0xff] %vm718, %v709
      %743 = vst.msk [vmem:[#allocation2 + $0xc0] sm:$0xff] %vm718, %v710
      %744 = vst.msk [vmem:[#allocation2 + $0xc8] sm:$0xff] %vm718, %v711
      %745 = vst.msk [vmem:[#allocation2 + $0xd0] sm:$0xff] %vm718, %v712
      %746 = vst.msk [vmem:[#allocation2 + $0xd8] sm:$0xff] %vm718, %v713
      %747 = vst.msk [vmem:[#allocation2 + $0xe0] sm:$0xff] %vm718, %v714
      %748 = vst.msk [vmem:[#allocation2 + $0xe8] sm:$0xff] %vm718, %v715
      %749 = vst.msk [vmem:[#allocation2 + $0xf0] sm:$0xff] %vm718, %v716
      %750 = vst.msk [vmem:[#allocation2 + $0xf8] sm:$0xff] %vm718, %v717
      // Predicated region
      $region33: #{res_bottleneck_block.5} parent=27 // pred_check
        %p751 = pneg %p258
      $region34: #{res_bottleneck_block.5} parent=27 // pred_check_branch
        %753 = sbr.rel (%p751) target = $region36
      $region35: #{res_bottleneck_block.5} parent=27 // pred_region
        %v754 = vld [vmem:[#allocation2] sm:$0xff]
        %v755 = vld [vmem:[#allocation2 + $0x8] sm:$0xff]
        %v756 = vld [vmem:[#allocation2 + $0x10] sm:$0xff]
        %v757 = vld [vmem:[#allocation2 + $0x18] sm:$0xff]
        %v758 = vld [vmem:[#allocation2 + $0x20] sm:$0xff]
        %v759 = vld [vmem:[#allocation2 + $0x28] sm:$0xff]
        %v760 = vld [vmem:[#allocation2 + $0x30] sm:$0xff]
        %v761 = vld [vmem:[#allocation2 + $0x38] sm:$0xff]
        %v762 = vld [vmem:[#allocation2 + $0x40] sm:$0xff]
        %v763 = vld [vmem:[#allocation2 + $0x48] sm:$0xff]
        %v764 = vld [vmem:[#allocation2 + $0x50] sm:$0xff]
        %v765 = vld [vmem:[#allocation2 + $0x58] sm:$0xff]
        %v766 = vld [vmem:[#allocation2 + $0x60] sm:$0xff]
        %v767 = vld [vmem:[#allocation2 + $0x68] sm:$0xff]
        %v768 = vld [vmem:[#allocation2 + $0x70] sm:$0xff]
        %v769 = vld [vmem:[#allocation2 + $0x78] sm:$0xff]
        %v770 = vld [vmem:[#allocation2 + $0x80] sm:$0xff]
        %v771 = vld [vmem:[#allocation2 + $0x88] sm:$0xff]
        %v772 = vld [vmem:[#allocation2 + $0x90] sm:$0xff]
        %v773 = vld [vmem:[#allocation2 + $0x98] sm:$0xff]
        %v774 = vld [vmem:[#allocation2 + $0xa0] sm:$0xff]
        %v775 = vld [vmem:[#allocation2 + $0xa8] sm:$0xff]
        %v776 = vld [vmem:[#allocation2 + $0xb0] sm:$0xff]
        %v777 = vld [vmem:[#allocation2 + $0xb8] sm:$0xff]
        %v778 = vld [vmem:[#allocation2 + $0xc0] sm:$0xff]
        %v779 = vld [vmem:[#allocation2 + $0xc8] sm:$0xff]
        %v780 = vld [vmem:[#allocation2 + $0xd0] sm:$0xff]
        %v781 = vld [vmem:[#allocation2 + $0xd8] sm:$0xff]
        %v782 = vld [vmem:[#allocation2 + $0xe0] sm:$0xff]
        %v783 = vld [vmem:[#allocation2 + $0xe8] sm:$0xff]
        %v784 = vld [vmem:[#allocation2 + $0xf0] sm:$0xff]
        %v785 = vld [vmem:[#allocation2 + $0xf8] sm:$0xff]
        %786 = vst.msk [vmem:[%s250] sm:$0xff] %vm718, %v754
        %787 = vst.msk [vmem:[%s250 + $0x8] sm:$0xff] %vm718, %v755
        %788 = vst.msk [vmem:[%s250 + $0x10] sm:$0xff] %vm718, %v756
        %789 = vst.msk [vmem:[%s250 + $0x18] sm:$0xff] %vm718, %v757
        %790 = vst.msk [vmem:[%s250 + $0x20] sm:$0xff] %vm718, %v758
        %791 = vst.msk [vmem:[%s250 + $0x28] sm:$0xff] %vm718, %v759
        %792 = vst.msk [vmem:[%s250 + $0x30] sm:$0xff] %vm718, %v760
        %793 = vst.msk [vmem:[%s250 + $0x38] sm:$0xff] %vm718, %v761
        %794 = vst.msk [vmem:[%s250 + $0x40] sm:$0xff] %vm718, %v762
        %795 = vst.msk [vmem:[%s250 + $0x48] sm:$0xff] %vm718, %v763
        %796 = vst.msk [vmem:[%s250 + $0x50] sm:$0xff] %vm718, %v764
        %797 = vst.msk [vmem:[%s250 + $0x58] sm:$0xff] %vm718, %v765
        %798 = vst.msk [vmem:[%s250 + $0x60] sm:$0xff] %vm718, %v766
        %799 = vst.msk [vmem:[%s250 + $0x68] sm:$0xff] %vm718, %v767
        %800 = vst.msk [vmem:[%s250 + $0x70] sm:$0xff] %vm718, %v768
        %801 = vst.msk [vmem:[%s250 + $0x78] sm:$0xff] %vm718, %v769
        %802 = vst.msk [vmem:[%s250 + $0x80] sm:$0xff] %vm718, %v770
        %803 = vst.msk [vmem:[%s250 + $0x88] sm:$0xff] %vm718, %v771
        %804 = vst.msk [vmem:[%s250 + $0x90] sm:$0xff] %vm718, %v772
        %805 = vst.msk [vmem:[%s250 + $0x98] sm:$0xff] %vm718, %v773
        %806 = vst.msk [vmem:[%s250 + $0xa0] sm:$0xff] %vm718, %v774
        %807 = vst.msk [vmem:[%s250 + $0xa8] sm:$0xff] %vm718, %v775
        %808 = vst.msk [vmem:[%s250 + $0xb0] sm:$0xff] %vm718, %v776
        %809 = vst.msk [vmem:[%s250 + $0xb8] sm:$0xff] %vm718, %v777
        %810 = vst.msk [vmem:[%s250 + $0xc0] sm:$0xff] %vm718, %v778
        %811 = vst.msk [vmem:[%s250 + $0xc8] sm:$0xff] %vm718, %v779
        %812 = vst.msk [vmem:[%s250 + $0xd0] sm:$0xff] %vm718, %v780
        %813 = vst.msk [vmem:[%s250 + $0xd8] sm:$0xff] %vm718, %v781
        %814 = vst.msk [vmem:[%s250 + $0xe0] sm:$0xff] %vm718, %v782
        %815 = vst.msk [vmem:[%s250 + $0xe8] sm:$0xff] %vm718, %v783
        %816 = vst.msk [vmem:[%s250 + $0xf0] sm:$0xff] %vm718, %v784
        %817 = vst.msk [vmem:[%s250 + $0xf8] sm:$0xff] %vm718, %v785
        %v818 = vsel %vm718, %v754, 0.0
        %v819 = vsel %vm718, %v755, 0.0
        %v820 = vadd.f32 %v818, %v819
        %v821 = vsel %vm718, %v756, 0.0
        %v822 = vadd.f32 %v820, %v821
        %v823 = vsel %vm718, %v757, 0.0
        %v824 = vadd.f32 %v822, %v823
        %v825 = vsel %vm718, %v758, 0.0
        %v826 = vadd.f32 %v824, %v825
        %v827 = vsel %vm718, %v759, 0.0
        %v828 = vadd.f32 %v826, %v827
        %v829 = vsel %vm718, %v760, 0.0
        %v830 = vadd.f32 %v828, %v829
        %v831 = vsel %vm718, %v761, 0.0
        %v832 = vadd.f32 %v830, %v831
        %v833 = vsel %vm718, %v762, 0.0
        %v834 = vadd.f32 %v832, %v833
        %v835 = vsel %vm718, %v763, 0.0
        %v836 = vadd.f32 %v834, %v835
        %v837 = vsel %vm718, %v764, 0.0
        %v838 = vadd.f32 %v836, %v837
        %v839 = vsel %vm718, %v765, 0.0
        %v840 = vadd.f32 %v838, %v839
        %v841 = vsel %vm718, %v766, 0.0
        %v842 = vadd.f32 %v840, %v841
        %v843 = vsel %vm718, %v767, 0.0
        %v844 = vadd.f32 %v842, %v843
        %v845 = vsel %vm718, %v768, 0.0
        %v846 = vadd.f32 %v844, %v845
        %v847 = vsel %vm718, %v769, 0.0
        %v848 = vadd.f32 %v846, %v847
        %v849 = vsel %vm718, %v770, 0.0
        %v850 = vadd.f32 %v848, %v849
        %v851 = vsel %vm718, %v771, 0.0
        %v852 = vadd.f32 %v850, %v851
        %v853 = vsel %vm718, %v772, 0.0
        %v854 = vadd.f32 %v852, %v853
        %v855 = vsel %vm718, %v773, 0.0
        %v856 = vadd.f32 %v854, %v855
        %v857 = vsel %vm718, %v774, 0.0
        %v858 = vadd.f32 %v856, %v857
        %v859 = vsel %vm718, %v775, 0.0
        %v860 = vadd.f32 %v858, %v859
        %v861 = vsel %vm718, %v776, 0.0
        %v862 = vadd.f32 %v860, %v861
        %v863 = vsel %vm718, %v777, 0.0
        %v864 = vadd.f32 %v862, %v863
        %v865 = vsel %vm718, %v778, 0.0
        %v866 = vadd.f32 %v864, %v865
        %v867 = vsel %vm718, %v779, 0.0
        %v868 = vadd.f32 %v866, %v867
        %v869 = vsel %vm718, %v780, 0.0
        %v870 = vadd.f32 %v868, %v869
        %v871 = vsel %vm718, %v781, 0.0
        %v872 = vadd.f32 %v870, %v871
        %v873 = vsel %vm718, %v782, 0.0
        %v874 = vadd.f32 %v872, %v873
        %v875 = vsel %vm718, %v783, 0.0
        %v876 = vadd.f32 %v874, %v875
        %v877 = vsel %vm718, %v784, 0.0
        %v878 = vadd.f32 %v876, %v877
        %v879 = vsel %vm718, %v785, 0.0
        %v880 = vadd.f32 %v878, %v879
        %v881 = vrot.slane %v880, 4
        %v882 = vadd.f32 %v880, %v881
        %v883 = vrot.slane %v882, 2
        %v884 = vadd.f32 %v882, %v883
        %v885 = vrot.slane %v884, 1
        %v886 = vadd.f32 %v884, %v885
        %vm887 = vcmask 8192
        %888 = vst.msk [vmem:[%s254] sm:$0x1] %vm887, %v886
        %v889 = vmul.f32 %v754, %v754
        %v890 = vmul.f32 %v755, %v755
        %v891 = vmul.f32 %v756, %v756
        %v892 = vmul.f32 %v757, %v757
        %v893 = vmul.f32 %v758, %v758
        %v894 = vmul.f32 %v759, %v759
        %v895 = vmul.f32 %v760, %v760
        %v896 = vmul.f32 %v761, %v761
        %v897 = vmul.f32 %v762, %v762
        %v898 = vmul.f32 %v763, %v763
        %v899 = vmul.f32 %v764, %v764
        %v900 = vmul.f32 %v765, %v765
        %v901 = vmul.f32 %v766, %v766
        %v902 = vmul.f32 %v767, %v767
        %v903 = vmul.f32 %v768, %v768
        %v904 = vmul.f32 %v769, %v769
        %v905 = vmul.f32 %v770, %v770
        %v906 = vmul.f32 %v771, %v771
        %v907 = vmul.f32 %v772, %v772
        %v908 = vmul.f32 %v773, %v773
        %v909 = vmul.f32 %v774, %v774
        %v910 = vmul.f32 %v775, %v775
        %v911 = vmul.f32 %v776, %v776
        %v912 = vmul.f32 %v777, %v777
        %v913 = vmul.f32 %v778, %v778
        %v914 = vmul.f32 %v779, %v779
        %v915 = vmul.f32 %v780, %v780
        %v916 = vmul.f32 %v781, %v781
        %v917 = vmul.f32 %v782, %v782
        %v918 = vmul.f32 %v783, %v783
        %v919 = vmul.f32 %v784, %v784
        %v920 = vmul.f32 %v785, %v785
        %v921 = vsel %vm718, %v889, 0.0
        %v922 = vsel %vm718, %v890, 0.0
        %v923 = vadd.f32 %v921, %v922
        %v924 = vsel %vm718, %v891, 0.0
        %v925 = vadd.f32 %v923, %v924
        %v926 = vsel %vm718, %v892, 0.0
        %v927 = vadd.f32 %v925, %v926
        %v928 = vsel %vm718, %v893, 0.0
        %v929 = vadd.f32 %v927, %v928
        %v930 = vsel %vm718, %v894, 0.0
        %v931 = vadd.f32 %v929, %v930
        %v932 = vsel %vm718, %v895, 0.0
        %v933 = vadd.f32 %v931, %v932
        %v934 = vsel %vm718, %v896, 0.0
        %v935 = vadd.f32 %v933, %v934
        %v936 = vsel %vm718, %v897, 0.0
        %v937 = vadd.f32 %v935, %v936
        %v938 = vsel %vm718, %v898, 0.0
        %v939 = vadd.f32 %v937, %v938
        %v940 = vsel %vm718, %v899, 0.0
        %v941 = vadd.f32 %v939, %v940
        %v942 = vsel %vm718, %v900, 0.0
        %v943 = vadd.f32 %v941, %v942
        %v944 = vsel %vm718, %v901, 0.0
        %v945 = vadd.f32 %v943, %v944
        %v946 = vsel %vm718, %v902, 0.0
        %v947 = vadd.f32 %v945, %v946
        %v948 = vsel %vm718, %v903, 0.0
        %v949 = vadd.f32 %v947, %v948
        %v950 = vsel %vm718, %v904, 0.0
        %v951 = vadd.f32 %v949, %v950
        %v952 = vsel %vm718, %v905, 0.0
        %v953 = vadd.f32 %v951, %v952
        %v954 = vsel %vm718, %v906, 0.0
        %v955 = vadd.f32 %v953, %v954
        %v956 = vsel %vm718, %v907, 0.0
        %v957 = vadd.f32 %v955, %v956
        %v958 = vsel %vm718, %v908, 0.0
        %v959 = vadd.f32 %v957, %v958
        %v960 = vsel %vm718, %v909, 0.0
        %v961 = vadd.f32 %v959, %v960
        %v962 = vsel %vm718, %v910, 0.0
        %v963 = vadd.f32 %v961, %v962
        %v964 = vsel %vm718, %v911, 0.0
        %v965 = vadd.f32 %v963, %v964
        %v966 = vsel %vm718, %v912, 0.0
        %v967 = vadd.f32 %v965, %v966
        %v968 = vsel %vm718, %v913, 0.0
        %v969 = vadd.f32 %v967, %v968
        %v970 = vsel %vm718, %v914, 0.0
        %v971 = vadd.f32 %v969, %v970
        %v972 = vsel %vm718, %v915, 0.0
        %v973 = vadd.f32 %v971, %v972
        %v974 = vsel %vm718, %v916, 0.0
        %v975 = vadd.f32 %v973, %v974
        %v976 = vsel %vm718, %v917, 0.0
        %v977 = vadd.f32 %v975, %v976
        %v978 = vsel %vm718, %v918, 0.0
        %v979 = vadd.f32 %v977, %v978
        %v980 = vsel %vm718, %v919, 0.0
        %v981 = vadd.f32 %v979, %v980
        %v982 = vsel %vm718, %v920, 0.0
        %v983 = vadd.f32 %v981, %v982
        %v984 = vrot.slane %v983, 4
        %v985 = vadd.f32 %v983, %v984
        %v986 = vrot.slane %v985, 2
        %v987 = vadd.f32 %v985, %v986
        %v988 = vrot.slane %v987, 1
        %v989 = vadd.f32 %v987, %v988
        %990 = vst.msk [vmem:[%s257] sm:$0x1] %vm887, %v989
      $region36: #{res_bottleneck_block.5} parent=27 // pred_fallthru
        _
      %s991 = smul.u32 32, %s20
      %p992 = scmp.lt.s32.totalorder %s991, 63
      %s993 = scalar_select %p992, %s991, 63
      %s994 = smul.addr %s993, 8
      %s995 = scalar_lea.vmem %s2, %s994
      %p996 = scmp.lt.s32.totalorder %s20, 1
      %s997 = scalar_select %p996, %s20, 1
      %s998 = scalar_lea.vmem %s3, %s997
      %p999 = scmp.lt.s32.totalorder %s20, 1
      %s1000 = scalar_select %p999, %s20, 1
      %s1001 = scalar_lea.vmem %s4, %s1000
      // Predicated region
      $region37: #{res_bottleneck_block.5} parent=27 // pred_check
        %p1002 = pneg %p100
      $region38: #{res_bottleneck_block.5} parent=27 // pred_check_branch
        %1004 = sbr.rel (%p1002) target = $region40
      $region39: #{res_bottleneck_block.5} parent=27 // pred_region
        %s1005 = smul.u32 32, %s20
      $region40: #{res_bottleneck_block.5} parent=27 // pred_fallthru
        _
      // Predicated region
      $region41: #{res_bottleneck_block.5} parent=27 // pred_check
        %p1006 = pneg %p126
      $region42: #{res_bottleneck_block.5} parent=27 // pred_check_branch
        %1008 = sbr.rel (%p1006) target = $region44
      $region43: #{res_bottleneck_block.5} parent=27 // pred_region
        _
      $region44: #{res_bottleneck_block.5} parent=27 // pred_fallthru
        _
      // Predicated region
      $region45: #{res_bottleneck_block.5} parent=27 // pred_check
        %p1009 = pneg %p152
      $region46: #{res_bottleneck_block.5} parent=27 // pred_check_branch
        %1011 = sbr.rel (%p1009) target = $region48
      $region47: #{res_bottleneck_block.5} parent=27 // pred_region
        _
      $region48: #{res_bottleneck_block.5} parent=27 // pred_fallthru
        _
    $region28: #{res_bottleneck_block.5} parent=5 // pred_fallthru
      _
    %p1012 = scmp.le.s32.totalorder 2, %s11
    // Predicated region
    $region49: #{res_bottleneck_block.5} parent=5 // pred_check
      %p1013 = pneg %p1012
    $region50: #{res_bottleneck_block.5} parent=5 // pred_check_branch
      %1015 = sbr.rel (%p1013) target = $region52
    $region51: #{res_bottleneck_block.5} parent=5 // pred_region
      %s1016 = ssub.s32 %s11, 2
      // Predicated region
      $region53: #{res_bottleneck_block.5} parent=51 // pred_check
        %p1017 = pneg %p106
      $region54: #{res_bottleneck_block.5} parent=51 // pred_check_branch
        %1019 = sbr.rel (%p1017) target = $region56
      $region55: #{res_bottleneck_block.5} parent=51 // pred_region
        %s1020 = smul.u32 32, %s22
        %p1021 = scmp.lt.s32.totalorder %s1020, 63
        %s1022 = scalar_select %p1021, %s1020, 63
        %s1023 = smul.addr %s1022, 8
        %s1024 = scalar_lea.vmem %s2, %s1023
      $region56: #{res_bottleneck_block.5} parent=51 // pred_fallthru
        _
      // Predicated region
      $region57: #{res_bottleneck_block.5} parent=51 // pred_check
        %p1025 = pneg %p132
      $region58: #{res_bottleneck_block.5} parent=51 // pred_check_branch
        %1027 = sbr.rel (%p1025) target = $region60
      $region59: #{res_bottleneck_block.5} parent=51 // pred_region
        %p1028 = scmp.lt.s32.totalorder %s22, 1
        %s1029 = scalar_select %p1028, %s22, 1
        %s1030 = scalar_lea.vmem %s3, %s1029
      $region60: #{res_bottleneck_block.5} parent=51 // pred_fallthru
        _
      // Predicated region
      $region61: #{res_bottleneck_block.5} parent=51 // pred_check
        %p1031 = pneg %p158
      $region62: #{res_bottleneck_block.5} parent=51 // pred_check_branch
        %1033 = sbr.rel (%p1031) target = $region64
      $region63: #{res_bottleneck_block.5} parent=51 // pred_region
        %p1034 = scmp.lt.s32.totalorder %s22, 1
        %s1035 = scalar_select %p1034, %s22, 1
        %s1036 = scalar_lea.vmem %s4, %s1035
      $region64: #{res_bottleneck_block.5} parent=51 // pred_fallthru
        _
    $region52: #{res_bottleneck_block.5} parent=5 // pred_fallthru
      _
  $region6: #{res_bottleneck_block.5} parent=0 // loop_footer
    %s15 = sadd.s32 1, %s11
  $region7: #{res_bottleneck_block.5} parent=0 // loop_footer_branch
    %10 = sbr.rel target = $region3
  $region8: #{res_bottleneck_block.5} parent=0 // loop_exit
    _

// kernel: res_bottleneck_block.7
$region0: #{res_bottleneck_block.7}
  #allocation0 [shape = 'u32[]', space=smem, size = 0x4, offset = 0x4, fixed_abs, tag = 'smem constant byte address 0x4 - core index']
  #allocation1 [shape = 'u32[144,128]{1,0:T(1,128)}', space=vmem, size = 0x12000, scoped, tag = 'internal scratch']
  #allocation2 [shape = 'f32[128,8]{1,0:T(8,128)}', space=vmem, size = 0x10000, scoped, tag = 'scratch operand']
  %s0 = inlined_call_operand.vmem [shape: f32[128,2], index: 0, kind: input, shape index: {}]
  %s1 = inlined_call_operand.vmem [shape: f32[2,8], index: 1, kind: input, shape index: {}]
  %s2 = inlined_call_operand.vmem [shape: f32[1,2], index: 2, kind: input, shape index: {}]
  %s3 = inlined_call_operand.vmem [shape: f32[1,2], index: 3, kind: input, shape index: {}]
  %s4 = inlined_call_operand.vmem [shape: f32[128,8], index: 4, kind: output, shape index: {0}]
  %s5 = inlined_call_operand.vmem [shape: f32[1,1,8], index: 5, kind: output, shape index: {1}]
  %s6 = inlined_call_operand.vmem [shape: f32[1,1,8], index: 6, kind: output, shape index: {2}]
  %7 = xla_tuple %s4, %s5, %s6
  %s8 = sld [smem:[#allocation0]]
  $region50: #{res_bottleneck_block.7} parent=0
    _
  %s10 = ssub.s32 1, %s8
  %s11 = scalar_select 0, %s10, %s8
  // Predicated region
  $region2: #{res_bottleneck_block.7} parent=0 // pred_check
    _
  $region3: #{res_bottleneck_block.7} parent=0 // pred_check_branch
    %13 = sbr.rel (0) target = $region5
  $region4: #{res_bottleneck_block.7} parent=0 // pred_region
    _
  $region5: #{res_bottleneck_block.7} parent=0 // pred_fallthru
    _
  // Predicated region
  $region6: #{res_bottleneck_block.7} parent=0 // pred_check
    _
  $region7: #{res_bottleneck_block.7} parent=0 // pred_check_branch
    %15 = sbr.rel (0) target = $region9
  $region8: #{res_bottleneck_block.7} parent=0 // pred_region
    _
  $region9: #{res_bottleneck_block.7} parent=0 // pred_fallthru
    _
  // Predicated region
  $region10: #{res_bottleneck_block.7} parent=0 // pred_check
    _
  $region11: #{res_bottleneck_block.7} parent=0 // pred_check_branch
    %17 = sbr.rel (0) target = $region13
  $region12: #{res_bottleneck_block.7} parent=0 // pred_region
    _
  $region13: #{res_bottleneck_block.7} parent=0 // pred_fallthru
    _
  // Predicated region
  $region14: #{res_bottleneck_block.7} parent=0 // pred_check
    _
  $region15: #{res_bottleneck_block.7} parent=0 // pred_check_branch
    %19 = sbr.rel (0) target = $region17
  $region16: #{res_bottleneck_block.7} parent=0 // pred_region
    _
  $region17: #{res_bottleneck_block.7} parent=0 // pred_fallthru
    _
  %p20 = scmp.eq.s32.totalorder 0, 0
  // Predicated region
  $region18: #{res_bottleneck_block.7} parent=0 // pred_check
    %p21 = pneg %p20
  $region19: #{res_bottleneck_block.7} parent=0 // pred_check_branch
    %23 = sbr.rel (%p21) target = $region21
  $region20: #{res_bottleneck_block.7} parent=0 // pred_region
    %vm24 = vcmask 64512
    %25 = vst.msk [vmem:[#allocation2] sm:$0xff] %vm24, 0.0
    %26 = vst.msk [vmem:[#allocation2 + $0x8] sm:$0xff] %vm24, 0.0
    %27 = vst.msk [vmem:[#allocation2 + $0x10] sm:$0xff] %vm24, 0.0
    %28 = vst.msk [vmem:[#allocation2 + $0x18] sm:$0xff] %vm24, 0.0
    %29 = vst.msk [vmem:[#allocation2 + $0x20] sm:$0xff] %vm24, 0.0
    %30 = vst.msk [vmem:[#allocation2 + $0x28] sm:$0xff] %vm24, 0.0
    %31 = vst.msk [vmem:[#allocation2 + $0x30] sm:$0xff] %vm24, 0.0
    %32 = vst.msk [vmem:[#allocation2 + $0x38] sm:$0xff] %vm24, 0.0
    %33 = vst.msk [vmem:[#allocation2 + $0x40] sm:$0xff] %vm24, 0.0
    %34 = vst.msk [vmem:[#allocation2 + $0x48] sm:$0xff] %vm24, 0.0
    %35 = vst.msk [vmem:[#allocation2 + $0x50] sm:$0xff] %vm24, 0.0
    %36 = vst.msk [vmem:[#allocation2 + $0x58] sm:$0xff] %vm24, 0.0
    %37 = vst.msk [vmem:[#allocation2 + $0x60] sm:$0xff] %vm24, 0.0
    %38 = vst.msk [vmem:[#allocation2 + $0x68] sm:$0xff] %vm24, 0.0
    %39 = vst.msk [vmem:[#allocation2 + $0x70] sm:$0xff] %vm24, 0.0
    %40 = vst.msk [vmem:[#allocation2 + $0x78] sm:$0xff] %vm24, 0.0
  $region21: #{res_bottleneck_block.7} parent=0 // pred_fallthru
    _
  %v41 = vld [vmem:[%s0] sm:$0xff]
  %v42 = vld [vmem:[%s0 + $0x8] sm:$0xff]
  %v43 = vld [vmem:[%s0 + $0x10] sm:$0xff]
  %v44 = vld [vmem:[%s0 + $0x18] sm:$0xff]
  %v45 = vld [vmem:[%s0 + $0x20] sm:$0xff]
  %v46 = vld [vmem:[%s0 + $0x28] sm:$0xff]
  %v47 = vld [vmem:[%s0 + $0x30] sm:$0xff]
  %v48 = vld [vmem:[%s0 + $0x38] sm:$0xff]
  %v49 = vld [vmem:[%s0 + $0x40] sm:$0xff]
  %v50 = vld [vmem:[%s0 + $0x48] sm:$0xff]
  %v51 = vld [vmem:[%s0 + $0x50] sm:$0xff]
  %v52 = vld [vmem:[%s0 + $0x58] sm:$0xff]
  %v53 = vld [vmem:[%s0 + $0x60] sm:$0xff]
  %v54 = vld [vmem:[%s0 + $0x68] sm:$0xff]
  %v55 = vld [vmem:[%s0 + $0x70] sm:$0xff]
  %v56 = vld [vmem:[%s0 + $0x78] sm:$0xff]
  %v57 = vld [vmem:[%s2] sm:$0x1]
  %v59 = vlaneseq
  %v60 = vshrl.u32 %v59, 7
  %v61 = vsub.s32 0, %v60
  %v62 = vrot.slane %v57, %v61
  %v64 = vmul.f32 %v41, %v62
  %v65 = vmul.f32 %v42, %v62
  %v66 = vmul.f32 %v43, %v62
  %v67 = vmul.f32 %v44, %v62
  %v68 = vmul.f32 %v45, %v62
  %v69 = vmul.f32 %v46, %v62
  %v70 = vmul.f32 %v47, %v62
  %v71 = vmul.f32 %v48, %v62
  %v72 = vmul.f32 %v49, %v62
  %v73 = vmul.f32 %v50, %v62
  %v74 = vmul.f32 %v51, %v62
  %v75 = vmul.f32 %v52, %v62
  %v76 = vmul.f32 %v53, %v62
  %v77 = vmul.f32 %v54, %v62
  %v78 = vmul.f32 %v55, %v62
  %v79 = vmul.f32 %v56, %v62
  %v80 = vld [vmem:[%s3] sm:$0x1]
  %v82 = vlaneseq
  %v83 = vshrl.u32 %v82, 7
  %v84 = vsub.s32 0, %v83
  %v85 = vrot.slane %v80, %v84
  %v87 = vadd.f32 %v64, %v85
  %v88 = vadd.f32 %v65, %v85
  %v89 = vadd.f32 %v66, %v85
  %v90 = vadd.f32 %v67, %v85
  %v91 = vadd.f32 %v68, %v85
  %v92 = vadd.f32 %v69, %v85
  %v93 = vadd.f32 %v70, %v85
  %v94 = vadd.f32 %v71, %v85
  %v95 = vadd.f32 %v72, %v85
  %v96 = vadd.f32 %v73, %v85
  %v97 = vadd.f32 %v74, %v85
  %v98 = vadd.f32 %v75, %v85
  %v99 = vadd.f32 %v76, %v85
  %v100 = vadd.f32 %v77, %v85
  %v101 = vadd.f32 %v78, %v85
  %v102 = vadd.f32 %v79, %v85
  %v103 = vmax.f32 %v87, 0.0
  %v104 = vmax.f32 %v88, 0.0
  %v105 = vmax.f32 %v89, 0.0
  %v106 = vmax.f32 %v90, 0.0
  %v107 = vmax.f32 %v91, 0.0
  %v108 = vmax.f32 %v92, 0.0
  %v109 = vmax.f32 %v93, 0.0
  %v110 = vmax.f32 %v94, 0.0
  %v111 = vmax.f32 %v95, 0.0
  %v112 = vmax.f32 %v96, 0.0
  %v113 = vmax.f32 %v97, 0.0
  %v114 = vmax.f32 %v98, 0.0
  %v115 = vmax.f32 %v99, 0.0
  %v116 = vmax.f32 %v100, 0.0
  %v117 = vmax.f32 %v101, 0.0
  %v118 = vmax.f32 %v102, 0.0
  %v119 = vld [vmem:[#allocation2] sm:$0xff]
  %v120 = vld [vmem:[#allocation2 + $0x8] sm:$0xff]
  %v121 = vld [vmem:[#allocation2 + $0x10] sm:$0xff]
  %v122 = vld [vmem:[#allocation2 + $0x18] sm:$0xff]
  %v123 = vld [vmem:[#allocation2 + $0x20] sm:$0xff]
  %v124 = vld [vmem:[#allocation2 + $0x28] sm:$0xff]
  %v125 = vld [vmem:[#allocation2 + $0x30] sm:$0xff]
  %v126 = vld [vmem:[#allocation2 + $0x38] sm:$0xff]
  %v127 = vld [vmem:[#allocation2 + $0x40] sm:$0xff]
  %v128 = vld [vmem:[#allocation2 + $0x48] sm:$0xff]
  %v129 = vld [vmem:[#allocation2 + $0x50] sm:$0xff]
  %v130 = vld [vmem:[#allocation2 + $0x58] sm:$0xff]
  %v131 = vld [vmem:[#allocation2 + $0x60] sm:$0xff]
  %v132 = vld [vmem:[#allocation2 + $0x68] sm:$0xff]
  %v133 = vld [vmem:[#allocation2 + $0x70] sm:$0xff]
  %v134 = vld [vmem:[#allocation2 + $0x78] sm:$0xff]
  %v135 = vld [vmem:[%s1] sm:$0x3]
  %vm136 = vcmask 15360
  %v138 = vsel %vm136, %v103, 0
  %v141 = vsel %vm136, %v104, 0
  %v144 = vsel %vm136, %v105, 0
  %v147 = vsel %vm136, %v106, 0
  %v150 = vsel %vm136, %v107, 0
  %v153 = vsel %vm136, %v108, 0
  %v156 = vsel %vm136, %v109, 0
  %v159 = vsel %vm136, %v110, 0
  %v162 = vsel %vm136, %v111, 0
  %v165 = vsel %vm136, %v112, 0
  %v168 = vsel %vm136, %v113, 0
  %v171 = vsel %vm136, %v114, 0
  %v174 = vsel %vm136, %v115, 0
  %v177 = vsel %vm136, %v116, 0
  %v180 = vsel %vm136, %v117, 0
  %v183 = vsel %vm136, %v118, 0
  %vm185 = vcmask 1041408
  %v187 = vsel %vm185, %v135, 0
  %189 = vmatprep.subr.mxu0 0.0
  %190 = vmatpush1.msra.mxu0 %v187
  %191 = vmatprep.subr.mxu0 0.0
  %192 = vmatpush1.msra.mxu0 0.0
  %193 = vmatprep.subr.mxu0 0.0
  %194 = vmatpush1.msra.mxu0 0.0
  %195 = vmatprep.subr.mxu0 0.0
  %196 = vmatpush1.msra.mxu0 0.0
  %197 = vmatprep.subr.mxu0 0.0
  %198 = vmatpush1.msra.mxu0 0.0
  %199 = vmatprep.subr.mxu0 0.0
  %200 = vmatpush1.msra.mxu0 0.0
  %201 = vmatprep.subr.mxu0 0.0
  %202 = vmatpush1.msra.mxu0 0.0
  %203 = vmatprep.subr.mxu0 0.0
  %204 = vmatpush1.msra.mxu0 0.0
  %205 = vmatprep.subr.mxu0 0.0
  %206 = vmatpush1.msra.mxu0 0.0
  %207 = vmatprep.subr.mxu0 0.0
  %208 = vmatpush1.msra.mxu0 0.0
  %209 = vmatprep.subr.mxu0 0.0
  %210 = vmatpush1.msra.mxu0 0.0
  %211 = vmatprep.subr.mxu0 0.0
  %212 = vmatpush1.msra.mxu0 0.0
  %213 = vmatprep.subr.mxu0 0.0
  %214 = vmatpush1.msra.mxu0 0.0
  %215 = vmatprep.subr.mxu0 0.0
  %216 = vmatpush1.msra.mxu0 0.0
  %217 = vmatprep.subr.mxu0 0.0
  %218 = vmatpush1.msra.mxu0 0.0
  %219 = vmatprep.subr.mxu0 0.0
  %220 = vmatpush1.msra.mxu0 0.0
  %221 = vmatprep.subr.mxu0 0.0
  %222 = vmatpush1.msra.mxu0 0.0
  %223 = vmatprep.subr.mxu0 0.0
  %224 = vmatpush1.msra.mxu0 0.0
  %225 = vmatprep.subr.mxu0 0.0
  %226 = vmatpush1.msra.mxu0 0.0
  %227 = vmatprep.subr.mxu0 0.0
  %228 = vmatpush1.msra.mxu0 0.0
  %229 = vmatprep.subr.mxu0 0.0
  %230 = vmatpush1.msra.mxu0 0.0
  %231 = vmatprep.subr.mxu0 0.0
  %232 = vmatpush1.msra.mxu0 0.0
  %233 = vmatprep.subr.mxu0 0.0
  %234 = vmatpush1.msra.mxu0 0.0
  %235 = vmatprep.subr.mxu0 0.0
  %236 = vmatpush1.msra.mxu0 0.0
  %237 = vmatprep.subr.mxu0 0.0
  %238 = vmatpush1.msra.mxu0 0.0
  %239 = vmatprep.subr.mxu0 0.0
  %240 = vmatpush1.msra.mxu0 0.0
  %241 = vmatprep.subr.mxu0 0.0
  %242 = vmatpush1.msra.mxu0 0.0
  %243 = vmatprep.subr.mxu0 0.0
  %244 = vmatpush1.msra.mxu0 0.0
  %245 = vmatprep.subr.mxu0 0.0
  %246 = vmatpush1.msra.mxu0 0.0
  %247 = vmatprep.subr.mxu0 0.0
  %248 = vmatpush1.msra.mxu0 0.0
  %249 = vmatprep.subr.mxu0 0.0
  %250 = vmatpush1.msra.mxu0 0.0
  %251 = vmatprep.subr.mxu0 0.0
  %252 = vmatpush1.msra.mxu0 0.0
  %253 = vmatprep.mubr.f32.mxu0 0.0
  %254 = vmatmul.mubr.f32.gmra.mrb[0].mxu0 %v138
  %v255 = vpop.f32.mrb[0].mxu0
  %v256 = vadd.f32 0.0, %v255
  %v257 = vpop.f32.mrb[0].mxu0
  %258 = vmatprep.mubr.f32.mxu0 0.0
  %259 = vmatmul.mubr.f32.gmra.mrb[0].mxu0 %v141
  %v260 = vpop.f32.mrb[0].mxu0
  %v261 = vadd.f32 0.0, %v260
  %v262 = vpop.f32.mrb[0].mxu0
  %263 = vmatprep.mubr.f32.mxu0 0.0
  %264 = vmatmul.mubr.f32.gmra.mrb[0].mxu0 %v144
  %v265 = vpop.f32.mrb[0].mxu0
  %v266 = vadd.f32 0.0, %v265
  %v267 = vpop.f32.mrb[0].mxu0
  %268 = vmatprep.mubr.f32.mxu0 0.0
  %269 = vmatmul.mubr.f32.gmra.mrb[0].mxu0 %v147
  %v270 = vpop.f32.mrb[0].mxu0
  %v271 = vadd.f32 0.0, %v270
  %v272 = vpop.f32.mrb[0].mxu0
  %273 = vmatprep.mubr.f32.mxu0 0.0
  %274 = vmatmul.mubr.f32.gmra.mrb[0].mxu0 %v150
  %v275 = vpop.f32.mrb[0].mxu0
  %v276 = vadd.f32 0.0, %v275
  %v277 = vpop.f32.mrb[0].mxu0
  %278 = vmatprep.mubr.f32.mxu0 0.0
  %279 = vmatmul.mubr.f32.gmra.mrb[0].mxu0 %v153
  %v280 = vpop.f32.mrb[0].mxu0
  %v281 = vadd.f32 0.0, %v280
  %v282 = vpop.f32.mrb[0].mxu0
  %283 = vmatprep.mubr.f32.mxu0 0.0
  %284 = vmatmul.mubr.f32.gmra.mrb[0].mxu0 %v156
  %v285 = vpop.f32.mrb[0].mxu0
  %v286 = vadd.f32 0.0, %v285
  %v287 = vpop.f32.mrb[0].mxu0
  %288 = vmatprep.mubr.f32.mxu0 0.0
  %289 = vmatmul.mubr.f32.gmra.mrb[0].mxu0 %v159
  %v290 = vpop.f32.mrb[0].mxu0
  %v291 = vadd.f32 0.0, %v290
  %v292 = vpop.f32.mrb[0].mxu0
  %293 = vmatprep.mubr.f32.mxu0 0.0
  %294 = vmatmul.mubr.f32.gmra.mrb[0].mxu0 %v162
  %v295 = vpop.f32.mrb[0].mxu0
  %v296 = vadd.f32 0.0, %v295
  %v297 = vpop.f32.mrb[0].mxu0
  %298 = vmatprep.mubr.f32.mxu0 0.0
  %299 = vmatmul.mubr.f32.gmra.mrb[0].mxu0 %v165
  %v300 = vpop.f32.mrb[0].mxu0
  %v301 = vadd.f32 0.0, %v300
  %v302 = vpop.f32.mrb[0].mxu0
  %303 = vmatprep.mubr.f32.mxu0 0.0
  %304 = vmatmul.mubr.f32.gmra.mrb[0].mxu0 %v168
  %v305 = vpop.f32.mrb[0].mxu0
  %v306 = vadd.f32 0.0, %v305
  %v307 = vpop.f32.mrb[0].mxu0
  %308 = vmatprep.mubr.f32.mxu0 0.0
  %309 = vmatmul.mubr.f32.gmra.mrb[0].mxu0 %v171
  %v310 = vpop.f32.mrb[0].mxu0
  %v311 = vadd.f32 0.0, %v310
  %v312 = vpop.f32.mrb[0].mxu0
  %313 = vmatprep.mubr.f32.mxu0 0.0
  %314 = vmatmul.mubr.f32.gmra.mrb[0].mxu0 %v174
  %v315 = vpop.f32.mrb[0].mxu0
  %v316 = vadd.f32 0.0, %v315
  %v317 = vpop.f32.mrb[0].mxu0
  %318 = vmatprep.mubr.f32.mxu0 0.0
  %319 = vmatmul.mubr.f32.gmra.mrb[0].mxu0 %v177
  %v320 = vpop.f32.mrb[0].mxu0
  %v321 = vadd.f32 0.0, %v320
  %v322 = vpop.f32.mrb[0].mxu0
  %323 = vmatprep.mubr.f32.mxu0 0.0
  %324 = vmatmul.mubr.f32.gmra.mrb[0].mxu0 %v180
  %v325 = vpop.f32.mrb[0].mxu0
  %v326 = vadd.f32 0.0, %v325
  %v327 = vpop.f32.mrb[0].mxu0
  %328 = vmatprep.mubr.f32.mxu0 0.0
  %329 = vmatmul.mubr.f32.gmra.mrb[0].mxu0 %v183
  %v330 = vpop.f32.mrb[0].mxu0
  %v331 = vadd.f32 0.0, %v330
  %v332 = vpop.f32.mrb[0].mxu0
  %333 = vdwg.mxu0
  %v334 = vadd.f32 %v119, %v256
  %v335 = vadd.f32 %v120, %v261
  %v336 = vadd.f32 %v121, %v266
  %v337 = vadd.f32 %v122, %v271
  %v338 = vadd.f32 %v123, %v276
  %v339 = vadd.f32 %v124, %v281
  %v340 = vadd.f32 %v125, %v286
  %v341 = vadd.f32 %v126, %v291
  %v342 = vadd.f32 %v127, %v296
  %v343 = vadd.f32 %v128, %v301
  %v344 = vadd.f32 %v129, %v306
  %v345 = vadd.f32 %v130, %v311
  %v346 = vadd.f32 %v131, %v316
  %v347 = vadd.f32 %v132, %v321
  %v348 = vadd.f32 %v133, %v326
  %v349 = vadd.f32 %v134, %v331
  %vm350 = vcmask 64512
  %351 = vst.msk [vmem:[#allocation2] sm:$0xff] %vm350, %v334
  %352 = vst.msk [vmem:[#allocation2 + $0x8] sm:$0xff] %vm350, %v335
  %353 = vst.msk [vmem:[#allocation2 + $0x10] sm:$0xff] %vm350, %v336
  %354 = vst.msk [vmem:[#allocation2 + $0x18] sm:$0xff] %vm350, %v337
  %355 = vst.msk [vmem:[#allocation2 + $0x20] sm:$0xff] %vm350, %v338
  %356 = vst.msk [vmem:[#allocation2 + $0x28] sm:$0xff] %vm350, %v339
  %357 = vst.msk [vmem:[#allocation2 + $0x30] sm:$0xff] %vm350, %v340
  %358 = vst.msk [vmem:[#allocation2 + $0x38] sm:$0xff] %vm350, %v341
  %359 = vst.msk [vmem:[#allocation2 + $0x40] sm:$0xff] %vm350, %v342
  %360 = vst.msk [vmem:[#allocation2 + $0x48] sm:$0xff] %vm350, %v343
  %361 = vst.msk [vmem:[#allocation2 + $0x50] sm:$0xff] %vm350, %v344
  %362 = vst.msk [vmem:[#allocation2 + $0x58] sm:$0xff] %vm350, %v345
  %363 = vst.msk [vmem:[#allocation2 + $0x60] sm:$0xff] %vm350, %v346
  %364 = vst.msk [vmem:[#allocation2 + $0x68] sm:$0xff] %vm350, %v347
  %365 = vst.msk [vmem:[#allocation2 + $0x70] sm:$0xff] %vm350, %v348
  %366 = vst.msk [vmem:[#allocation2 + $0x78] sm:$0xff] %vm350, %v349
  // Predicated region
  $region22: #{res_bottleneck_block.7} parent=0 // pred_check
    %p367 = pneg %p20
  $region23: #{res_bottleneck_block.7} parent=0 // pred_check_branch
    %369 = sbr.rel (%p367) target = $region25
  $region24: #{res_bottleneck_block.7} parent=0 // pred_region
    %v370 = vld [vmem:[#allocation2] sm:$0xff]
    %v371 = vld [vmem:[#allocation2 + $0x8] sm:$0xff]
    %v372 = vld [vmem:[#allocation2 + $0x10] sm:$0xff]
    %v373 = vld [vmem:[#allocation2 + $0x18] sm:$0xff]
    %v374 = vld [vmem:[#allocation2 + $0x20] sm:$0xff]
    %v375 = vld [vmem:[#allocation2 + $0x28] sm:$0xff]
    %v376 = vld [vmem:[#allocation2 + $0x30] sm:$0xff]
    %v377 = vld [vmem:[#allocation2 + $0x38] sm:$0xff]
    %v378 = vld [vmem:[#allocation2 + $0x40] sm:$0xff]
    %v379 = vld [vmem:[#allocation2 + $0x48] sm:$0xff]
    %v380 = vld [vmem:[#allocation2 + $0x50] sm:$0xff]
    %v381 = vld [vmem:[#allocation2 + $0x58] sm:$0xff]
    %v382 = vld [vmem:[#allocation2 + $0x60] sm:$0xff]
    %v383 = vld [vmem:[#allocation2 + $0x68] sm:$0xff]
    %v384 = vld [vmem:[#allocation2 + $0x70] sm:$0xff]
    %v385 = vld [vmem:[#allocation2 + $0x78] sm:$0xff]
    %386 = vst.msk [vmem:[%s4] sm:$0xff] %vm350, %v370
    %387 = vst.msk [vmem:[%s4 + $0x8] sm:$0xff] %vm350, %v371
    %388 = vst.msk [vmem:[%s4 + $0x10] sm:$0xff] %vm350, %v372
    %389 = vst.msk [vmem:[%s4 + $0x18] sm:$0xff] %vm350, %v373
    %390 = vst.msk [vmem:[%s4 + $0x20] sm:$0xff] %vm350, %v374
    %391 = vst.msk [vmem:[%s4 + $0x28] sm:$0xff] %vm350, %v375
    %392 = vst.msk [vmem:[%s4 + $0x30] sm:$0xff] %vm350, %v376
    %393 = vst.msk [vmem:[%s4 + $0x38] sm:$0xff] %vm350, %v377
    %394 = vst.msk [vmem:[%s4 + $0x40] sm:$0xff] %vm350, %v378
    %395 = vst.msk [vmem:[%s4 + $0x48] sm:$0xff] %vm350, %v379
    %396 = vst.msk [vmem:[%s4 + $0x50] sm:$0xff] %vm350, %v380
    %397 = vst.msk [vmem:[%s4 + $0x58] sm:$0xff] %vm350, %v381
    %398 = vst.msk [vmem:[%s4 + $0x60] sm:$0xff] %vm350, %v382
    %399 = vst.msk [vmem:[%s4 + $0x68] sm:$0xff] %vm350, %v383
    %400 = vst.msk [vmem:[%s4 + $0x70] sm:$0xff] %vm350, %v384
    %401 = vst.msk [vmem:[%s4 + $0x78] sm:$0xff] %vm350, %v385
    %v402 = vsel %vm350, %v370, 0.0
    %v403 = vsel %vm350, %v371, 0.0
    %v404 = vadd.f32 %v402, %v403
    %v405 = vsel %vm350, %v372, 0.0
    %v406 = vadd.f32 %v404, %v405
    %v407 = vsel %vm350, %v373, 0.0
    %v408 = vadd.f32 %v406, %v407
    %v409 = vsel %vm350, %v374, 0.0
    %v410 = vadd.f32 %v408, %v409
    %v411 = vsel %vm350, %v375, 0.0
    %v412 = vadd.f32 %v410, %v411
    %v413 = vsel %vm350, %v376, 0.0
    %v414 = vadd.f32 %v412, %v413
    %v415 = vsel %vm350, %v377, 0.0
    %v416 = vadd.f32 %v414, %v415
    %v417 = vsel %vm350, %v378, 0.0
    %v418 = vadd.f32 %v416, %v417
    %v419 = vsel %vm350, %v379, 0.0
    %v420 = vadd.f32 %v418, %v419
    %v421 = vsel %vm350, %v380, 0.0
    %v422 = vadd.f32 %v420, %v421
    %v423 = vsel %vm350, %v381, 0.0
    %v424 = vadd.f32 %v422, %v423
    %v425 = vsel %vm350, %v382, 0.0
    %v426 = vadd.f32 %v424, %v425
    %v427 = vsel %vm350, %v383, 0.0
    %v428 = vadd.f32 %v426, %v427
    %v429 = vsel %vm350, %v384, 0.0
    %v430 = vadd.f32 %v428, %v429
    %v431 = vsel %vm350, %v385, 0.0
    %v432 = vadd.f32 %v430, %v431
    %v433 = vrot.slane %v432, 4
    %v434 = vadd.f32 %v432, %v433
    %v435 = vrot.slane %v434, 2
    %v436 = vadd.f32 %v434, %v435
    %v437 = vrot.slane %v436, 1
    %v438 = vadd.f32 %v436, %v437
    %vm439 = vcmask 57344
    %440 = vst.msk [vmem:[%s5] sm:$0x1] %vm439, %v438
    %v441 = vmul.f32 %v370, %v370
    %v442 = vmul.f32 %v371, %v371
    %v443 = vmul.f32 %v372, %v372
    %v444 = vmul.f32 %v373, %v373
    %v445 = vmul.f32 %v374, %v374
    %v446 = vmul.f32 %v375, %v375
    %v447 = vmul.f32 %v376, %v376
    %v448 = vmul.f32 %v377, %v377
    %v449 = vmul.f32 %v378, %v378
    %v450 = vmul.f32 %v379, %v379
    %v451 = vmul.f32 %v380, %v380
    %v452 = vmul.f32 %v381, %v381
    %v453 = vmul.f32 %v382, %v382
    %v454 = vmul.f32 %v383, %v383
    %v455 = vmul.f32 %v384, %v384
    %v456 = vmul.f32 %v385, %v385
    %v457 = vsel %vm350, %v441, 0.0
    %v458 = vsel %vm350, %v442, 0.0
    %v459 = vadd.f32 %v457, %v458
    %v460 = vsel %vm350, %v443, 0.0
    %v461 = vadd.f32 %v459, %v460
    %v462 = vsel %vm350, %v444, 0.0
    %v463 = vadd.f32 %v461, %v462
    %v464 = vsel %vm350, %v445, 0.0
    %v465 = vadd.f32 %v463, %v464
    %v466 = vsel %vm350, %v446, 0.0
    %v467 = vadd.f32 %v465, %v466
    %v468 = vsel %vm350, %v447, 0.0
    %v469 = vadd.f32 %v467, %v468
    %v470 = vsel %vm350, %v448, 0.0
    %v471 = vadd.f32 %v469, %v470
    %v472 = vsel %vm350, %v449, 0.0
    %v473 = vadd.f32 %v471, %v472
    %v474 = vsel %vm350, %v450, 0.0
    %v475 = vadd.f32 %v473, %v474
    %v476 = vsel %vm350, %v451, 0.0
    %v477 = vadd.f32 %v475, %v476
    %v478 = vsel %vm350, %v452, 0.0
    %v479 = vadd.f32 %v477, %v478
    %v480 = vsel %vm350, %v453, 0.0
    %v481 = vadd.f32 %v479, %v480
    %v482 = vsel %vm350, %v454, 0.0
    %v483 = vadd.f32 %v481, %v482
    %v484 = vsel %vm350, %v455, 0.0
    %v485 = vadd.f32 %v483, %v484
    %v486 = vsel %vm350, %v456, 0.0
    %v487 = vadd.f32 %v485, %v486
    %v488 = vrot.slane %v487, 4
    %v489 = vadd.f32 %v487, %v488
    %v490 = vrot.slane %v489, 2
    %v491 = vadd.f32 %v489, %v490
    %v492 = vrot.slane %v491, 1
    %v493 = vadd.f32 %v491, %v492
    %494 = vst.msk [vmem:[%s6] sm:$0x1] %vm439, %v493
  $region25: #{res_bottleneck_block.7} parent=0 // pred_fallthru
    _
  // Predicated region
  $region26: #{res_bottleneck_block.7} parent=0 // pred_check
    _
  $region27: #{res_bottleneck_block.7} parent=0 // pred_check_branch
    %496 = sbr.rel (0) target = $region29
  $region28: #{res_bottleneck_block.7} parent=0 // pred_region
    _
  $region29: #{res_bottleneck_block.7} parent=0 // pred_fallthru
    _
  // Predicated region
  $region30: #{res_bottleneck_block.7} parent=0 // pred_check
    _
  $region31: #{res_bottleneck_block.7} parent=0 // pred_check_branch
    %498 = sbr.rel (0) target = $region33
  $region32: #{res_bottleneck_block.7} parent=0 // pred_region
    _
  $region33: #{res_bottleneck_block.7} parent=0 // pred_fallthru
    _
  // Predicated region
  $region34: #{res_bottleneck_block.7} parent=0 // pred_check
    _
  $region35: #{res_bottleneck_block.7} parent=0 // pred_check_branch
    %500 = sbr.rel (0) target = $region37
  $region36: #{res_bottleneck_block.7} parent=0 // pred_region
    _
  $region37: #{res_bottleneck_block.7} parent=0 // pred_fallthru
    _
  // Predicated region
  $region38: #{res_bottleneck_block.7} parent=0 // pred_check
    _
  $region39: #{res_bottleneck_block.7} parent=0 // pred_check_branch
    %502 = sbr.rel (0) target = $region41
  $region40: #{res_bottleneck_block.7} parent=0 // pred_region
    _
  $region41: #{res_bottleneck_block.7} parent=0 // pred_fallthru
    _
  // Predicated region
  $region42: #{res_bottleneck_block.7} parent=0 // pred_check
    _
  $region43: #{res_bottleneck_block.7} parent=0 // pred_check_branch
    %504 = sbr.rel (0) target = $region45
  $region44: #{res_bottleneck_block.7} parent=0 // pred_region
    _
  $region45: #{res_bottleneck_block.7} parent=0 // pred_fallthru
    _
  // Predicated region
  $region46: #{res_bottleneck_block.7} parent=0 // pred_check
    _
  $region47: #{res_bottleneck_block.7} parent=0 // pred_check_branch
    %506 = sbr.rel (0) target = $region49
  $region48: #{res_bottleneck_block.7} parent=0 // pred_region
    _
  $region49: #{res_bottleneck_block.7} parent=0 // pred_fallthru
    _

// kernel: res_bottleneck_block.8
$region0: #{res_bottleneck_block.8}
  #allocation0 [shape = 'u32[]', space=smem, size = 0x4, offset = 0x4, fixed_abs, tag = 'smem constant byte address 0x4 - core index']
  #allocation1 [shape = 'u32[144,128]{1,0:T(1,128)}', space=vmem, size = 0x12000, scoped, tag = 'internal scratch']
  #allocation2 [shape = 'f32[128,8]{1,0:T(8,128)}', space=vmem, size = 0x10000, scoped, tag = 'scratch operand']
  %s0 = inlined_call_operand.vmem [shape: f32[128,4], index: 0, kind: input, shape index: {}]
  %s1 = inlined_call_operand.vmem [shape: f32[4,8], index: 1, kind: input, shape index: {}]
  %s2 = inlined_call_operand.vmem [shape: f32[128,8], index: 2, kind: output, shape index: {0}]
  %s3 = inlined_call_operand.vmem [shape: f32[1,1,8], index: 3, kind: output, shape index: {1}]
  %s4 = inlined_call_operand.vmem [shape: f32[1,1,8], index: 4, kind: output, shape index: {2}]
  %5 = xla_tuple %s2, %s3, %s4
  %s6 = sld [smem:[#allocation0]]
  $region42: #{res_bottleneck_block.8} parent=0
    _
  %s8 = ssub.s32 1, %s6
  %s9 = scalar_select 0, %s8, %s6
  // Predicated region
  $region2: #{res_bottleneck_block.8} parent=0 // pred_check
    _
  $region3: #{res_bottleneck_block.8} parent=0 // pred_check_branch
    %11 = sbr.rel (0) target = $region5
  $region4: #{res_bottleneck_block.8} parent=0 // pred_region
    _
  $region5: #{res_bottleneck_block.8} parent=0 // pred_fallthru
    _
  // Predicated region
  $region6: #{res_bottleneck_block.8} parent=0 // pred_check
    _
  $region7: #{res_bottleneck_block.8} parent=0 // pred_check_branch
    %13 = sbr.rel (0) target = $region9
  $region8: #{res_bottleneck_block.8} parent=0 // pred_region
    _
  $region9: #{res_bottleneck_block.8} parent=0 // pred_fallthru
    _
  %p14 = scmp.eq.s32.totalorder 0, 0
  // Predicated region
  $region10: #{res_bottleneck_block.8} parent=0 // pred_check
    %p15 = pneg %p14
  $region11: #{res_bottleneck_block.8} parent=0 // pred_check_branch
    %17 = sbr.rel (%p15) target = $region13
  $region12: #{res_bottleneck_block.8} parent=0 // pred_region
    %vm18 = vcmask 64512
    %19 = vst.msk [vmem:[#allocation2] sm:$0xff] %vm18, 0.0
    %20 = vst.msk [vmem:[#allocation2 + $0x8] sm:$0xff] %vm18, 0.0
    %21 = vst.msk [vmem:[#allocation2 + $0x10] sm:$0xff] %vm18, 0.0
    %22 = vst.msk [vmem:[#allocation2 + $0x18] sm:$0xff] %vm18, 0.0
    %23 = vst.msk [vmem:[#allocation2 + $0x20] sm:$0xff] %vm18, 0.0
    %24 = vst.msk [vmem:[#allocation2 + $0x28] sm:$0xff] %vm18, 0.0
    %25 = vst.msk [vmem:[#allocation2 + $0x30] sm:$0xff] %vm18, 0.0
    %26 = vst.msk [vmem:[#allocation2 + $0x38] sm:$0xff] %vm18, 0.0
    %27 = vst.msk [vmem:[#allocation2 + $0x40] sm:$0xff] %vm18, 0.0
    %28 = vst.msk [vmem:[#allocation2 + $0x48] sm:$0xff] %vm18, 0.0
    %29 = vst.msk [vmem:[#allocation2 + $0x50] sm:$0xff] %vm18, 0.0
    %30 = vst.msk [vmem:[#allocation2 + $0x58] sm:$0xff] %vm18, 0.0
    %31 = vst.msk [vmem:[#allocation2 + $0x60] sm:$0xff] %vm18, 0.0
    %32 = vst.msk [vmem:[#allocation2 + $0x68] sm:$0xff] %vm18, 0.0
    %33 = vst.msk [vmem:[#allocation2 + $0x70] sm:$0xff] %vm18, 0.0
    %34 = vst.msk [vmem:[#allocation2 + $0x78] sm:$0xff] %vm18, 0.0
  $region13: #{res_bottleneck_block.8} parent=0 // pred_fallthru
    _
  %v35 = vld [vmem:[%s0] sm:$0xff]
  %v36 = vld [vmem:[%s0 + $0x8] sm:$0xff]
  %v37 = vld [vmem:[%s0 + $0x10] sm:$0xff]
  %v38 = vld [vmem:[%s0 + $0x18] sm:$0xff]
  %v39 = vld [vmem:[%s0 + $0x20] sm:$0xff]
  %v40 = vld [vmem:[%s0 + $0x28] sm:$0xff]
  %v41 = vld [vmem:[%s0 + $0x30] sm:$0xff]
  %v42 = vld [vmem:[%s0 + $0x38] sm:$0xff]
  %v43 = vld [vmem:[%s0 + $0x40] sm:$0xff]
  %v44 = vld [vmem:[%s0 + $0x48] sm:$0xff]
  %v45 = vld [vmem:[%s0 + $0x50] sm:$0xff]
  %v46 = vld [vmem:[%s0 + $0x58] sm:$0xff]
  %v47 = vld [vmem:[%s0 + $0x60] sm:$0xff]
  %v48 = vld [vmem:[%s0 + $0x68] sm:$0xff]
  %v49 = vld [vmem:[%s0 + $0x70] sm:$0xff]
  %v50 = vld [vmem:[%s0 + $0x78] sm:$0xff]
  %v51 = vld [vmem:[#allocation2] sm:$0xff]
  %v52 = vld [vmem:[#allocation2 + $0x8] sm:$0xff]
  %v53 = vld [vmem:[#allocation2 + $0x10] sm:$0xff]
  %v54 = vld [vmem:[#allocation2 + $0x18] sm:$0xff]
  %v55 = vld [vmem:[#allocation2 + $0x20] sm:$0xff]
  %v56 = vld [vmem:[#allocation2 + $0x28] sm:$0xff]
  %v57 = vld [vmem:[#allocation2 + $0x30] sm:$0xff]
  %v58 = vld [vmem:[#allocation2 + $0x38] sm:$0xff]
  %v59 = vld [vmem:[#allocation2 + $0x40] sm:$0xff]
  %v60 = vld [vmem:[#allocation2 + $0x48] sm:$0xff]
  %v61 = vld [vmem:[#allocation2 + $0x50] sm:$0xff]
  %v62 = vld [vmem:[#allocation2 + $0x58] sm:$0xff]
  %v63 = vld [vmem:[#allocation2 + $0x60] sm:$0xff]
  %v64 = vld [vmem:[#allocation2 + $0x68] sm:$0xff]
  %v65 = vld [vmem:[#allocation2 + $0x70] sm:$0xff]
  %v66 = vld [vmem:[#allocation2 + $0x78] sm:$0xff]
  %v67 = vld [vmem:[%s1] sm:$0xf]
  %vm68 = vcmask 31744
  %v70 = vsel %vm68, %v35, 0
  %v73 = vsel %vm68, %v36, 0
  %v76 = vsel %vm68, %v37, 0
  %v79 = vsel %vm68, %v38, 0
  %v82 = vsel %vm68, %v39, 0
  %v85 = vsel %vm68, %v40, 0
  %v88 = vsel %vm68, %v41, 0
  %v91 = vsel %vm68, %v42, 0
  %v94 = vsel %vm68, %v43, 0
  %v97 = vsel %vm68, %v44, 0
  %v100 = vsel %vm68, %v45, 0
  %v103 = vsel %vm68, %v46, 0
  %v106 = vsel %vm68, %v47, 0
  %v109 = vsel %vm68, %v48, 0
  %v112 = vsel %vm68, %v49, 0
  %v115 = vsel %vm68, %v50, 0
  %vm117 = vcmask 1043456
  %v119 = vsel %vm117, %v67, 0
  %121 = vmatprep.subr.mxu0 0.0
  %122 = vmatpush1.msra.mxu0 %v119
  %123 = vmatprep.subr.mxu0 0.0
  %124 = vmatpush1.msra.mxu0 0.0
  %125 = vmatprep.subr.mxu0 0.0
  %126 = vmatpush1.msra.mxu0 0.0
  %127 = vmatprep.subr.mxu0 0.0
  %128 = vmatpush1.msra.mxu0 0.0
  %129 = vmatprep.subr.mxu0 0.0
  %130 = vmatpush1.msra.mxu0 0.0
  %131 = vmatprep.subr.mxu0 0.0
  %132 = vmatpush1.msra.mxu0 0.0
  %133 = vmatprep.subr.mxu0 0.0
  %134 = vmatpush1.msra.mxu0 0.0
  %135 = vmatprep.subr.mxu0 0.0
  %136 = vmatpush1.msra.mxu0 0.0
  %137 = vmatprep.subr.mxu0 0.0
  %138 = vmatpush1.msra.mxu0 0.0
  %139 = vmatprep.subr.mxu0 0.0
  %140 = vmatpush1.msra.mxu0 0.0
  %141 = vmatprep.subr.mxu0 0.0
  %142 = vmatpush1.msra.mxu0 0.0
  %143 = vmatprep.subr.mxu0 0.0
  %144 = vmatpush1.msra.mxu0 0.0
  %145 = vmatprep.subr.mxu0 0.0
  %146 = vmatpush1.msra.mxu0 0.0
  %147 = vmatprep.subr.mxu0 0.0
  %148 = vmatpush1.msra.mxu0 0.0
  %149 = vmatprep.subr.mxu0 0.0
  %150 = vmatpush1.msra.mxu0 0.0
  %151 = vmatprep.subr.mxu0 0.0
  %152 = vmatpush1.msra.mxu0 0.0
  %153 = vmatprep.subr.mxu0 0.0
  %154 = vmatpush1.msra.mxu0 0.0
  %155 = vmatprep.subr.mxu0 0.0
  %156 = vmatpush1.msra.mxu0 0.0
  %157 = vmatprep.subr.mxu0 0.0
  %158 = vmatpush1.msra.mxu0 0.0
  %159 = vmatprep.subr.mxu0 0.0
  %160 = vmatpush1.msra.mxu0 0.0
  %161 = vmatprep.subr.mxu0 0.0
  %162 = vmatpush1.msra.mxu0 0.0
  %163 = vmatprep.subr.mxu0 0.0
  %164 = vmatpush1.msra.mxu0 0.0
  %165 = vmatprep.subr.mxu0 0.0
  %166 = vmatpush1.msra.mxu0 0.0
  %167 = vmatprep.subr.mxu0 0.0
  %168 = vmatpush1.msra.mxu0 0.0
  %169 = vmatprep.subr.mxu0 0.0
  %170 = vmatpush1.msra.mxu0 0.0
  %171 = vmatprep.subr.mxu0 0.0
  %172 = vmatpush1.msra.mxu0 0.0
  %173 = vmatprep.subr.mxu0 0.0
  %174 = vmatpush1.msra.mxu0 0.0
  %175 = vmatprep.subr.mxu0 0.0
  %176 = vmatpush1.msra.mxu0 0.0
  %177 = vmatprep.subr.mxu0 0.0
  %178 = vmatpush1.msra.mxu0 0.0
  %179 = vmatprep.subr.mxu0 0.0
  %180 = vmatpush1.msra.mxu0 0.0
  %181 = vmatprep.subr.mxu0 0.0
  %182 = vmatpush1.msra.mxu0 0.0
  %183 = vmatprep.subr.mxu0 0.0
  %184 = vmatpush1.msra.mxu0 0.0
  %185 = vmatprep.mubr.f32.mxu0 0.0
  %186 = vmatmul.mubr.f32.gmra.mrb[0].mxu0 %v70
  %v187 = vpop.f32.mrb[0].mxu0
  %v188 = vadd.f32 0.0, %v187
  %v189 = vpop.f32.mrb[0].mxu0
  %190 = vmatprep.mubr.f32.mxu0 0.0
  %191 = vmatmul.mubr.f32.gmra.mrb[0].mxu0 %v73
  %v192 = vpop.f32.mrb[0].mxu0
  %v193 = vadd.f32 0.0, %v192
  %v194 = vpop.f32.mrb[0].mxu0
  %195 = vmatprep.mubr.f32.mxu0 0.0
  %196 = vmatmul.mubr.f32.gmra.mrb[0].mxu0 %v76
  %v197 = vpop.f32.mrb[0].mxu0
  %v198 = vadd.f32 0.0, %v197
  %v199 = vpop.f32.mrb[0].mxu0
  %200 = vmatprep.mubr.f32.mxu0 0.0
  %201 = vmatmul.mubr.f32.gmra.mrb[0].mxu0 %v79
  %v202 = vpop.f32.mrb[0].mxu0
  %v203 = vadd.f32 0.0, %v202
  %v204 = vpop.f32.mrb[0].mxu0
  %205 = vmatprep.mubr.f32.mxu0 0.0
  %206 = vmatmul.mubr.f32.gmra.mrb[0].mxu0 %v82
  %v207 = vpop.f32.mrb[0].mxu0
  %v208 = vadd.f32 0.0, %v207
  %v209 = vpop.f32.mrb[0].mxu0
  %210 = vmatprep.mubr.f32.mxu0 0.0
  %211 = vmatmul.mubr.f32.gmra.mrb[0].mxu0 %v85
  %v212 = vpop.f32.mrb[0].mxu0
  %v213 = vadd.f32 0.0, %v212
  %v214 = vpop.f32.mrb[0].mxu0
  %215 = vmatprep.mubr.f32.mxu0 0.0
  %216 = vmatmul.mubr.f32.gmra.mrb[0].mxu0 %v88
  %v217 = vpop.f32.mrb[0].mxu0
  %v218 = vadd.f32 0.0, %v217
  %v219 = vpop.f32.mrb[0].mxu0
  %220 = vmatprep.mubr.f32.mxu0 0.0
  %221 = vmatmul.mubr.f32.gmra.mrb[0].mxu0 %v91
  %v222 = vpop.f32.mrb[0].mxu0
  %v223 = vadd.f32 0.0, %v222
  %v224 = vpop.f32.mrb[0].mxu0
  %225 = vmatprep.mubr.f32.mxu0 0.0
  %226 = vmatmul.mubr.f32.gmra.mrb[0].mxu0 %v94
  %v227 = vpop.f32.mrb[0].mxu0
  %v228 = vadd.f32 0.0, %v227
  %v229 = vpop.f32.mrb[0].mxu0
  %230 = vmatprep.mubr.f32.mxu0 0.0
  %231 = vmatmul.mubr.f32.gmra.mrb[0].mxu0 %v97
  %v232 = vpop.f32.mrb[0].mxu0
  %v233 = vadd.f32 0.0, %v232
  %v234 = vpop.f32.mrb[0].mxu0
  %235 = vmatprep.mubr.f32.mxu0 0.0
  %236 = vmatmul.mubr.f32.gmra.mrb[0].mxu0 %v100
  %v237 = vpop.f32.mrb[0].mxu0
  %v238 = vadd.f32 0.0, %v237
  %v239 = vpop.f32.mrb[0].mxu0
  %240 = vmatprep.mubr.f32.mxu0 0.0
  %241 = vmatmul.mubr.f32.gmra.mrb[0].mxu0 %v103
  %v242 = vpop.f32.mrb[0].mxu0
  %v243 = vadd.f32 0.0, %v242
  %v244 = vpop.f32.mrb[0].mxu0
  %245 = vmatprep.mubr.f32.mxu0 0.0
  %246 = vmatmul.mubr.f32.gmra.mrb[0].mxu0 %v106
  %v247 = vpop.f32.mrb[0].mxu0
  %v248 = vadd.f32 0.0, %v247
  %v249 = vpop.f32.mrb[0].mxu0
  %250 = vmatprep.mubr.f32.mxu0 0.0
  %251 = vmatmul.mubr.f32.gmra.mrb[0].mxu0 %v109
  %v252 = vpop.f32.mrb[0].mxu0
  %v253 = vadd.f32 0.0, %v252
  %v254 = vpop.f32.mrb[0].mxu0
  %255 = vmatprep.mubr.f32.mxu0 0.0
  %256 = vmatmul.mubr.f32.gmra.mrb[0].mxu0 %v112
  %v257 = vpop.f32.mrb[0].mxu0
  %v258 = vadd.f32 0.0, %v257
  %v259 = vpop.f32.mrb[0].mxu0
  %260 = vmatprep.mubr.f32.mxu0 0.0
  %261 = vmatmul.mubr.f32.gmra.mrb[0].mxu0 %v115
  %v262 = vpop.f32.mrb[0].mxu0
  %v263 = vadd.f32 0.0, %v262
  %v264 = vpop.f32.mrb[0].mxu0
  %265 = vdwg.mxu0
  %v266 = vadd.f32 %v51, %v188
  %v267 = vadd.f32 %v52, %v193
  %v268 = vadd.f32 %v53, %v198
  %v269 = vadd.f32 %v54, %v203
  %v270 = vadd.f32 %v55, %v208
  %v271 = vadd.f32 %v56, %v213
  %v272 = vadd.f32 %v57, %v218
  %v273 = vadd.f32 %v58, %v223
  %v274 = vadd.f32 %v59, %v228
  %v275 = vadd.f32 %v60, %v233
  %v276 = vadd.f32 %v61, %v238
  %v277 = vadd.f32 %v62, %v243
  %v278 = vadd.f32 %v63, %v248
  %v279 = vadd.f32 %v64, %v253
  %v280 = vadd.f32 %v65, %v258
  %v281 = vadd.f32 %v66, %v263
  %vm282 = vcmask 64512
  %283 = vst.msk [vmem:[#allocation2] sm:$0xff] %vm282, %v266
  %284 = vst.msk [vmem:[#allocation2 + $0x8] sm:$0xff] %vm282, %v267
  %285 = vst.msk [vmem:[#allocation2 + $0x10] sm:$0xff] %vm282, %v268
  %286 = vst.msk [vmem:[#allocation2 + $0x18] sm:$0xff] %vm282, %v269
  %287 = vst.msk [vmem:[#allocation2 + $0x20] sm:$0xff] %vm282, %v270
  %288 = vst.msk [vmem:[#allocation2 + $0x28] sm:$0xff] %vm282, %v271
  %289 = vst.msk [vmem:[#allocation2 + $0x30] sm:$0xff] %vm282, %v272
  %290 = vst.msk [vmem:[#allocation2 + $0x38] sm:$0xff] %vm282, %v273
  %291 = vst.msk [vmem:[#allocation2 + $0x40] sm:$0xff] %vm282, %v274
  %292 = vst.msk [vmem:[#allocation2 + $0x48] sm:$0xff] %vm282, %v275
  %293 = vst.msk [vmem:[#allocation2 + $0x50] sm:$0xff] %vm282, %v276
  %294 = vst.msk [vmem:[#allocation2 + $0x58] sm:$0xff] %vm282, %v277
  %295 = vst.msk [vmem:[#allocation2 + $0x60] sm:$0xff] %vm282, %v278
  %296 = vst.msk [vmem:[#allocation2 + $0x68] sm:$0xff] %vm282, %v279
  %297 = vst.msk [vmem:[#allocation2 + $0x70] sm:$0xff] %vm282, %v280
  %298 = vst.msk [vmem:[#allocation2 + $0x78] sm:$0xff] %vm282, %v281
  // Predicated region
  $region14: #{res_bottleneck_block.8} parent=0 // pred_check
    %p299 = pneg %p14
  $region15: #{res_bottleneck_block.8} parent=0 // pred_check_branch
    %301 = sbr.rel (%p299) target = $region17
  $region16: #{res_bottleneck_block.8} parent=0 // pred_region
    %v302 = vld [vmem:[#allocation2] sm:$0xff]
    %v303 = vld [vmem:[#allocation2 + $0x8] sm:$0xff]
    %v304 = vld [vmem:[#allocation2 + $0x10] sm:$0xff]
    %v305 = vld [vmem:[#allocation2 + $0x18] sm:$0xff]
    %v306 = vld [vmem:[#allocation2 + $0x20] sm:$0xff]
    %v307 = vld [vmem:[#allocation2 + $0x28] sm:$0xff]
    %v308 = vld [vmem:[#allocation2 + $0x30] sm:$0xff]
    %v309 = vld [vmem:[#allocation2 + $0x38] sm:$0xff]
    %v310 = vld [vmem:[#allocation2 + $0x40] sm:$0xff]
    %v311 = vld [vmem:[#allocation2 + $0x48] sm:$0xff]
    %v312 = vld [vmem:[#allocation2 + $0x50] sm:$0xff]
    %v313 = vld [vmem:[#allocation2 + $0x58] sm:$0xff]
    %v314 = vld [vmem:[#allocation2 + $0x60] sm:$0xff]
    %v315 = vld [vmem:[#allocation2 + $0x68] sm:$0xff]
    %v316 = vld [vmem:[#allocation2 + $0x70] sm:$0xff]
    %v317 = vld [vmem:[#allocation2 + $0x78] sm:$0xff]
    %318 = vst.msk [vmem:[%s2] sm:$0xff] %vm282, %v302
    %319 = vst.msk [vmem:[%s2 + $0x8] sm:$0xff] %vm282, %v303
    %320 = vst.msk [vmem:[%s2 + $0x10] sm:$0xff] %vm282, %v304
    %321 = vst.msk [vmem:[%s2 + $0x18] sm:$0xff] %vm282, %v305
    %322 = vst.msk [vmem:[%s2 + $0x20] sm:$0xff] %vm282, %v306
    %323 = vst.msk [vmem:[%s2 + $0x28] sm:$0xff] %vm282, %v307
    %324 = vst.msk [vmem:[%s2 + $0x30] sm:$0xff] %vm282, %v308
    %325 = vst.msk [vmem:[%s2 + $0x38] sm:$0xff] %vm282, %v309
    %326 = vst.msk [vmem:[%s2 + $0x40] sm:$0xff] %vm282, %v310
    %327 = vst.msk [vmem:[%s2 + $0x48] sm:$0xff] %vm282, %v311
    %328 = vst.msk [vmem:[%s2 + $0x50] sm:$0xff] %vm282, %v312
    %329 = vst.msk [vmem:[%s2 + $0x58] sm:$0xff] %vm282, %v313
    %330 = vst.msk [vmem:[%s2 + $0x60] sm:$0xff] %vm282, %v314
    %331 = vst.msk [vmem:[%s2 + $0x68] sm:$0xff] %vm282, %v315
    %332 = vst.msk [vmem:[%s2 + $0x70] sm:$0xff] %vm282, %v316
    %333 = vst.msk [vmem:[%s2 + $0x78] sm:$0xff] %vm282, %v317
    %v334 = vsel %vm282, %v302, 0.0
    %v335 = vsel %vm282, %v303, 0.0
    %v336 = vadd.f32 %v334, %v335
    %v337 = vsel %vm282, %v304, 0.0
    %v338 = vadd.f32 %v336, %v337
    %v339 = vsel %vm282, %v305, 0.0
    %v340 = vadd.f32 %v338, %v339
    %v341 = vsel %vm282, %v306, 0.0
    %v342 = vadd.f32 %v340, %v341
    %v343 = vsel %vm282, %v307, 0.0
    %v344 = vadd.f32 %v342, %v343
    %v345 = vsel %vm282, %v308, 0.0
    %v346 = vadd.f32 %v344, %v345
    %v347 = vsel %vm282, %v309, 0.0
    %v348 = vadd.f32 %v346, %v347
    %v349 = vsel %vm282, %v310, 0.0
    %v350 = vadd.f32 %v348, %v349
    %v351 = vsel %vm282, %v311, 0.0
    %v352 = vadd.f32 %v350, %v351
    %v353 = vsel %vm282, %v312, 0.0
    %v354 = vadd.f32 %v352, %v353
    %v355 = vsel %vm282, %v313, 0.0
    %v356 = vadd.f32 %v354, %v355
    %v357 = vsel %vm282, %v314, 0.0
    %v358 = vadd.f32 %v356, %v357
    %v359 = vsel %vm282, %v315, 0.0
    %v360 = vadd.f32 %v358, %v359
    %v361 = vsel %vm282, %v316, 0.0
    %v362 = vadd.f32 %v360, %v361
    %v363 = vsel %vm282, %v317, 0.0
    %v364 = vadd.f32 %v362, %v363
    %v365 = vrot.slane %v364, 4
    %v366 = vadd.f32 %v364, %v365
    %v367 = vrot.slane %v366, 2
    %v368 = vadd.f32 %v366, %v367
    %v369 = vrot.slane %v368, 1
    %v370 = vadd.f32 %v368, %v369
    %vm371 = vcmask 57344
    %372 = vst.msk [vmem:[%s3] sm:$0x1] %vm371, %v370
    %v373 = vmul.f32 %v302, %v302
    %v374 = vmul.f32 %v303, %v303
    %v375 = vmul.f32 %v304, %v304
    %v376 = vmul.f32 %v305, %v305
    %v377 = vmul.f32 %v306, %v306
    %v378 = vmul.f32 %v307, %v307
    %v379 = vmul.f32 %v308, %v308
    %v380 = vmul.f32 %v309, %v309
    %v381 = vmul.f32 %v310, %v310
    %v382 = vmul.f32 %v311, %v311
    %v383 = vmul.f32 %v312, %v312
    %v384 = vmul.f32 %v313, %v313
    %v385 = vmul.f32 %v314, %v314
    %v386 = vmul.f32 %v315, %v315
    %v387 = vmul.f32 %v316, %v316
    %v388 = vmul.f32 %v317, %v317
    %v389 = vsel %vm282, %v373, 0.0
    %v390 = vsel %vm282, %v374, 0.0
    %v391 = vadd.f32 %v389, %v390
    %v392 = vsel %vm282, %v375, 0.0
    %v393 = vadd.f32 %v391, %v392
    %v394 = vsel %vm282, %v376, 0.0
    %v395 = vadd.f32 %v393, %v394
    %v396 = vsel %vm282, %v377, 0.0
    %v397 = vadd.f32 %v395, %v396
    %v398 = vsel %vm282, %v378, 0.0
    %v399 = vadd.f32 %v397, %v398
    %v400 = vsel %vm282, %v379, 0.0
    %v401 = vadd.f32 %v399, %v400
    %v402 = vsel %vm282, %v380, 0.0
    %v403 = vadd.f32 %v401, %v402
    %v404 = vsel %vm282, %v381, 0.0
    %v405 = vadd.f32 %v403, %v404
    %v406 = vsel %vm282, %v382, 0.0
    %v407 = vadd.f32 %v405, %v406
    %v408 = vsel %vm282, %v383, 0.0
    %v409 = vadd.f32 %v407, %v408
    %v410 = vsel %vm282, %v384, 0.0
    %v411 = vadd.f32 %v409, %v410
    %v412 = vsel %vm282, %v385, 0.0
    %v413 = vadd.f32 %v411, %v412
    %v414 = vsel %vm282, %v386, 0.0
    %v415 = vadd.f32 %v413, %v414
    %v416 = vsel %vm282, %v387, 0.0
    %v417 = vadd.f32 %v415, %v416
    %v418 = vsel %vm282, %v388, 0.0
    %v419 = vadd.f32 %v417, %v418
    %v420 = vrot.slane %v419, 4
    %v421 = vadd.f32 %v419, %v420
    %v422 = vrot.slane %v421, 2
    %v423 = vadd.f32 %v421, %v422
    %v424 = vrot.slane %v423, 1
    %v425 = vadd.f32 %v423, %v424
    %426 = vst.msk [vmem:[%s4] sm:$0x1] %vm371, %v425
  $region17: #{res_bottleneck_block.8} parent=0 // pred_fallthru
    _
  // Predicated region
  $region18: #{res_bottleneck_block.8} parent=0 // pred_check
    _
  $region19: #{res_bottleneck_block.8} parent=0 // pred_check_branch
    %428 = sbr.rel (0) target = $region21
  $region20: #{res_bottleneck_block.8} parent=0 // pred_region
    _
  $region21: #{res_bottleneck_block.8} parent=0 // pred_fallthru
    _
  // Predicated region
  $region22: #{res_bottleneck_block.8} parent=0 // pred_check
    _
  $region23: #{res_bottleneck_block.8} parent=0 // pred_check_branch
    %430 = sbr.rel (0) target = $region25
  $region24: #{res_bottleneck_block.8} parent=0 // pred_region
    _
  $region25: #{res_bottleneck_block.8} parent=0 // pred_fallthru
    _
  // Predicated region
  $region26: #{res_bottleneck_block.8} parent=0 // pred_check
    _
  $region27: #{res_bottleneck_block.8} parent=0 // pred_check_branch
    %432 = sbr.rel (0) target = $region29
  $region28: #{res_bottleneck_block.8} parent=0 // pred_region
    _
  $region29: #{res_bottleneck_block.8} parent=0 // pred_fallthru
    _
  // Predicated region
  $region30: #{res_bottleneck_block.8} parent=0 // pred_check
    _
  $region31: #{res_bottleneck_block.8} parent=0 // pred_check_branch
    %434 = sbr.rel (0) target = $region33
  $region32: #{res_bottleneck_block.8} parent=0 // pred_region
    _
  $region33: #{res_bottleneck_block.8} parent=0 // pred_fallthru
    _
  // Predicated region
  $region34: #{res_bottleneck_block.8} parent=0 // pred_check
    _
  $region35: #{res_bottleneck_block.8} parent=0 // pred_check_branch
    %436 = sbr.rel (0) target = $region37
  $region36: #{res_bottleneck_block.8} parent=0 // pred_region
    _
  $region37: #{res_bottleneck_block.8} parent=0 // pred_fallthru
    _
  // Predicated region
  $region38: #{res_bottleneck_block.8} parent=0 // pred_check
    _
  $region39: #{res_bottleneck_block.8} parent=0 // pred_check_branch
    %438 = sbr.rel (0) target = $region41
  $region40: #{res_bottleneck_block.8} parent=0 // pred_region
    _
  $region41: #{res_bottleneck_block.8} parent=0 // pred_fallthru
    _

// kernel: res_bottleneck_block.9
$region0: #{res_bottleneck_block.9}
  #allocation0 [shape = 'u32[]', space=smem, size = 0x4, offset = 0x4, fixed_abs, tag = 'smem constant byte address 0x4 - core index']
  #allocation1 [shape = 'u32[144,128]{1,0:T(1,128)}', space=vmem, size = 0x12000, scoped, tag = 'internal scratch']
  %s0 = inlined_call_operand.vmem [shape: f32[128,8], index: 0, kind: input, shape index: {}]
  %s1 = inlined_call_operand.vmem [shape: f32[128,8], index: 1, kind: input, shape index: {}]
  %s2 = inlined_call_operand.vmem [shape: f32[1,8], index: 2, kind: input, shape index: {}]
  %s3 = inlined_call_operand.vmem [shape: f32[1,8], index: 3, kind: input, shape index: {}]
  %s4 = inlined_call_operand.vmem [shape: f32[1,8], index: 4, kind: input, shape index: {}]
  %s5 = inlined_call_operand.vmem [shape: f32[1,8], index: 5, kind: input, shape index: {}]
  %s6 = inlined_call_operand.vmem [shape: f32[128,8], index: 6, kind: output, shape index: {}]
  %s7 = sld [smem:[#allocation0]]
  $region34: #{res_bottleneck_block.9} parent=0
    _
  %s9 = ssub.s32 1, %s7
  %s10 = scalar_select 0, %s9, %s7
  // Predicated region
  $region2: #{res_bottleneck_block.9} parent=0 // pred_check
    _
  $region3: #{res_bottleneck_block.9} parent=0 // pred_check_branch
    %12 = sbr.rel (0) target = $region5
  $region4: #{res_bottleneck_block.9} parent=0 // pred_region
    _
  $region5: #{res_bottleneck_block.9} parent=0 // pred_fallthru
    _
  // Predicated region
  $region6: #{res_bottleneck_block.9} parent=0 // pred_check
    _
  $region7: #{res_bottleneck_block.9} parent=0 // pred_check_branch
    %14 = sbr.rel (0) target = $region9
  $region8: #{res_bottleneck_block.9} parent=0 // pred_region
    _
  $region9: #{res_bottleneck_block.9} parent=0 // pred_fallthru
    _
  // Predicated region
  $region10: #{res_bottleneck_block.9} parent=0 // pred_check
    _
  $region11: #{res_bottleneck_block.9} parent=0 // pred_check_branch
    %16 = sbr.rel (0) target = $region13
  $region12: #{res_bottleneck_block.9} parent=0 // pred_region
    _
  $region13: #{res_bottleneck_block.9} parent=0 // pred_fallthru
    _
  // Predicated region
  $region14: #{res_bottleneck_block.9} parent=0 // pred_check
    _
  $region15: #{res_bottleneck_block.9} parent=0 // pred_check_branch
    %18 = sbr.rel (0) target = $region17
  $region16: #{res_bottleneck_block.9} parent=0 // pred_region
    _
  $region17: #{res_bottleneck_block.9} parent=0 // pred_fallthru
    _
  // Predicated region
  $region18: #{res_bottleneck_block.9} parent=0 // pred_check
    _
  $region19: #{res_bottleneck_block.9} parent=0 // pred_check_branch
    %20 = sbr.rel (0) target = $region21
  $region20: #{res_bottleneck_block.9} parent=0 // pred_region
    _
  $region21: #{res_bottleneck_block.9} parent=0 // pred_fallthru
    _
  // Predicated region
  $region22: #{res_bottleneck_block.9} parent=0 // pred_check
    _
  $region23: #{res_bottleneck_block.9} parent=0 // pred_check_branch
    %22 = sbr.rel (0) target = $region25
  $region24: #{res_bottleneck_block.9} parent=0 // pred_region
    _
  $region25: #{res_bottleneck_block.9} parent=0 // pred_fallthru
    _
  %v23 = vld [vmem:[%s0] sm:$0xff]
  %v24 = vld [vmem:[%s0 + $0x8] sm:$0xff]
  %v25 = vld [vmem:[%s0 + $0x10] sm:$0xff]
  %v26 = vld [vmem:[%s0 + $0x18] sm:$0xff]
  %v27 = vld [vmem:[%s0 + $0x20] sm:$0xff]
  %v28 = vld [vmem:[%s0 + $0x28] sm:$0xff]
  %v29 = vld [vmem:[%s0 + $0x30] sm:$0xff]
  %v30 = vld [vmem:[%s0 + $0x38] sm:$0xff]
  %v31 = vld [vmem:[%s0 + $0x40] sm:$0xff]
  %v32 = vld [vmem:[%s0 + $0x48] sm:$0xff]
  %v33 = vld [vmem:[%s0 + $0x50] sm:$0xff]
  %v34 = vld [vmem:[%s0 + $0x58] sm:$0xff]
  %v35 = vld [vmem:[%s0 + $0x60] sm:$0xff]
  %v36 = vld [vmem:[%s0 + $0x68] sm:$0xff]
  %v37 = vld [vmem:[%s0 + $0x70] sm:$0xff]
  %v38 = vld [vmem:[%s0 + $0x78] sm:$0xff]
  %v39 = vld [vmem:[%s2] sm:$0x1]
  %v41 = vlaneseq
  %v42 = vshrl.u32 %v41, 7
  %v43 = vsub.s32 0, %v42
  %v44 = vrot.slane %v39, %v43
  %v46 = vmul.f32 %v23, %v44
  %v47 = vmul.f32 %v24, %v44
  %v48 = vmul.f32 %v25, %v44
  %v49 = vmul.f32 %v26, %v44
  %v50 = vmul.f32 %v27, %v44
  %v51 = vmul.f32 %v28, %v44
  %v52 = vmul.f32 %v29, %v44
  %v53 = vmul.f32 %v30, %v44
  %v54 = vmul.f32 %v31, %v44
  %v55 = vmul.f32 %v32, %v44
  %v56 = vmul.f32 %v33, %v44
  %v57 = vmul.f32 %v34, %v44
  %v58 = vmul.f32 %v35, %v44
  %v59 = vmul.f32 %v36, %v44
  %v60 = vmul.f32 %v37, %v44
  %v61 = vmul.f32 %v38, %v44
  %v62 = vld [vmem:[%s3] sm:$0x1]
  %v64 = vlaneseq
  %v65 = vshrl.u32 %v64, 7
  %v66 = vsub.s32 0, %v65
  %v67 = vrot.slane %v62, %v66
  %v69 = vadd.f32 %v46, %v67
  %v70 = vadd.f32 %v47, %v67
  %v71 = vadd.f32 %v48, %v67
  %v72 = vadd.f32 %v49, %v67
  %v73 = vadd.f32 %v50, %v67
  %v74 = vadd.f32 %v51, %v67
  %v75 = vadd.f32 %v52, %v67
  %v76 = vadd.f32 %v53, %v67
  %v77 = vadd.f32 %v54, %v67
  %v78 = vadd.f32 %v55, %v67
  %v79 = vadd.f32 %v56, %v67
  %v80 = vadd.f32 %v57, %v67
  %v81 = vadd.f32 %v58, %v67
  %v82 = vadd.f32 %v59, %v67
  %v83 = vadd.f32 %v60, %v67
  %v84 = vadd.f32 %v61, %v67
  %v85 = vld [vmem:[%s1] sm:$0xff]
  %v86 = vld [vmem:[%s1 + $0x8] sm:$0xff]
  %v87 = vld [vmem:[%s1 + $0x10] sm:$0xff]
  %v88 = vld [vmem:[%s1 + $0x18] sm:$0xff]
  %v89 = vld [vmem:[%s1 + $0x20] sm:$0xff]
  %v90 = vld [vmem:[%s1 + $0x28] sm:$0xff]
  %v91 = vld [vmem:[%s1 + $0x30] sm:$0xff]
  %v92 = vld [vmem:[%s1 + $0x38] sm:$0xff]
  %v93 = vld [vmem:[%s1 + $0x40] sm:$0xff]
  %v94 = vld [vmem:[%s1 + $0x48] sm:$0xff]
  %v95 = vld [vmem:[%s1 + $0x50] sm:$0xff]
  %v96 = vld [vmem:[%s1 + $0x58] sm:$0xff]
  %v97 = vld [vmem:[%s1 + $0x60] sm:$0xff]
  %v98 = vld [vmem:[%s1 + $0x68] sm:$0xff]
  %v99 = vld [vmem:[%s1 + $0x70] sm:$0xff]
  %v100 = vld [vmem:[%s1 + $0x78] sm:$0xff]
  %v101 = vld [vmem:[%s4] sm:$0x1]
  %v103 = vlaneseq
  %v104 = vshrl.u32 %v103, 7
  %v105 = vsub.s32 0, %v104
  %v106 = vrot.slane %v101, %v105
  %v108 = vmul.f32 %v85, %v106
  %v109 = vmul.f32 %v86, %v106
  %v110 = vmul.f32 %v87, %v106
  %v111 = vmul.f32 %v88, %v106
  %v112 = vmul.f32 %v89, %v106
  %v113 = vmul.f32 %v90, %v106
  %v114 = vmul.f32 %v91, %v106
  %v115 = vmul.f32 %v92, %v106
  %v116 = vmul.f32 %v93, %v106
  %v117 = vmul.f32 %v94, %v106
  %v118 = vmul.f32 %v95, %v106
  %v119 = vmul.f32 %v96, %v106
  %v120 = vmul.f32 %v97, %v106
  %v121 = vmul.f32 %v98, %v106
  %v122 = vmul.f32 %v99, %v106
  %v123 = vmul.f32 %v100, %v106
  %v124 = vadd.f32 %v69, %v108
  %v125 = vadd.f32 %v70, %v109
  %v126 = vadd.f32 %v71, %v110
  %v127 = vadd.f32 %v72, %v111
  %v128 = vadd.f32 %v73, %v112
  %v129 = vadd.f32 %v74, %v113
  %v130 = vadd.f32 %v75, %v114
  %v131 = vadd.f32 %v76, %v115
  %v132 = vadd.f32 %v77, %v116
  %v133 = vadd.f32 %v78, %v117
  %v134 = vadd.f32 %v79, %v118
  %v135 = vadd.f32 %v80, %v119
  %v136 = vadd.f32 %v81, %v120
  %v137 = vadd.f32 %v82, %v121
  %v138 = vadd.f32 %v83, %v122
  %v139 = vadd.f32 %v84, %v123
  %v140 = vld [vmem:[%s5] sm:$0x1]
  %v142 = vlaneseq
  %v143 = vshrl.u32 %v142, 7
  %v144 = vsub.s32 0, %v143
  %v145 = vrot.slane %v140, %v144
  %v147 = vadd.f32 %v124, %v145
  %v148 = vadd.f32 %v125, %v145
  %v149 = vadd.f32 %v126, %v145
  %v150 = vadd.f32 %v127, %v145
  %v151 = vadd.f32 %v128, %v145
  %v152 = vadd.f32 %v129, %v145
  %v153 = vadd.f32 %v130, %v145
  %v154 = vadd.f32 %v131, %v145
  %v155 = vadd.f32 %v132, %v145
  %v156 = vadd.f32 %v133, %v145
  %v157 = vadd.f32 %v134, %v145
  %v158 = vadd.f32 %v135, %v145
  %v159 = vadd.f32 %v136, %v145
  %v160 = vadd.f32 %v137, %v145
  %v161 = vadd.f32 %v138, %v145
  %v162 = vadd.f32 %v139, %v145
  %v163 = vmax.f32 %v147, 0.0
  %v164 = vmax.f32 %v148, 0.0
  %v165 = vmax.f32 %v149, 0.0
  %v166 = vmax.f32 %v150, 0.0
  %v167 = vmax.f32 %v151, 0.0
  %v168 = vmax.f32 %v152, 0.0
  %v169 = vmax.f32 %v153, 0.0
  %v170 = vmax.f32 %v154, 0.0
  %v171 = vmax.f32 %v155, 0.0
  %v172 = vmax.f32 %v156, 0.0
  %v173 = vmax.f32 %v157, 0.0
  %v174 = vmax.f32 %v158, 0.0
  %v175 = vmax.f32 %v159, 0.0
  %v176 = vmax.f32 %v160, 0.0
  %v177 = vmax.f32 %v161, 0.0
  %v178 = vmax.f32 %v162, 0.0
  %vm179 = vcmask 64512
  %180 = vst.msk [vmem:[%s6] sm:$0xff] %vm179, %v163
  %181 = vst.msk [vmem:[%s6 + $0x8] sm:$0xff] %vm179, %v164
  %182 = vst.msk [vmem:[%s6 + $0x10] sm:$0xff] %vm179, %v165
  %183 = vst.msk [vmem:[%s6 + $0x18] sm:$0xff] %vm179, %v166
  %184 = vst.msk [vmem:[%s6 + $0x20] sm:$0xff] %vm179, %v167
  %185 = vst.msk [vmem:[%s6 + $0x28] sm:$0xff] %vm179, %v168
  %186 = vst.msk [vmem:[%s6 + $0x30] sm:$0xff] %vm179, %v169
  %187 = vst.msk [vmem:[%s6 + $0x38] sm:$0xff] %vm179, %v170
  %188 = vst.msk [vmem:[%s6 + $0x40] sm:$0xff] %vm179, %v171
  %189 = vst.msk [vmem:[%s6 + $0x48] sm:$0xff] %vm179, %v172
  %190 = vst.msk [vmem:[%s6 + $0x50] sm:$0xff] %vm179, %v173
  %191 = vst.msk [vmem:[%s6 + $0x58] sm:$0xff] %vm179, %v174
  %192 = vst.msk [vmem:[%s6 + $0x60] sm:$0xff] %vm179, %v175
  %193 = vst.msk [vmem:[%s6 + $0x68] sm:$0xff] %vm179, %v176
  %194 = vst.msk [vmem:[%s6 + $0x70] sm:$0xff] %vm179, %v177
  %195 = vst.msk [vmem:[%s6 + $0x78] sm:$0xff] %vm179, %v178
  // Predicated region
  $region26: #{res_bottleneck_block.9} parent=0 // pred_check
    _
  $region27: #{res_bottleneck_block.9} parent=0 // pred_check_branch
    %197 = sbr.rel (0) target = $region29
  $region28: #{res_bottleneck_block.9} parent=0 // pred_region
    _
  $region29: #{res_bottleneck_block.9} parent=0 // pred_fallthru
    _
  // Predicated region
  $region30: #{res_bottleneck_block.9} parent=0 // pred_check
    _
  $region31: #{res_bottleneck_block.9} parent=0 // pred_check_branch
    %199 = sbr.rel (0) target = $region33
  $region32: #{res_bottleneck_block.9} parent=0 // pred_region
    _
  $region33: #{res_bottleneck_block.9} parent=0 // pred_fallthru
    _

// kernel: res_bottleneck_block.6
$region0: #{res_bottleneck_block.6}
  #allocation0 [shape = 'u32[]', space=smem, size = 0x4, offset = 0x4, fixed_abs, tag = 'smem constant byte address 0x4 - core index']
  #allocation1 [shape = 'u32[144,128]{1,0:T(1,128)}', space=vmem, size = 0x12000, scoped, tag = 'internal scratch']
  #allocation2 [shape = 'f32[4,9,9,2]{3,2,1,0:T(8,128)}', space=vmem, size = 0x48000, scoped, tag = 'scratch operand']
  %s0 = inlined_call_operand.vmem [shape: f32[2,8,8,2], index: 0, kind: input, shape index: {}]
  %s1 = inlined_call_operand.vmem [shape: f32[2,8,8,2], index: 1, kind: input, shape index: {}]
  %s2 = inlined_call_operand.vmem [shape: f32[2,8,8,2], index: 2, kind: input, shape index: {}]
  %s3 = inlined_call_operand.vmem [shape: f32[2,8,8,2], index: 3, kind: input, shape index: {}]
  %s4 = inlined_call_operand.vmem [shape: f32[9,2,2], index: 4, kind: input, shape index: {}]
  %s5 = inlined_call_operand.vmem [shape: f32[1,2], index: 5, kind: input, shape index: {}]
  %s6 = inlined_call_operand.vmem [shape: f32[1,2], index: 6, kind: input, shape index: {}]
  %s7 = inlined_call_operand.vmem [shape: f32[2,64,2], index: 7, kind: output, shape index: {0}]
  %s8 = inlined_call_operand.vmem [shape: f32[2,1,2], index: 8, kind: output, shape index: {1}]
  %s9 = inlined_call_operand.vmem [shape: f32[2,1,2], index: 9, kind: output, shape index: {2}]
  %10 = xla_tuple %s7, %s8, %s9
  %s11 = sld [smem:[#allocation0]]
  $region77: #{res_bottleneck_block.6} parent=0
    _
  %s13 = ssub.s32 1, %s11
  %s14 = scalar_select 0, %s13, %s11
  loop: start=0, step=1, limit=4
  $region2: #{res_bottleneck_block.6} parent=0 // loop_pre_header
    _
  $region3: #{res_bottleneck_block.6} parent=0 // loop_header
    %s16 = sphi 0, %s20
    %p17 = scmp.ge.s32.totalorder %s16, 4
    %s26 = sphi 0, %s28
    %s29 = sphi 0, %s26
    %s30 = sphi 0, %s29
    %s46 = sphi 0, %s30
    %s52 = sphi 0, %s54
    %s55 = sphi 0, %s52
    %s56 = sphi 0, %s55
    %s72 = sphi 0, %s56
    %s78 = sphi 0, %s80
    %s81 = sphi 0, %s78
    %s82 = sphi 0, %s81
    %s98 = sphi 0, %s82
    %s104 = sphi 0, %s106
    %s107 = sphi 0, %s104
    %s108 = sphi 0, %s107
    %s124 = sphi 0, %s108
    %s128 = sphi 0, %s128
    %s130 = sphi 0, %s128
    %s131 = sphi 0, %s130
    %s145 = sphi 0, %s131
    %s149 = sphi 0, %s149
    %s151 = sphi 0, %s149
    %s152 = sphi 0, %s151
    %s166 = sphi 0, %s152
    %s170 = sphi 0, %s170
    %s172 = sphi 0, %s170
    %s173 = sphi 0, %s172
    %s187 = sphi 0, %s173
    %s193 = sphi 0, %s195
    %s196 = sphi 0, %s193
    %s197 = sphi 0, %s196
    %s213 = sphi 0, %s197
    %s219 = sphi 0, %s221
    %s222 = sphi 0, %s219
    %s223 = sphi 0, %s222
    %s239 = sphi 0, %s223
    %s245 = sphi 0, %s247
    %s248 = sphi 0, %s245
    %s249 = sphi 0, %s248
    %s265 = sphi 0, %s249
  $region4: #{res_bottleneck_block.6} parent=0 // loop_header_branch
    %19 = sbr.rel (%p17) target = $region8
  $region5: #{res_bottleneck_block.6} parent=0 // loop_body
    %s21 = ssub.s32 %s16, 1
    %s22 = ssub.s32 %s16, 2
    %s23 = sadd.s32 %s16, 1
    %s24 = ssub.s32 %s16, %s23
    %p25 = scmp.eq.s32.totalorder %s24, 0
    %s27 = sadd.s32 %s26, 1
    %s28 = scalar_select %p25, %s26, %s27
    %p31 = pneg %p25
    %p32 = scmp.eq.s32.totalorder %s16, 1
    %p33 = por %p31, %p32
    %p34 = scmp.ne.s32.totalorder %s26, %s29
    %p35 = scmp.eq.s32.totalorder %s16, 0
    %p36 = por %p34, %p35
    %p37 = scmp.ne.s32.totalorder %s26, %s29
    %p38 = scmp.eq.s32.totalorder %s21, 1
    %p39 = por %p37, %p38
    %p40 = scmp.ne.s32.totalorder %s29, %s30
    %p41 = scmp.eq.s32.totalorder %s21, 0
    %p42 = por %p40, %p41
    %p43 = scmp.ne.s32.totalorder %s29, %s30
    %p44 = scmp.eq.s32.totalorder %s22, 1
    %p45 = por %p43, %p44
    %p47 = scmp.ne.s32.totalorder %s30, %s46
    %p48 = scmp.eq.s32.totalorder %s22, 0
    %p49 = por %p47, %p48
    %s50 = ssub.s32 %s16, %s23
    %p51 = scmp.eq.s32.totalorder %s50, 0
    %s53 = sadd.s32 %s52, 1
    %s54 = scalar_select %p51, %s52, %s53
    %p57 = pneg %p51
    %p58 = scmp.eq.s32.totalorder %s16, 1
    %p59 = por %p57, %p58
    %p60 = scmp.ne.s32.totalorder %s52, %s55
    %p61 = scmp.eq.s32.totalorder %s16, 0
    %p62 = por %p60, %p61
    %p63 = scmp.ne.s32.totalorder %s52, %s55
    %p64 = scmp.eq.s32.totalorder %s21, 1
    %p65 = por %p63, %p64
    %p66 = scmp.ne.s32.totalorder %s55, %s56
    %p67 = scmp.eq.s32.totalorder %s21, 0
    %p68 = por %p66, %p67
    %p69 = scmp.ne.s32.totalorder %s55, %s56
    %p70 = scmp.eq.s32.totalorder %s22, 1
    %p71 = por %p69, %p70
    %p73 = scmp.ne.s32.totalorder %s56, %s72
    %p74 = scmp.eq.s32.totalorder %s22, 0
    %p75 = por %p73, %p74
    %s76 = ssub.s32 %s16, %s23
    %p77 = scmp.eq.s32.totalorder %s76, 0
    %s79 = sadd.s32 %s78, 1
    %s80 = scalar_select %p77, %s78, %s79
    %p83 = pneg %p77
    %p84 = scmp.eq.s32.totalorder %s16, 1
    %p85 = por %p83, %p84
    %p86 = scmp.ne.s32.totalorder %s78, %s81
    %p87 = scmp.eq.s32.totalorder %s16, 0
    %p88 = por %p86, %p87
    %p89 = scmp.ne.s32.totalorder %s78, %s81
    %p90 = scmp.eq.s32.totalorder %s21, 1
    %p91 = por %p89, %p90
    %p92 = scmp.ne.s32.totalorder %s81, %s82
    %p93 = scmp.eq.s32.totalorder %s21, 0
    %p94 = por %p92, %p93
    %p95 = scmp.ne.s32.totalorder %s81, %s82
    %p96 = scmp.eq.s32.totalorder %s22, 1
    %p97 = por %p95, %p96
    %p99 = scmp.ne.s32.totalorder %s82, %s98
    %p100 = scmp.eq.s32.totalorder %s22, 0
    %p101 = por %p99, %p100
    %s102 = ssub.s32 %s16, %s23
    %p103 = scmp.eq.s32.totalorder %s102, 0
    %s105 = sadd.s32 %s104, 1
    %s106 = scalar_select %p103, %s104, %s105
    %p109 = pneg %p103
    %p110 = scmp.eq.s32.totalorder %s16, 1
    %p111 = por %p109, %p110
    %p112 = scmp.ne.s32.totalorder %s104, %s107
    %p113 = scmp.eq.s32.totalorder %s16, 0
    %p114 = por %p112, %p113
    %p115 = scmp.ne.s32.totalorder %s104, %s107
    %p116 = scmp.eq.s32.totalorder %s21, 1
    %p117 = por %p115, %p116
    %p118 = scmp.ne.s32.totalorder %s107, %s108
    %p119 = scmp.eq.s32.totalorder %s21, 0
    %p120 = por %p118, %p119
    %p121 = scmp.ne.s32.totalorder %s107, %s108
    %p122 = scmp.eq.s32.totalorder %s22, 1
    %p123 = por %p121, %p122
    %p125 = scmp.ne.s32.totalorder %s108, %s124
    %p126 = scmp.eq.s32.totalorder %s22, 0
    %p127 = por %p125, %p126
    %s129 = sadd.s32 %s128, 1
    %p132 = scmp.eq.s32.totalorder %s16, 1
    %p133 = scmp.ne.s32.totalorder %s128, %s130
    %p134 = scmp.eq.s32.totalorder %s16, 0
    %p135 = por %p133, %p134
    %p136 = scmp.ne.s32.totalorder %s128, %s130
    %p137 = scmp.eq.s32.totalorder %s21, 1
    %p138 = por %p136, %p137
    %p139 = scmp.ne.s32.totalorder %s130, %s131
    %p140 = scmp.eq.s32.totalorder %s21, 0
    %p141 = por %p139, %p140
    %p142 = scmp.ne.s32.totalorder %s130, %s131
    %p143 = scmp.eq.s32.totalorder %s22, 1
    %p144 = por %p142, %p143
    %p146 = scmp.ne.s32.totalorder %s131, %s145
    %p147 = scmp.eq.s32.totalorder %s22, 0
    %p148 = por %p146, %p147
    %s150 = sadd.s32 %s149, 1
    %p153 = scmp.eq.s32.totalorder %s16, 1
    %p154 = scmp.ne.s32.totalorder %s149, %s151
    %p155 = scmp.eq.s32.totalorder %s16, 0
    %p156 = por %p154, %p155
    %p157 = scmp.ne.s32.totalorder %s149, %s151
    %p158 = scmp.eq.s32.totalorder %s21, 1
    %p159 = por %p157, %p158
    %p160 = scmp.ne.s32.totalorder %s151, %s152
    %p161 = scmp.eq.s32.totalorder %s21, 0
    %p162 = por %p160, %p161
    %p163 = scmp.ne.s32.totalorder %s151, %s152
    %p164 = scmp.eq.s32.totalorder %s22, 1
    %p165 = por %p163, %p164
    %p167 = scmp.ne.s32.totalorder %s152, %s166
    %p168 = scmp.eq.s32.totalorder %s22, 0
    %p169 = por %p167, %p168
    %s171 = sadd.s32 %s170, 1
    %p174 = scmp.eq.s32.totalorder %s16, 1
    %p175 = scmp.ne.s32.totalorder %s170, %s172
    %p176 = scmp.eq.s32.totalorder %s16, 0
    %p177 = por %p175, %p176
    %p178 = scmp.ne.s32.totalorder %s170, %s172
    %p179 = scmp.eq.s32.totalorder %s21, 1
    %p180 = por %p178, %p179
    %p181 = scmp.ne.s32.totalorder %s172, %s173
    %p182 = scmp.eq.s32.totalorder %s21, 0
    %p183 = por %p181, %p182
    %p184 = scmp.ne.s32.totalorder %s172, %s173
    %p185 = scmp.eq.s32.totalorder %s22, 1
    %p186 = por %p184, %p185
    %p188 = scmp.ne.s32.totalorder %s173, %s187
    %p189 = scmp.eq.s32.totalorder %s22, 0
    %p190 = por %p188, %p189
    %s191 = ssub.s32 %s16, %s23
    %p192 = scmp.eq.s32.totalorder %s191, 0
    %s194 = sadd.s32 %s193, 1
    %s195 = scalar_select %p192, %s193, %s194
    %p198 = pneg %p192
    %p199 = scmp.eq.s32.totalorder %s16, 1
    %p200 = por %p198, %p199
    %p201 = scmp.ne.s32.totalorder %s193, %s196
    %p202 = scmp.eq.s32.totalorder %s16, 0
    %p203 = por %p201, %p202
    %p204 = scmp.ne.s32.totalorder %s193, %s196
    %p205 = scmp.eq.s32.totalorder %s21, 1
    %p206 = por %p204, %p205
    %p207 = scmp.ne.s32.totalorder %s196, %s197
    %p208 = scmp.eq.s32.totalorder %s21, 0
    %p209 = por %p207, %p208
    %p210 = scmp.ne.s32.totalorder %s196, %s197
    %p211 = scmp.eq.s32.totalorder %s22, 1
    %p212 = por %p210, %p211
    %p214 = scmp.ne.s32.totalorder %s197, %s213
    %p215 = scmp.eq.s32.totalorder %s22, 0
    %p216 = por %p214, %p215
    %s217 = ssub.s32 %s16, %s23
    %p218 = scmp.eq.s32.totalorder %s217, 0
    %s220 = sadd.s32 %s219, 1
    %s221 = scalar_select %p218, %s219, %s220
    %p224 = pneg %p218
    %p225 = scmp.eq.s32.totalorder %s16, 1
    %p226 = por %p224, %p225
    %p227 = scmp.ne.s32.totalorder %s219, %s222
    %p228 = scmp.eq.s32.totalorder %s16, 0
    %p229 = por %p227, %p228
    %p230 = scmp.ne.s32.totalorder %s219, %s222
    %p231 = scmp.eq.s32.totalorder %s21, 1
    %p232 = por %p230, %p231
    %p233 = scmp.ne.s32.totalorder %s222, %s223
    %p234 = scmp.eq.s32.totalorder %s21, 0
    %p235 = por %p233, %p234
    %p236 = scmp.ne.s32.totalorder %s222, %s223
    %p237 = scmp.eq.s32.totalorder %s22, 1
    %p238 = por %p236, %p237
    %p240 = scmp.ne.s32.totalorder %s223, %s239
    %p241 = scmp.eq.s32.totalorder %s22, 0
    %p242 = por %p240, %p241
    %s243 = ssub.s32 %s16, %s23
    %p244 = scmp.eq.s32.totalorder %s243, 0
    %s246 = sadd.s32 %s245, 1
    %s247 = scalar_select %p244, %s245, %s246
    %p250 = pneg %p244
    %p251 = scmp.eq.s32.totalorder %s16, 1
    %p252 = por %p250, %p251
    %p253 = scmp.ne.s32.totalorder %s245, %s248
    %p254 = scmp.eq.s32.totalorder %s16, 0
    %p255 = por %p253, %p254
    %p256 = scmp.ne.s32.totalorder %s245, %s248
    %p257 = scmp.eq.s32.totalorder %s21, 1
    %p258 = por %p256, %p257
    %p259 = scmp.ne.s32.totalorder %s248, %s249
    %p260 = scmp.eq.s32.totalorder %s21, 0
    %p261 = por %p259, %p260
    %p262 = scmp.ne.s32.totalorder %s248, %s249
    %p263 = scmp.eq.s32.totalorder %s22, 1
    %p264 = por %p262, %p263
    %p266 = scmp.ne.s32.totalorder %s249, %s265
    %p267 = scmp.eq.s32.totalorder %s22, 0
    %p268 = por %p266, %p267
    %p269 = scmp.le.s32.totalorder 1, %s16
    %p270 = scmp.lt.s32.totalorder %s16, 3
    %p271 = pnand %p269, %p270
    %p272 = pneg %p271
    // Predicated region
    $region9: #{res_bottleneck_block.6} parent=5 // pred_check
      _
    $region10: #{res_bottleneck_block.6} parent=5 // pred_check_branch
      %274 = sbr.rel (%p271) target = $region12
    $region11: #{res_bottleneck_block.6} parent=5 // pred_region
      %s275 = ssub.s32 %s16, 1
      // Predicated region
      $region13: #{res_bottleneck_block.6} parent=11 // pred_check
        %p276 = pneg %p141
      $region14: #{res_bottleneck_block.6} parent=11 // pred_check_branch
        %278 = sbr.rel (%p276) target = $region16
      $region15: #{res_bottleneck_block.6} parent=11 // pred_region
        _
      $region16: #{res_bottleneck_block.6} parent=11 // pred_fallthru
        _
      // Predicated region
      $region17: #{res_bottleneck_block.6} parent=11 // pred_check
        %p279 = pneg %p162
      $region18: #{res_bottleneck_block.6} parent=11 // pred_check_branch
        %281 = sbr.rel (%p279) target = $region20
      $region19: #{res_bottleneck_block.6} parent=11 // pred_region
        _
      $region20: #{res_bottleneck_block.6} parent=11 // pred_fallthru
        _
      // Predicated region
      $region21: #{res_bottleneck_block.6} parent=11 // pred_check
        %p282 = pneg %p183
      $region22: #{res_bottleneck_block.6} parent=11 // pred_check_branch
        %284 = sbr.rel (%p282) target = $region24
      $region23: #{res_bottleneck_block.6} parent=11 // pred_region
        _
      $region24: #{res_bottleneck_block.6} parent=11 // pred_fallthru
        _
    $region12: #{res_bottleneck_block.6} parent=5 // pred_fallthru
      _
    %p285 = scmp.lt.s32.totalorder %s16, 2
    // Predicated region
    $region25: #{res_bottleneck_block.6} parent=5 // pred_check
      %p286 = pneg %p285
    $region26: #{res_bottleneck_block.6} parent=5 // pred_check_branch
      %288 = sbr.rel (%p286) target = $region28
    $region27: #{res_bottleneck_block.6} parent=5 // pred_region
      // Predicated region
      $region29: #{res_bottleneck_block.6} parent=27 // pred_check
        %p289 = pneg %p36
      $region30: #{res_bottleneck_block.6} parent=27 // pred_check_branch
        %291 = sbr.rel (%p289) target = $region32
      $region31: #{res_bottleneck_block.6} parent=27 // pred_region
        %p292 = scmp.lt.s32.totalorder %s16, 1
        %s293 = scalar_select %p292, %s16, 1
        %s294 = smul.addr %s293, 8
        %s295 = smul.addr %s294, 8
        %s296 = scalar_lea.vmem %s0, %s295
      $region32: #{res_bottleneck_block.6} parent=27 // pred_fallthru
        _
      // Predicated region
      $region33: #{res_bottleneck_block.6} parent=27 // pred_check
        %p297 = pneg %p62
      $region34: #{res_bottleneck_block.6} parent=27 // pred_check_branch
        %299 = sbr.rel (%p297) target = $region36
      $region35: #{res_bottleneck_block.6} parent=27 // pred_region
        %p300 = scmp.lt.s32.totalorder %s16, 1
        %s301 = scalar_select %p300, %s16, 1
        %s302 = smul.addr %s301, 8
        %s303 = smul.addr %s302, 8
        %s304 = scalar_lea.vmem %s1, %s303
      $region36: #{res_bottleneck_block.6} parent=27 // pred_fallthru
        _
      // Predicated region
      $region37: #{res_bottleneck_block.6} parent=27 // pred_check
        %p305 = pneg %p88
      $region38: #{res_bottleneck_block.6} parent=27 // pred_check_branch
        %307 = sbr.rel (%p305) target = $region40
      $region39: #{res_bottleneck_block.6} parent=27 // pred_region
        %p308 = scmp.lt.s32.totalorder %s16, 1
        %s309 = scalar_select %p308, %s16, 1
        %s310 = smul.addr %s309, 8
        %s311 = smul.addr %s310, 8
        %s312 = scalar_lea.vmem %s2, %s311
      $region40: #{res_bottleneck_block.6} parent=27 // pred_fallthru
        _
      // Predicated region
      $region41: #{res_bottleneck_block.6} parent=27 // pred_check
        %p313 = pneg %p114
      $region42: #{res_bottleneck_block.6} parent=27 // pred_check_branch
        %315 = sbr.rel (%p313) target = $region44
      $region43: #{res_bottleneck_block.6} parent=27 // pred_region
        %p316 = scmp.lt.s32.totalorder %s16, 1
        %s317 = scalar_select %p316, %s16, 1
        %s318 = smul.addr %s317, 8
        %s319 = smul.addr %s318, 8
        %s320 = scalar_lea.vmem %s3, %s319
      $region44: #{res_bottleneck_block.6} parent=27 // pred_fallthru
        _
    $region28: #{res_bottleneck_block.6} parent=5 // pred_fallthru
      _
    %p321 = scmp.le.s32.totalorder 1, %s16
    %p322 = scmp.lt.s32.totalorder %s16, 3
    %p323 = pnand %p321, %p322
    %p324 = pneg %p323
    // Predicated region
    $region45: #{res_bottleneck_block.6} parent=5 // pred_check
      _
    $region46: #{res_bottleneck_block.6} parent=5 // pred_check_branch
      %326 = sbr.rel (%p323) target = $region48
    $region47: #{res_bottleneck_block.6} parent=5 // pred_region
      %s327 = ssub.s32 %s16, 1
      %p328 = scmp.lt.s32.totalorder %s21, 1
      %s329 = scalar_select %p328, %s21, 1
      %s330 = smul.addr %s329, 8
      %s331 = smul.addr %s330, 8
      %s332 = scalar_lea.vmem %s0, %s331
      %p333 = pneg %p42
      %p334 = pneg %p39
      %p335 = scmp.lt.s32.totalorder %s21, 1
      %s336 = scalar_select %p335, %s21, 1
      %s337 = smul.addr %s336, 8
      %s338 = smul.addr %s337, 8
      %s339 = scalar_lea.vmem %s1, %s338
      %p340 = pneg %p68
      %p341 = pneg %p65
      %p342 = scmp.lt.s32.totalorder %s21, 1
      %s343 = scalar_select %p342, %s21, 1
      %s344 = smul.addr %s343, 8
      %s345 = smul.addr %s344, 8
      %s346 = scalar_lea.vmem %s2, %s345
      %p347 = pneg %p94
      %p348 = pneg %p91
      %p349 = scmp.lt.s32.totalorder %s21, 1
      %s350 = scalar_select %p349, %s21, 1
      %s351 = smul.addr %s350, 8
      %s352 = smul.addr %s351, 8
      %s353 = scalar_lea.vmem %s3, %s352
      %p354 = pneg %p120
      %p355 = pneg %p117
      %p356 = pneg %p141
      %p357 = pneg %p138
      %p358 = pneg %p162
      %p359 = pneg %p159
      %p360 = pneg %p183
      %p361 = pneg %p180
      %p362 = pneg %p209
      %p363 = pneg %p206
      %p364 = scmp.lt.s32.totalorder %s21, 1
      %s365 = scalar_select %p364, %s21, 1
      %s366 = smul.addr %s365, 8
      %s367 = smul.addr %s366, 8
      %s368 = scalar_lea.vmem %s7, %s367
      %p369 = pneg %p235
      %p370 = pneg %p232
      %p371 = scmp.lt.s32.totalorder %s21, 1
      %s372 = scalar_select %p371, %s21, 1
      %s373 = scalar_lea.vmem %s8, %s372
      %p374 = pneg %p261
      %p375 = pneg %p258
      %p376 = scmp.lt.s32.totalorder %s21, 1
      %s377 = scalar_select %p376, %s21, 1
      %s378 = scalar_lea.vmem %s9, %s377
      %p379 = scmp.lt.s32.totalorder %s21, 1
      %s380 = scalar_select %p379, %s21, 1
      %s381 = smul.addr %s380, 8
      %s382 = smul.addr %s381, 8
      %s383 = scalar_lea.vmem %s0, %s382
      %p384 = scmp.lt.s32.totalorder %s21, 1
      %s385 = scalar_select %p384, %s21, 1
      %s386 = smul.addr %s385, 8
      %s387 = smul.addr %s386, 8
      %s388 = scalar_lea.vmem %s1, %s387
      %p389 = scmp.lt.s32.totalorder %s21, 1
      %s390 = scalar_select %p389, %s21, 1
      %s391 = smul.addr %s390, 8
      %s392 = smul.addr %s391, 8
      %s393 = scalar_lea.vmem %s2, %s392
      %p394 = scmp.lt.s32.totalorder %s21, 1
      %s395 = scalar_select %p394, %s21, 1
      %s396 = smul.addr %s395, 8
      %s397 = smul.addr %s396, 8
      %s398 = scalar_lea.vmem %s3, %s397
      %p399 = scmp.lt.s32.totalorder %s21, 1
      %s400 = scalar_select %p399, %s21, 1
      %s401 = smul.addr %s400, 8
      %s402 = smul.addr %s401, 8
      %s403 = scalar_lea.vmem %s7, %s402
      %p404 = scmp.lt.s32.totalorder %s21, 1
      %s405 = scalar_select %p404, %s21, 1
      %s406 = scalar_lea.vmem %s8, %s405
      %p407 = scmp.lt.s32.totalorder %s21, 1
      %s408 = scalar_select %p407, %s21, 1
      %s409 = scalar_lea.vmem %s9, %s408
      %vm410 = vcmask 15360
      %411 = vst.msk [vmem:[#allocation2] sm:$0xff] %vm410, 0.0
      %vm412 = vcmask 8192
      %413 = vst.msk [vmem:[#allocation2 + $0x8] sm:$0x1] %vm412, 0.0
      %414 = vst.msk [vmem:[#allocation2 + $0x10] sm:$0xff] %vm410, 0.0
      %415 = vst.msk [vmem:[#allocation2 + $0x18] sm:$0x1] %vm412, 0.0
      %416 = vst.msk [vmem:[#allocation2 + $0x20] sm:$0xff] %vm410, 0.0
      %417 = vst.msk [vmem:[#allocation2 + $0x28] sm:$0x1] %vm412, 0.0
      %418 = vst.msk [vmem:[#allocation2 + $0x30] sm:$0xff] %vm410, 0.0
      %419 = vst.msk [vmem:[#allocation2 + $0x38] sm:$0x1] %vm412, 0.0
      %420 = vst.msk [vmem:[#allocation2 + $0x40] sm:$0xff] %vm410, 0.0
      %421 = vst.msk [vmem:[#allocation2 + $0x48] sm:$0x1] %vm412, 0.0
      %422 = vst.msk [vmem:[#allocation2 + $0x50] sm:$0xff] %vm410, 0.0
      %423 = vst.msk [vmem:[#allocation2 + $0x58] sm:$0x1] %vm412, 0.0
      %424 = vst.msk [vmem:[#allocation2 + $0x60] sm:$0xff] %vm410, 0.0
      %425 = vst.msk [vmem:[#allocation2 + $0x68] sm:$0x1] %vm412, 0.0
      %426 = vst.msk [vmem:[#allocation2 + $0x70] sm:$0xff] %vm410, 0.0
      %427 = vst.msk [vmem:[#allocation2 + $0x78] sm:$0x1] %vm412, 0.0
      %428 = vst.msk [vmem:[#allocation2 + $0x80] sm:$0xff] %vm410, 0.0
      %429 = vst.msk [vmem:[#allocation2 + $0x88] sm:$0x1] %vm412, 0.0
      %430 = vst.msk [vmem:[#allocation2 + $0x90] sm:$0xff] %vm410, 0.0
      %431 = vst.msk [vmem:[#allocation2 + $0x98] sm:$0x1] %vm412, 0.0
      %432 = vst.msk [vmem:[#allocation2 + $0xa0] sm:$0xff] %vm410, 0.0
      %433 = vst.msk [vmem:[#allocation2 + $0xa8] sm:$0x1] %vm412, 0.0
      %434 = vst.msk [vmem:[#allocation2 + $0xb0] sm:$0xff] %vm410, 0.0
      %435 = vst.msk [vmem:[#allocation2 + $0xb8] sm:$0x1] %vm412, 0.0
      %436 = vst.msk [vmem:[#allocation2 + $0xc0] sm:$0xff] %vm410, 0.0
      %437 = vst.msk [vmem:[#allocation2 + $0xc8] sm:$0x1] %vm412, 0.0
      %438 = vst.msk [vmem:[#allocation2 + $0xd0] sm:$0xff] %vm410, 0.0
      %439 = vst.msk [vmem:[#allocation2 + $0xd8] sm:$0x1] %vm412, 0.0
      %440 = vst.msk [vmem:[#allocation2 + $0xe0] sm:$0xff] %vm410, 0.0
      %441 = vst.msk [vmem:[#allocation2 + $0xe8] sm:$0x1] %vm412, 0.0
      %442 = vst.msk [vmem:[#allocation2 + $0xf0] sm:$0xff] %vm410, 0.0
      %443 = vst.msk [vmem:[#allocation2 + $0xf8] sm:$0x1] %vm412, 0.0
      %444 = vst.msk [vmem:[#allocation2 + $0x100] sm:$0xff] %vm410, 0.0
      %445 = vst.msk [vmem:[#allocation2 + $0x108] sm:$0x1] %vm412, 0.0
      %446 = vst.msk [vmem:[#allocation2 + $0x110] sm:$0xff] %vm410, 0.0
      %447 = vst.msk [vmem:[#allocation2 + $0x118] sm:$0x1] %vm412, 0.0
      %448 = vst.msk [vmem:[#allocation2 + $0x120] sm:$0xff] %vm410, 0.0
      %449 = vst.msk [vmem:[#allocation2 + $0x128] sm:$0x1] %vm412, 0.0
      %450 = vst.msk [vmem:[#allocation2 + $0x130] sm:$0xff] %vm410, 0.0
      %451 = vst.msk [vmem:[#allocation2 + $0x138] sm:$0x1] %vm412, 0.0
      %452 = vst.msk [vmem:[#allocation2 + $0x140] sm:$0xff] %vm410, 0.0
      %453 = vst.msk [vmem:[#allocation2 + $0x148] sm:$0x1] %vm412, 0.0
      %454 = vst.msk [vmem:[#allocation2 + $0x150] sm:$0xff] %vm410, 0.0
      %455 = vst.msk [vmem:[#allocation2 + $0x158] sm:$0x1] %vm412, 0.0
      %456 = vst.msk [vmem:[#allocation2 + $0x160] sm:$0xff] %vm410, 0.0
      %457 = vst.msk [vmem:[#allocation2 + $0x168] sm:$0x1] %vm412, 0.0
      %458 = vst.msk [vmem:[#allocation2 + $0x170] sm:$0xff] %vm410, 0.0
      %459 = vst.msk [vmem:[#allocation2 + $0x178] sm:$0x1] %vm412, 0.0
      %460 = vst.msk [vmem:[#allocation2 + $0x180] sm:$0xff] %vm410, 0.0
      %461 = vst.msk [vmem:[#allocation2 + $0x188] sm:$0x1] %vm412, 0.0
      %462 = vst.msk [vmem:[#allocation2 + $0x190] sm:$0xff] %vm410, 0.0
      %463 = vst.msk [vmem:[#allocation2 + $0x198] sm:$0x1] %vm412, 0.0
      %464 = vst.msk [vmem:[#allocation2 + $0x1a0] sm:$0xff] %vm410, 0.0
      %465 = vst.msk [vmem:[#allocation2 + $0x1a8] sm:$0x1] %vm412, 0.0
      %466 = vst.msk [vmem:[#allocation2 + $0x1b0] sm:$0xff] %vm410, 0.0
      %467 = vst.msk [vmem:[#allocation2 + $0x1b8] sm:$0x1] %vm412, 0.0
      %468 = vst.msk [vmem:[#allocation2 + $0x1c0] sm:$0xff] %vm410, 0.0
      %469 = vst.msk [vmem:[#allocation2 + $0x1c8] sm:$0x1] %vm412, 0.0
      %470 = vst.msk [vmem:[#allocation2 + $0x1d0] sm:$0xff] %vm410, 0.0
      %471 = vst.msk [vmem:[#allocation2 + $0x1d8] sm:$0x1] %vm412, 0.0
      %472 = vst.msk [vmem:[#allocation2 + $0x1e0] sm:$0xff] %vm410, 0.0
      %473 = vst.msk [vmem:[#allocation2 + $0x1e8] sm:$0x1] %vm412, 0.0
      %474 = vst.msk [vmem:[#allocation2 + $0x1f0] sm:$0xff] %vm410, 0.0
      %475 = vst.msk [vmem:[#allocation2 + $0x1f8] sm:$0x1] %vm412, 0.0
      %476 = vst.msk [vmem:[#allocation2 + $0x200] sm:$0xff] %vm410, 0.0
      %477 = vst.msk [vmem:[#allocation2 + $0x208] sm:$0x1] %vm412, 0.0
      %478 = vst.msk [vmem:[#allocation2 + $0x210] sm:$0xff] %vm410, 0.0
      %479 = vst.msk [vmem:[#allocation2 + $0x218] sm:$0x1] %vm412, 0.0
      %480 = vst.msk [vmem:[#allocation2 + $0x220] sm:$0xff] %vm410, 0.0
      %481 = vst.msk [vmem:[#allocation2 + $0x228] sm:$0x1] %vm412, 0.0
      %482 = vst.msk [vmem:[#allocation2 + $0x230] sm:$0xff] %vm410, 0.0
      %483 = vst.msk [vmem:[#allocation2 + $0x238] sm:$0x1] %vm412, 0.0
      %v484 = vld [vmem:[%s5] sm:$0x1]
      %v485 = vld [vmem:[%s6] sm:$0x1]
      %v486 = vld [vmem:[%s383] sm:$0xff]
      %v487 = vld [vmem:[%s383 + $0x8] sm:$0xff]
      %v488 = vld [vmem:[%s383 + $0x10] sm:$0xff]
      %v489 = vld [vmem:[%s383 + $0x18] sm:$0xff]
      %v490 = vld [vmem:[%s383 + $0x20] sm:$0xff]
      %v491 = vld [vmem:[%s383 + $0x28] sm:$0xff]
      %v492 = vld [vmem:[%s383 + $0x30] sm:$0xff]
      %v493 = vld [vmem:[%s383 + $0x38] sm:$0xff]
      %v495 = vlaneseq
      %v496 = vshrl.u32 %v495, 7
      %v497 = vsub.s32 0, %v496
      %v498 = vrot.slane %v484, %v497
      %v500 = vmul.f32 %v486, %v498
      %v501 = vmul.f32 %v487, %v498
      %v502 = vmul.f32 %v488, %v498
      %v503 = vmul.f32 %v489, %v498
      %v504 = vmul.f32 %v490, %v498
      %v505 = vmul.f32 %v491, %v498
      %v506 = vmul.f32 %v492, %v498
      %v507 = vmul.f32 %v493, %v498
      %v509 = vlaneseq
      %v510 = vshrl.u32 %v509, 7
      %v511 = vsub.s32 0, %v510
      %v512 = vrot.slane %v485, %v511
      %v514 = vadd.f32 %v500, %v512
      %v515 = vadd.f32 %v501, %v512
      %v516 = vadd.f32 %v502, %v512
      %v517 = vadd.f32 %v503, %v512
      %v518 = vadd.f32 %v504, %v512
      %v519 = vadd.f32 %v505, %v512
      %v520 = vadd.f32 %v506, %v512
      %v521 = vadd.f32 %v507, %v512
      %v522 = vmax.f32 %v514, 0.0
      %v523 = vmax.f32 %v515, 0.0
      %v524 = vmax.f32 %v516, 0.0
      %v525 = vmax.f32 %v517, 0.0
      %v526 = vmax.f32 %v518, 0.0
      %v527 = vmax.f32 %v519, 0.0
      %v528 = vmax.f32 %v520, 0.0
      %v529 = vmax.f32 %v521, 0.0
      %s530 = scalar_lea.vmem [#allocation2], 16
      %531 = vst.msk [vmem:[%s530 + $0x1] sm:$0xff] %vm410, %v522
      %532 = vst.msk [vmem:[%s530 + $0x11] sm:$0xff] %vm410, %v523
      %533 = vst.msk [vmem:[%s530 + $0x21] sm:$0xff] %vm410, %v524
      %534 = vst.msk [vmem:[%s530 + $0x31] sm:$0xff] %vm410, %v525
      %535 = vst.msk [vmem:[%s530 + $0x41] sm:$0xff] %vm410, %v526
      %536 = vst.msk [vmem:[%s530 + $0x51] sm:$0xff] %vm410, %v527
      %537 = vst.msk [vmem:[%s530 + $0x61] sm:$0xff] %vm410, %v528
      %538 = vst.msk [vmem:[%s530 + $0x71] sm:$0xff] %vm410, %v529
      %v539 = vld [vmem:[%s388] sm:$0xff]
      %v540 = vld [vmem:[%s388 + $0x8] sm:$0xff]
      %v541 = vld [vmem:[%s388 + $0x10] sm:$0xff]
      %v542 = vld [vmem:[%s388 + $0x18] sm:$0xff]
      %v543 = vld [vmem:[%s388 + $0x20] sm:$0xff]
      %v544 = vld [vmem:[%s388 + $0x28] sm:$0xff]
      %v545 = vld [vmem:[%s388 + $0x30] sm:$0xff]
      %v546 = vld [vmem:[%s388 + $0x38] sm:$0xff]
      %v547 = vmul.f32 %v539, %v498
      %v548 = vmul.f32 %v540, %v498
      %v549 = vmul.f32 %v541, %v498
      %v550 = vmul.f32 %v542, %v498
      %v551 = vmul.f32 %v543, %v498
      %v552 = vmul.f32 %v544, %v498
      %v553 = vmul.f32 %v545, %v498
      %v554 = vmul.f32 %v546, %v498
      %v555 = vadd.f32 %v547, %v512
      %v556 = vadd.f32 %v548, %v512
      %v557 = vadd.f32 %v549, %v512
      %v558 = vadd.f32 %v550, %v512
      %v559 = vadd.f32 %v551, %v512
      %v560 = vadd.f32 %v552, %v512
      %v561 = vadd.f32 %v553, %v512
      %v562 = vadd.f32 %v554, %v512
      %v563 = vmax.f32 %v555, 0.0
      %v564 = vmax.f32 %v556, 0.0
      %v565 = vmax.f32 %v557, 0.0
      %v566 = vmax.f32 %v558, 0.0
      %v567 = vmax.f32 %v559, 0.0
      %v568 = vmax.f32 %v560, 0.0
      %v569 = vmax.f32 %v561, 0.0
      %v570 = vmax.f32 %v562, 0.0
      %s571 = scalar_lea.vmem [#allocation2], 160
      %572 = vst.msk [vmem:[%s571] sm:$0xff] %vm410, %v563
      %573 = vst.msk [vmem:[%s571 + $0x10] sm:$0xff] %vm410, %v564
      %574 = vst.msk [vmem:[%s571 + $0x20] sm:$0xff] %vm410, %v565
      %575 = vst.msk [vmem:[%s571 + $0x30] sm:$0xff] %vm410, %v566
      %576 = vst.msk [vmem:[%s571 + $0x40] sm:$0xff] %vm410, %v567
      %577 = vst.msk [vmem:[%s571 + $0x50] sm:$0xff] %vm410, %v568
      %578 = vst.msk [vmem:[%s571 + $0x60] sm:$0xff] %vm410, %v569
      %579 = vst.msk [vmem:[%s571 + $0x70] sm:$0xff] %vm410, %v570
      %v580 = vld [vmem:[%s393] sm:$0xff]
      %v581 = vld [vmem:[%s393 + $0x8] sm:$0xff]
      %v582 = vld [vmem:[%s393 + $0x10] sm:$0xff]
      %v583 = vld [vmem:[%s393 + $0x18] sm:$0xff]
      %v584 = vld [vmem:[%s393 + $0x20] sm:$0xff]
      %v585 = vld [vmem:[%s393 + $0x28] sm:$0xff]
      %v586 = vld [vmem:[%s393 + $0x30] sm:$0xff]
      %v587 = vld [vmem:[%s393 + $0x38] sm:$0xff]
      %v588 = vmul.f32 %v580, %v498
      %v589 = vmul.f32 %v581, %v498
      %v590 = vmul.f32 %v582, %v498
      %v591 = vmul.f32 %v583, %v498
      %v592 = vmul.f32 %v584, %v498
      %v593 = vmul.f32 %v585, %v498
      %v594 = vmul.f32 %v586, %v498
      %v595 = vmul.f32 %v587, %v498
      %v596 = vadd.f32 %v588, %v512
      %v597 = vadd.f32 %v589, %v512
      %v598 = vadd.f32 %v590, %v512
      %v599 = vadd.f32 %v591, %v512
      %v600 = vadd.f32 %v592, %v512
      %v601 = vadd.f32 %v593, %v512
      %v602 = vadd.f32 %v594, %v512
      %v603 = vadd.f32 %v595, %v512
      %v604 = vmax.f32 %v596, 0.0
      %v605 = vmax.f32 %v597, 0.0
      %v606 = vmax.f32 %v598, 0.0
      %v607 = vmax.f32 %v599, 0.0
      %v608 = vmax.f32 %v600, 0.0
      %v609 = vmax.f32 %v601, 0.0
      %v610 = vmax.f32 %v602, 0.0
      %v611 = vmax.f32 %v603, 0.0
      %s612 = scalar_lea.vmem [#allocation2], 288
      %613 = vst.msk [vmem:[%s612 + $0x1] sm:$0xff] %vm410, %v604
      %614 = vst.msk [vmem:[%s612 + $0x11] sm:$0xff] %vm410, %v605
      %615 = vst.msk [vmem:[%s612 + $0x21] sm:$0xff] %vm410, %v606
      %616 = vst.msk [vmem:[%s612 + $0x31] sm:$0xff] %vm410, %v607
      %617 = vst.msk [vmem:[%s612 + $0x41] sm:$0xff] %vm410, %v608
      %618 = vst.msk [vmem:[%s612 + $0x51] sm:$0xff] %vm410, %v609
      %619 = vst.msk [vmem:[%s612 + $0x61] sm:$0xff] %vm410, %v610
      %620 = vst.msk [vmem:[%s612 + $0x71] sm:$0xff] %vm410, %v611
      %v621 = vld [vmem:[%s398] sm:$0xff]
      %v622 = vld [vmem:[%s398 + $0x8] sm:$0xff]
      %v623 = vld [vmem:[%s398 + $0x10] sm:$0xff]
      %v624 = vld [vmem:[%s398 + $0x18] sm:$0xff]
      %v625 = vld [vmem:[%s398 + $0x20] sm:$0xff]
      %v626 = vld [vmem:[%s398 + $0x28] sm:$0xff]
      %v627 = vld [vmem:[%s398 + $0x30] sm:$0xff]
      %v628 = vld [vmem:[%s398 + $0x38] sm:$0xff]
      %v629 = vmul.f32 %v621, %v498
      %v630 = vmul.f32 %v622, %v498
      %v631 = vmul.f32 %v623, %v498
      %v632 = vmul.f32 %v624, %v498
      %v633 = vmul.f32 %v625, %v498
      %v634 = vmul.f32 %v626, %v498
      %v635 = vmul.f32 %v627, %v498
      %v636 = vmul.f32 %v628, %v498
      %v637 = vadd.f32 %v629, %v512
      %v638 = vadd.f32 %v630, %v512
      %v639 = vadd.f32 %v631, %v512
      %v640 = vadd.f32 %v632, %v512
      %v641 = vadd.f32 %v633, %v512
      %v642 = vadd.f32 %v634, %v512
      %v643 = vadd.f32 %v635, %v512
      %v644 = vadd.f32 %v636, %v512
      %v645 = vmax.f32 %v637, 0.0
      %v646 = vmax.f32 %v638, 0.0
      %v647 = vmax.f32 %v639, 0.0
      %v648 = vmax.f32 %v640, 0.0
      %v649 = vmax.f32 %v641, 0.0
      %v650 = vmax.f32 %v642, 0.0
      %v651 = vmax.f32 %v643, 0.0
      %v652 = vmax.f32 %v644, 0.0
      %s653 = scalar_lea.vmem [#allocation2], 432
      %654 = vst.msk [vmem:[%s653] sm:$0xff] %vm410, %v645
      %655 = vst.msk [vmem:[%s653 + $0x10] sm:$0xff] %vm410, %v646
      %656 = vst.msk [vmem:[%s653 + $0x20] sm:$0xff] %vm410, %v647
      %657 = vst.msk [vmem:[%s653 + $0x30] sm:$0xff] %vm410, %v648
      %658 = vst.msk [vmem:[%s653 + $0x40] sm:$0xff] %vm410, %v649
      %659 = vst.msk [vmem:[%s653 + $0x50] sm:$0xff] %vm410, %v650
      %660 = vst.msk [vmem:[%s653 + $0x60] sm:$0xff] %vm410, %v651
      %661 = vst.msk [vmem:[%s653 + $0x70] sm:$0xff] %vm410, %v652
      %v662 = vld [vmem:[#allocation2] sm:$0xff]
      %v663 = vld [vmem:[#allocation2 + $0x10] sm:$0xff]
      %v664 = vld [vmem:[#allocation2 + $0x20] sm:$0xff]
      %v665 = vld [vmem:[#allocation2 + $0x30] sm:$0xff]
      %v666 = vld [vmem:[#allocation2 + $0x40] sm:$0xff]
      %v667 = vld [vmem:[#allocation2 + $0x50] sm:$0xff]
      %v668 = vld [vmem:[#allocation2 + $0x60] sm:$0xff]
      %v669 = vld [vmem:[#allocation2 + $0x70] sm:$0xff]
      %v670 = vld [vmem:[%s4] sm:$0x3]
      %s671 = scalar_lea.vmem [#allocation2], 144
      %v672 = vld [vmem:[%s671] sm:$0xff]
      %v673 = vld [vmem:[%s671 + $0x10] sm:$0xff]
      %v674 = vld [vmem:[%s671 + $0x20] sm:$0xff]
      %v675 = vld [vmem:[%s671 + $0x30] sm:$0xff]
      %v676 = vld [vmem:[%s671 + $0x40] sm:$0xff]
      %v677 = vld [vmem:[%s671 + $0x50] sm:$0xff]
      %v678 = vld [vmem:[%s671 + $0x60] sm:$0xff]
      %v679 = vld [vmem:[%s671 + $0x70] sm:$0xff]
      %s680 = scalar_lea.vmem %s4, 2
      %v681 = vld [vmem:[%s680] sm:$0x3]
      %v683 = vsel %vm410, %v672, 0
      %v686 = vsel %vm410, %v673, 0
      %v689 = vsel %vm410, %v674, 0
      %v692 = vsel %vm410, %v675, 0
      %v695 = vsel %vm410, %v676, 0
      %v698 = vsel %vm410, %v677, 0
      %v701 = vsel %vm410, %v678, 0
      %v704 = vsel %vm410, %v679, 0
      %vm706 = vcmask 1041408
      %v708 = vsel %vm706, %v681, 0
      %710 = vmatprep.subr.mxu0 0.0
      %711 = vmatpush1.msra.mxu0 %v708
      %712 = vmatprep.subr.mxu0 0.0
      %713 = vmatpush1.msra.mxu0 0.0
      %714 = vmatprep.subr.mxu0 0.0
      %715 = vmatpush1.msra.mxu0 0.0
      %716 = vmatprep.subr.mxu0 0.0
      %717 = vmatpush1.msra.mxu0 0.0
      %718 = vmatprep.subr.mxu0 0.0
      %719 = vmatpush1.msra.mxu0 0.0
      %720 = vmatprep.subr.mxu0 0.0
      %721 = vmatpush1.msra.mxu0 0.0
      %722 = vmatprep.subr.mxu0 0.0
      %723 = vmatpush1.msra.mxu0 0.0
      %724 = vmatprep.subr.mxu0 0.0
      %725 = vmatpush1.msra.mxu0 0.0
      %726 = vmatprep.subr.mxu0 0.0
      %727 = vmatpush1.msra.mxu0 0.0
      %728 = vmatprep.subr.mxu0 0.0
      %729 = vmatpush1.msra.mxu0 0.0
      %730 = vmatprep.subr.mxu0 0.0
      %731 = vmatpush1.msra.mxu0 0.0
      %732 = vmatprep.subr.mxu0 0.0
      %733 = vmatpush1.msra.mxu0 0.0
      %734 = vmatprep.subr.mxu0 0.0
      %735 = vmatpush1.msra.mxu0 0.0
      %736 = vmatprep.subr.mxu0 0.0
      %737 = vmatpush1.msra.mxu0 0.0
      %738 = vmatprep.subr.mxu0 0.0
      %739 = vmatpush1.msra.mxu0 0.0
      %740 = vmatprep.subr.mxu0 0.0
      %741 = vmatpush1.msra.mxu0 0.0
      %742 = vmatprep.subr.mxu0 0.0
      %743 = vmatpush1.msra.mxu0 0.0
      %744 = vmatprep.subr.mxu0 0.0
      %745 = vmatpush1.msra.mxu0 0.0
      %746 = vmatprep.subr.mxu0 0.0
      %747 = vmatpush1.msra.mxu0 0.0
      %748 = vmatprep.subr.mxu0 0.0
      %749 = vmatpush1.msra.mxu0 0.0
      %750 = vmatprep.subr.mxu0 0.0
      %751 = vmatpush1.msra.mxu0 0.0
      %752 = vmatprep.subr.mxu0 0.0
      %753 = vmatpush1.msra.mxu0 0.0
      %754 = vmatprep.subr.mxu0 0.0
      %755 = vmatpush1.msra.mxu0 0.0
      %756 = vmatprep.subr.mxu0 0.0
      %757 = vmatpush1.msra.mxu0 0.0
      %758 = vmatprep.subr.mxu0 0.0
      %759 = vmatpush1.msra.mxu0 0.0
      %760 = vmatprep.subr.mxu0 0.0
      %761 = vmatpush1.msra.mxu0 0.0
      %762 = vmatprep.subr.mxu0 0.0
      %763 = vmatpush1.msra.mxu0 0.0
      %764 = vmatprep.subr.mxu0 0.0
      %765 = vmatpush1.msra.mxu0 0.0
      %766 = vmatprep.subr.mxu0 0.0
      %767 = vmatpush1.msra.mxu0 0.0
      %768 = vmatprep.subr.mxu0 0.0
      %769 = vmatpush1.msra.mxu0 0.0
      %770 = vmatprep.subr.mxu0 0.0
      %771 = vmatpush1.msra.mxu0 0.0
      %772 = vmatprep.subr.mxu0 0.0
      %773 = vmatpush1.msra.mxu0 0.0
      %774 = vmatprep.mubr.f32.mxu0 0.0
      %775 = vmatmul.mubr.f32.gmra.mrb[0].mxu0 %v683
      %v776 = vpop.f32.mrb[0].mxu0
      %v777 = vadd.f32 0.0, %v776
      %v778 = vpop.f32.mrb[0].mxu0
      %779 = vmatprep.mubr.f32.mxu0 0.0
      %780 = vmatmul.mubr.f32.gmra.mrb[0].mxu0 %v686
      %v781 = vpop.f32.mrb[0].mxu0
      %v782 = vadd.f32 0.0, %v781
      %v783 = vpop.f32.mrb[0].mxu0
      %784 = vmatprep.mubr.f32.mxu0 0.0
      %785 = vmatmul.mubr.f32.gmra.mrb[0].mxu0 %v689
      %v786 = vpop.f32.mrb[0].mxu0
      %v787 = vadd.f32 0.0, %v786
      %v788 = vpop.f32.mrb[0].mxu0
      %789 = vmatprep.mubr.f32.mxu0 0.0
      %790 = vmatmul.mubr.f32.gmra.mrb[0].mxu0 %v692
      %v791 = vpop.f32.mrb[0].mxu0
      %v792 = vadd.f32 0.0, %v791
      %v793 = vpop.f32.mrb[0].mxu0
      %794 = vmatprep.mubr.f32.mxu0 0.0
      %795 = vmatmul.mubr.f32.gmra.mrb[0].mxu0 %v695
      %v796 = vpop.f32.mrb[0].mxu0
      %v797 = vadd.f32 0.0, %v796
      %v798 = vpop.f32.mrb[0].mxu0
      %799 = vmatprep.mubr.f32.mxu0 0.0
      %800 = vmatmul.mubr.f32.gmra.mrb[0].mxu0 %v698
      %v801 = vpop.f32.mrb[0].mxu0
      %v802 = vadd.f32 0.0, %v801
      %v803 = vpop.f32.mrb[0].mxu0
      %804 = vmatprep.mubr.f32.mxu0 0.0
      %805 = vmatmul.mubr.f32.gmra.mrb[0].mxu0 %v701
      %v806 = vpop.f32.mrb[0].mxu0
      %v807 = vadd.f32 0.0, %v806
      %v808 = vpop.f32.mrb[0].mxu0
      %809 = vmatprep.mubr.f32.mxu0 0.0
      %810 = vmatmul.mubr.f32.gmra.mrb[0].mxu0 %v704
      %v811 = vpop.f32.mrb[0].mxu0
      %v812 = vadd.f32 0.0, %v811
      %v813 = vpop.f32.mrb[0].mxu0
      %814 = vdwg.mxu0
      %v816 = vsel %vm410, %v662, 0
      %v819 = vsel %vm410, %v663, 0
      %v822 = vsel %vm410, %v664, 0
      %v825 = vsel %vm410, %v665, 0
      %v828 = vsel %vm410, %v666, 0
      %v831 = vsel %vm410, %v667, 0
      %v834 = vsel %vm410, %v668, 0
      %v837 = vsel %vm410, %v669, 0
      %v840 = vsel %vm706, %v670, 0
      %842 = vmatprep.subr.mxu0 0.0
      %843 = vmatpush1.msra.mxu0 %v840
      %844 = vmatprep.subr.mxu0 0.0
      %845 = vmatpush1.msra.mxu0 0.0
      %846 = vmatprep.subr.mxu0 0.0
      %847 = vmatpush1.msra.mxu0 0.0
      %848 = vmatprep.subr.mxu0 0.0
      %849 = vmatpush1.msra.mxu0 0.0
      %850 = vmatprep.subr.mxu0 0.0
      %851 = vmatpush1.msra.mxu0 0.0
      %852 = vmatprep.subr.mxu0 0.0
      %853 = vmatpush1.msra.mxu0 0.0
      %854 = vmatprep.subr.mxu0 0.0
      %855 = vmatpush1.msra.mxu0 0.0
      %856 = vmatprep.subr.mxu0 0.0
      %857 = vmatpush1.msra.mxu0 0.0
      %858 = vmatprep.subr.mxu0 0.0
      %859 = vmatpush1.msra.mxu0 0.0
      %860 = vmatprep.subr.mxu0 0.0
      %861 = vmatpush1.msra.mxu0 0.0
      %862 = vmatprep.subr.mxu0 0.0
      %863 = vmatpush1.msra.mxu0 0.0
      %864 = vmatprep.subr.mxu0 0.0
      %865 = vmatpush1.msra.mxu0 0.0
      %866 = vmatprep.subr.mxu0 0.0
      %867 = vmatpush1.msra.mxu0 0.0
      %868 = vmatprep.subr.mxu0 0.0
      %869 = vmatpush1.msra.mxu0 0.0
      %870 = vmatprep.subr.mxu0 0.0
      %871 = vmatpush1.msra.mxu0 0.0
      %872 = vmatprep.subr.mxu0 0.0
      %873 = vmatpush1.msra.mxu0 0.0
      %874 = vmatprep.subr.mxu0 0.0
      %875 = vmatpush1.msra.mxu0 0.0
      %876 = vmatprep.subr.mxu0 0.0
      %877 = vmatpush1.msra.mxu0 0.0
      %878 = vmatprep.subr.mxu0 0.0
      %879 = vmatpush1.msra.mxu0 0.0
      %880 = vmatprep.subr.mxu0 0.0
      %881 = vmatpush1.msra.mxu0 0.0
      %882 = vmatprep.subr.mxu0 0.0
      %883 = vmatpush1.msra.mxu0 0.0
      %884 = vmatprep.subr.mxu0 0.0
      %885 = vmatpush1.msra.mxu0 0.0
      %886 = vmatprep.subr.mxu0 0.0
      %887 = vmatpush1.msra.mxu0 0.0
      %888 = vmatprep.subr.mxu0 0.0
      %889 = vmatpush1.msra.mxu0 0.0
      %890 = vmatprep.subr.mxu0 0.0
      %891 = vmatpush1.msra.mxu0 0.0
      %892 = vmatprep.subr.mxu0 0.0
      %893 = vmatpush1.msra.mxu0 0.0
      %894 = vmatprep.subr.mxu0 0.0
      %895 = vmatpush1.msra.mxu0 0.0
      %896 = vmatprep.subr.mxu0 0.0
      %897 = vmatpush1.msra.mxu0 0.0
      %898 = vmatprep.subr.mxu0 0.0
      %899 = vmatpush1.msra.mxu0 0.0
      %900 = vmatprep.subr.mxu0 0.0
      %901 = vmatpush1.msra.mxu0 0.0
      %902 = vmatprep.subr.mxu0 0.0
      %903 = vmatpush1.msra.mxu0 0.0
      %904 = vmatprep.subr.mxu0 0.0
      %905 = vmatpush1.msra.mxu0 0.0
      %906 = vmatprep.mubr.f32.mxu0 0.0
      %907 = vmatmul.mubr.f32.gmra.mrb[0].mxu0 %v816
      %v908 = vpop.f32.mrb[0].mxu0
      %v909 = vadd.f32 %v777, %v908
      %v910 = vpop.f32.mrb[0].mxu0
      %911 = vmatprep.mubr.f32.mxu0 0.0
      %912 = vmatmul.mubr.f32.gmra.mrb[0].mxu0 %v819
      %v913 = vpop.f32.mrb[0].mxu0
      %v914 = vadd.f32 %v782, %v913
      %v915 = vpop.f32.mrb[0].mxu0
      %916 = vmatprep.mubr.f32.mxu0 0.0
      %917 = vmatmul.mubr.f32.gmra.mrb[0].mxu0 %v822
      %v918 = vpop.f32.mrb[0].mxu0
      %v919 = vadd.f32 %v787, %v918
      %v920 = vpop.f32.mrb[0].mxu0
      %921 = vmatprep.mubr.f32.mxu0 0.0
      %922 = vmatmul.mubr.f32.gmra.mrb[0].mxu0 %v825
      %v923 = vpop.f32.mrb[0].mxu0
      %v924 = vadd.f32 %v792, %v923
      %v925 = vpop.f32.mrb[0].mxu0
      %926 = vmatprep.mubr.f32.mxu0 0.0
      %927 = vmatmul.mubr.f32.gmra.mrb[0].mxu0 %v828
      %v928 = vpop.f32.mrb[0].mxu0
      %v929 = vadd.f32 %v797, %v928
      %v930 = vpop.f32.mrb[0].mxu0
      %931 = vmatprep.mubr.f32.mxu0 0.0
      %932 = vmatmul.mubr.f32.gmra.mrb[0].mxu0 %v831
      %v933 = vpop.f32.mrb[0].mxu0
      %v934 = vadd.f32 %v802, %v933
      %v935 = vpop.f32.mrb[0].mxu0
      %936 = vmatprep.mubr.f32.mxu0 0.0
      %937 = vmatmul.mubr.f32.gmra.mrb[0].mxu0 %v834
      %v938 = vpop.f32.mrb[0].mxu0
      %v939 = vadd.f32 %v807, %v938
      %v940 = vpop.f32.mrb[0].mxu0
      %941 = vmatprep.mubr.f32.mxu0 0.0
      %942 = vmatmul.mubr.f32.gmra.mrb[0].mxu0 %v837
      %v943 = vpop.f32.mrb[0].mxu0
      %v944 = vadd.f32 %v812, %v943
      %v945 = vpop.f32.mrb[0].mxu0
      %946 = vdwg.mxu0
      %v947 = vld [vmem:[#allocation2 + $0x1] sm:$0xff]
      %v948 = vld [vmem:[#allocation2 + $0x11] sm:$0xff]
      %v949 = vld [vmem:[#allocation2 + $0x21] sm:$0xff]
      %v950 = vld [vmem:[#allocation2 + $0x31] sm:$0xff]
      %v951 = vld [vmem:[#allocation2 + $0x41] sm:$0xff]
      %v952 = vld [vmem:[#allocation2 + $0x51] sm:$0xff]
      %v953 = vld [vmem:[#allocation2 + $0x61] sm:$0xff]
      %v954 = vld [vmem:[#allocation2 + $0x71] sm:$0xff]
      %s955 = scalar_lea.vmem %s4, 4
      %v956 = vld [vmem:[%s955] sm:$0x3]
      %v958 = vsel %vm410, %v947, 0
      %v961 = vsel %vm410, %v948, 0
      %v964 = vsel %vm410, %v949, 0
      %v967 = vsel %vm410, %v950, 0
      %v970 = vsel %vm410, %v951, 0
      %v973 = vsel %vm410, %v952, 0
      %v976 = vsel %vm410, %v953, 0
      %v979 = vsel %vm410, %v954, 0
      %v982 = vsel %vm706, %v956, 0
      %984 = vmatprep.subr.mxu0 0.0
      %985 = vmatpush1.msra.mxu0 %v982
      %986 = vmatprep.subr.mxu0 0.0
      %987 = vmatpush1.msra.mxu0 0.0
      %988 = vmatprep.subr.mxu0 0.0
      %989 = vmatpush1.msra.mxu0 0.0
      %990 = vmatprep.subr.mxu0 0.0
      %991 = vmatpush1.msra.mxu0 0.0
      %992 = vmatprep.subr.mxu0 0.0
      %993 = vmatpush1.msra.mxu0 0.0
      %994 = vmatprep.subr.mxu0 0.0
      %995 = vmatpush1.msra.mxu0 0.0
      %996 = vmatprep.subr.mxu0 0.0
      %997 = vmatpush1.msra.mxu0 0.0
      %998 = vmatprep.subr.mxu0 0.0
      %999 = vmatpush1.msra.mxu0 0.0
      %1000 = vmatprep.subr.mxu0 0.0
      %1001 = vmatpush1.msra.mxu0 0.0
      %1002 = vmatprep.subr.mxu0 0.0
      %1003 = vmatpush1.msra.mxu0 0.0
      %1004 = vmatprep.subr.mxu0 0.0
      %1005 = vmatpush1.msra.mxu0 0.0
      %1006 = vmatprep.subr.mxu0 0.0
      %1007 = vmatpush1.msra.mxu0 0.0
      %1008 = vmatprep.subr.mxu0 0.0
      %1009 = vmatpush1.msra.mxu0 0.0
      %1010 = vmatprep.subr.mxu0 0.0
      %1011 = vmatpush1.msra.mxu0 0.0
      %1012 = vmatprep.subr.mxu0 0.0
      %1013 = vmatpush1.msra.mxu0 0.0
      %1014 = vmatprep.subr.mxu0 0.0
      %1015 = vmatpush1.msra.mxu0 0.0
      %1016 = vmatprep.subr.mxu0 0.0
      %1017 = vmatpush1.msra.mxu0 0.0
      %1018 = vmatprep.subr.mxu0 0.0
      %1019 = vmatpush1.msra.mxu0 0.0
      %1020 = vmatprep.subr.mxu0 0.0
      %1021 = vmatpush1.msra.mxu0 0.0
      %1022 = vmatprep.subr.mxu0 0.0
      %1023 = vmatpush1.msra.mxu0 0.0
      %1024 = vmatprep.subr.mxu0 0.0
      %1025 = vmatpush1.msra.mxu0 0.0
      %1026 = vmatprep.subr.mxu0 0.0
      %1027 = vmatpush1.msra.mxu0 0.0
      %1028 = vmatprep.subr.mxu0 0.0
      %1029 = vmatpush1.msra.mxu0 0.0
      %1030 = vmatprep.subr.mxu0 0.0
      %1031 = vmatpush1.msra.mxu0 0.0
      %1032 = vmatprep.subr.mxu0 0.0
      %1033 = vmatpush1.msra.mxu0 0.0
      %1034 = vmatprep.subr.mxu0 0.0
      %1035 = vmatpush1.msra.mxu0 0.0
      %1036 = vmatprep.subr.mxu0 0.0
      %1037 = vmatpush1.msra.mxu0 0.0
      %1038 = vmatprep.subr.mxu0 0.0
      %1039 = vmatpush1.msra.mxu0 0.0
      %1040 = vmatprep.subr.mxu0 0.0
      %1041 = vmatpush1.msra.mxu0 0.0
      %1042 = vmatprep.subr.mxu0 0.0
      %1043 = vmatpush1.msra.mxu0 0.0
      %1044 = vmatprep.subr.mxu0 0.0
      %1045 = vmatpush1.msra.mxu0 0.0
      %1046 = vmatprep.subr.mxu0 0.0
      %1047 = vmatpush1.msra.mxu0 0.0
      %1048 = vmatprep.mubr.f32.mxu0 0.0
      %1049 = vmatmul.mubr.f32.gmra.mrb[0].mxu0 %v958
      %v1050 = vpop.f32.mrb[0].mxu0
      %v1051 = vadd.f32 0.0, %v1050
      %v1052 = vpop.f32.mrb[0].mxu0
      %1053 = vmatprep.mubr.f32.mxu0 0.0
      %1054 = vmatmul.mubr.f32.gmra.mrb[0].mxu0 %v961
      %v1055 = vpop.f32.mrb[0].mxu0
      %v1056 = vadd.f32 0.0, %v1055
      %v1057 = vpop.f32.mrb[0].mxu0
      %1058 = vmatprep.mubr.f32.mxu0 0.0
      %1059 = vmatmul.mubr.f32.gmra.mrb[0].mxu0 %v964
      %v1060 = vpop.f32.mrb[0].mxu0
      %v1061 = vadd.f32 0.0, %v1060
      %v1062 = vpop.f32.mrb[0].mxu0
      %1063 = vmatprep.mubr.f32.mxu0 0.0
      %1064 = vmatmul.mubr.f32.gmra.mrb[0].mxu0 %v967
      %v1065 = vpop.f32.mrb[0].mxu0
      %v1066 = vadd.f32 0.0, %v1065
      %v1067 = vpop.f32.mrb[0].mxu0
      %1068 = vmatprep.mubr.f32.mxu0 0.0
      %1069 = vmatmul.mubr.f32.gmra.mrb[0].mxu0 %v970
      %v1070 = vpop.f32.mrb[0].mxu0
      %v1071 = vadd.f32 0.0, %v1070
      %v1072 = vpop.f32.mrb[0].mxu0
      %1073 = vmatprep.mubr.f32.mxu0 0.0
      %1074 = vmatmul.mubr.f32.gmra.mrb[0].mxu0 %v973
      %v1075 = vpop.f32.mrb[0].mxu0
      %v1076 = vadd.f32 0.0, %v1075
      %v1077 = vpop.f32.mrb[0].mxu0
      %1078 = vmatprep.mubr.f32.mxu0 0.0
      %1079 = vmatmul.mubr.f32.gmra.mrb[0].mxu0 %v976
      %v1080 = vpop.f32.mrb[0].mxu0
      %v1081 = vadd.f32 0.0, %v1080
      %v1082 = vpop.f32.mrb[0].mxu0
      %1083 = vmatprep.mubr.f32.mxu0 0.0
      %1084 = vmatmul.mubr.f32.gmra.mrb[0].mxu0 %v979
      %v1085 = vpop.f32.mrb[0].mxu0
      %v1086 = vadd.f32 0.0, %v1085
      %v1087 = vpop.f32.mrb[0].mxu0
      %1088 = vdwg.mxu0
      %v1089 = vadd.f32 %v909, %v1051
      %v1090 = vadd.f32 %v914, %v1056
      %v1091 = vadd.f32 %v919, %v1061
      %v1092 = vadd.f32 %v924, %v1066
      %v1093 = vadd.f32 %v929, %v1071
      %v1094 = vadd.f32 %v934, %v1076
      %v1095 = vadd.f32 %v939, %v1081
      %v1096 = vadd.f32 %v944, %v1086
      %v1097 = vld [vmem:[%s612] sm:$0xff]
      %v1098 = vld [vmem:[%s612 + $0x10] sm:$0xff]
      %v1099 = vld [vmem:[%s612 + $0x20] sm:$0xff]
      %v1100 = vld [vmem:[%s612 + $0x30] sm:$0xff]
      %v1101 = vld [vmem:[%s612 + $0x40] sm:$0xff]
      %v1102 = vld [vmem:[%s612 + $0x50] sm:$0xff]
      %v1103 = vld [vmem:[%s612 + $0x60] sm:$0xff]
      %v1104 = vld [vmem:[%s612 + $0x70] sm:$0xff]
      %s1105 = scalar_lea.vmem %s4, 6
      %v1106 = vld [vmem:[%s1105] sm:$0x3]
      %v1108 = vsel %vm410, %v1097, 0
      %v1111 = vsel %vm410, %v1098, 0
      %v1114 = vsel %vm410, %v1099, 0
      %v1117 = vsel %vm410, %v1100, 0
      %v1120 = vsel %vm410, %v1101, 0
      %v1123 = vsel %vm410, %v1102, 0
      %v1126 = vsel %vm410, %v1103, 0
      %v1129 = vsel %vm410, %v1104, 0
      %v1132 = vsel %vm706, %v1106, 0
      %1134 = vmatprep.subr.mxu0 0.0
      %1135 = vmatpush1.msra.mxu0 %v1132
      %1136 = vmatprep.subr.mxu0 0.0
      %1137 = vmatpush1.msra.mxu0 0.0
      %1138 = vmatprep.subr.mxu0 0.0
      %1139 = vmatpush1.msra.mxu0 0.0
      %1140 = vmatprep.subr.mxu0 0.0
      %1141 = vmatpush1.msra.mxu0 0.0
      %1142 = vmatprep.subr.mxu0 0.0
      %1143 = vmatpush1.msra.mxu0 0.0
      %1144 = vmatprep.subr.mxu0 0.0
      %1145 = vmatpush1.msra.mxu0 0.0
      %1146 = vmatprep.subr.mxu0 0.0
      %1147 = vmatpush1.msra.mxu0 0.0
      %1148 = vmatprep.subr.mxu0 0.0
      %1149 = vmatpush1.msra.mxu0 0.0
      %1150 = vmatprep.subr.mxu0 0.0
      %1151 = vmatpush1.msra.mxu0 0.0
      %1152 = vmatprep.subr.mxu0 0.0
      %1153 = vmatpush1.msra.mxu0 0.0
      %1154 = vmatprep.subr.mxu0 0.0
      %1155 = vmatpush1.msra.mxu0 0.0
      %1156 = vmatprep.subr.mxu0 0.0
      %1157 = vmatpush1.msra.mxu0 0.0
      %1158 = vmatprep.subr.mxu0 0.0
      %1159 = vmatpush1.msra.mxu0 0.0
      %1160 = vmatprep.subr.mxu0 0.0
      %1161 = vmatpush1.msra.mxu0 0.0
      %1162 = vmatprep.subr.mxu0 0.0
      %1163 = vmatpush1.msra.mxu0 0.0
      %1164 = vmatprep.subr.mxu0 0.0
      %1165 = vmatpush1.msra.mxu0 0.0
      %1166 = vmatprep.subr.mxu0 0.0
      %1167 = vmatpush1.msra.mxu0 0.0
      %1168 = vmatprep.subr.mxu0 0.0
      %1169 = vmatpush1.msra.mxu0 0.0
      %1170 = vmatprep.subr.mxu0 0.0
      %1171 = vmatpush1.msra.mxu0 0.0
      %1172 = vmatprep.subr.mxu0 0.0
      %1173 = vmatpush1.msra.mxu0 0.0
      %1174 = vmatprep.subr.mxu0 0.0
      %1175 = vmatpush1.msra.mxu0 0.0
      %1176 = vmatprep.subr.mxu0 0.0
      %1177 = vmatpush1.msra.mxu0 0.0
      %1178 = vmatprep.subr.mxu0 0.0
      %1179 = vmatpush1.msra.mxu0 0.0
      %1180 = vmatprep.subr.mxu0 0.0
      %1181 = vmatpush1.msra.mxu0 0.0
      %1182 = vmatprep.subr.mxu0 0.0
      %1183 = vmatpush1.msra.mxu0 0.0
      %1184 = vmatprep.subr.mxu0 0.0
      %1185 = vmatpush1.msra.mxu0 0.0
      %1186 = vmatprep.subr.mxu0 0.0
      %1187 = vmatpush1.msra.mxu0 0.0
      %1188 = vmatprep.subr.mxu0 0.0
      %1189 = vmatpush1.msra.mxu0 0.0
      %1190 = vmatprep.subr.mxu0 0.0
      %1191 = vmatpush1.msra.mxu0 0.0
      %1192 = vmatprep.subr.mxu0 0.0
      %1193 = vmatpush1.msra.mxu0 0.0
      %1194 = vmatprep.subr.mxu0 0.0
      %1195 = vmatpush1.msra.mxu0 0.0
      %1196 = vmatprep.subr.mxu0 0.0
      %1197 = vmatpush1.msra.mxu0 0.0
      %1198 = vmatprep.mubr.f32.mxu0 0.0
      %1199 = vmatmul.mubr.f32.gmra.mrb[0].mxu0 %v1108
      %v1200 = vpop.f32.mrb[0].mxu0
      %v1201 = vadd.f32 0.0, %v1200
      %v1202 = vpop.f32.mrb[0].mxu0
      %1203 = vmatprep.mubr.f32.mxu0 0.0
      %1204 = vmatmul.mubr.f32.gmra.mrb[0].mxu0 %v1111
      %v1205 = vpop.f32.mrb[0].mxu0
      %v1206 = vadd.f32 0.0, %v1205
      %v1207 = vpop.f32.mrb[0].mxu0
      %1208 = vmatprep.mubr.f32.mxu0 0.0
      %1209 = vmatmul.mubr.f32.gmra.mrb[0].mxu0 %v1114
      %v1210 = vpop.f32.mrb[0].mxu0
      %v1211 = vadd.f32 0.0, %v1210
      %v1212 = vpop.f32.mrb[0].mxu0
      %1213 = vmatprep.mubr.f32.mxu0 0.0
      %1214 = vmatmul.mubr.f32.gmra.mrb[0].mxu0 %v1117
      %v1215 = vpop.f32.mrb[0].mxu0
      %v1216 = vadd.f32 0.0, %v1215
      %v1217 = vpop.f32.mrb[0].mxu0
      %1218 = vmatprep.mubr.f32.mxu0 0.0
      %1219 = vmatmul.mubr.f32.gmra.mrb[0].mxu0 %v1120
      %v1220 = vpop.f32.mrb[0].mxu0
      %v1221 = vadd.f32 0.0, %v1220
      %v1222 = vpop.f32.mrb[0].mxu0
      %1223 = vmatprep.mubr.f32.mxu0 0.0
      %1224 = vmatmul.mubr.f32.gmra.mrb[0].mxu0 %v1123
      %v1225 = vpop.f32.mrb[0].mxu0
      %v1226 = vadd.f32 0.0, %v1225
      %v1227 = vpop.f32.mrb[0].mxu0
      %1228 = vmatprep.mubr.f32.mxu0 0.0
      %1229 = vmatmul.mubr.f32.gmra.mrb[0].mxu0 %v1126
      %v1230 = vpop.f32.mrb[0].mxu0
      %v1231 = vadd.f32 0.0, %v1230
      %v1232 = vpop.f32.mrb[0].mxu0
      %1233 = vmatprep.mubr.f32.mxu0 0.0
      %1234 = vmatmul.mubr.f32.gmra.mrb[0].mxu0 %v1129
      %v1235 = vpop.f32.mrb[0].mxu0
      %v1236 = vadd.f32 0.0, %v1235
      %v1237 = vpop.f32.mrb[0].mxu0
      %1238 = vdwg.mxu0
      %v1239 = vadd.f32 %v1089, %v1201
      %v1240 = vadd.f32 %v1090, %v1206
      %v1241 = vadd.f32 %v1091, %v1211
      %v1242 = vadd.f32 %v1092, %v1216
      %v1243 = vadd.f32 %v1093, %v1221
      %v1244 = vadd.f32 %v1094, %v1226
      %v1245 = vadd.f32 %v1095, %v1231
      %v1246 = vadd.f32 %v1096, %v1236
      %v1247 = vld [vmem:[%s653] sm:$0xff]
      %v1248 = vld [vmem:[%s653 + $0x10] sm:$0xff]
      %v1249 = vld [vmem:[%s653 + $0x20] sm:$0xff]
      %v1250 = vld [vmem:[%s653 + $0x30] sm:$0xff]
      %v1251 = vld [vmem:[%s653 + $0x40] sm:$0xff]
      %v1252 = vld [vmem:[%s653 + $0x50] sm:$0xff]
      %v1253 = vld [vmem:[%s653 + $0x60] sm:$0xff]
      %v1254 = vld [vmem:[%s653 + $0x70] sm:$0xff]
      %s1255 = scalar_lea.vmem %s4, 8
      %v1256 = vld [vmem:[%s1255] sm:$0x3]
      %v1258 = vsel %vm410, %v1247, 0
      %v1261 = vsel %vm410, %v1248, 0
      %v1264 = vsel %vm410, %v1249, 0
      %v1267 = vsel %vm410, %v1250, 0
      %v1270 = vsel %vm410, %v1251, 0
      %v1273 = vsel %vm410, %v1252, 0
      %v1276 = vsel %vm410, %v1253, 0
      %v1279 = vsel %vm410, %v1254, 0
      %v1282 = vsel %vm706, %v1256, 0
      %1284 = vmatprep.subr.mxu0 0.0
      %1285 = vmatpush1.msra.mxu0 %v1282
      %1286 = vmatprep.subr.mxu0 0.0
      %1287 = vmatpush1.msra.mxu0 0.0
      %1288 = vmatprep.subr.mxu0 0.0
      %1289 = vmatpush1.msra.mxu0 0.0
      %1290 = vmatprep.subr.mxu0 0.0
      %1291 = vmatpush1.msra.mxu0 0.0
      %1292 = vmatprep.subr.mxu0 0.0
      %1293 = vmatpush1.msra.mxu0 0.0
      %1294 = vmatprep.subr.mxu0 0.0
      %1295 = vmatpush1.msra.mxu0 0.0
      %1296 = vmatprep.subr.mxu0 0.0
      %1297 = vmatpush1.msra.mxu0 0.0
      %1298 = vmatprep.subr.mxu0 0.0
      %1299 = vmatpush1.msra.mxu0 0.0
      %1300 = vmatprep.subr.mxu0 0.0
      %1301 = vmatpush1.msra.mxu0 0.0
      %1302 = vmatprep.subr.mxu0 0.0
      %1303 = vmatpush1.msra.mxu0 0.0
      %1304 = vmatprep.subr.mxu0 0.0
      %1305 = vmatpush1.msra.mxu0 0.0
      %1306 = vmatprep.subr.mxu0 0.0
      %1307 = vmatpush1.msra.mxu0 0.0
      %1308 = vmatprep.subr.mxu0 0.0
      %1309 = vmatpush1.msra.mxu0 0.0
      %1310 = vmatprep.subr.mxu0 0.0
      %1311 = vmatpush1.msra.mxu0 0.0
      %1312 = vmatprep.subr.mxu0 0.0
      %1313 = vmatpush1.msra.mxu0 0.0
      %1314 = vmatprep.subr.mxu0 0.0
      %1315 = vmatpush1.msra.mxu0 0.0
      %1316 = vmatprep.subr.mxu0 0.0
      %1317 = vmatpush1.msra.mxu0 0.0
      %1318 = vmatprep.subr.mxu0 0.0
      %1319 = vmatpush1.msra.mxu0 0.0
      %1320 = vmatprep.subr.mxu0 0.0
      %1321 = vmatpush1.msra.mxu0 0.0
      %1322 = vmatprep.subr.mxu0 0.0
      %1323 = vmatpush1.msra.mxu0 0.0
      %1324 = vmatprep.subr.mxu0 0.0
      %1325 = vmatpush1.msra.mxu0 0.0
      %1326 = vmatprep.subr.mxu0 0.0
      %1327 = vmatpush1.msra.mxu0 0.0
      %1328 = vmatprep.subr.mxu0 0.0
      %1329 = vmatpush1.msra.mxu0 0.0
      %1330 = vmatprep.subr.mxu0 0.0
      %1331 = vmatpush1.msra.mxu0 0.0
      %1332 = vmatprep.subr.mxu0 0.0
      %1333 = vmatpush1.msra.mxu0 0.0
      %1334 = vmatprep.subr.mxu0 0.0
      %1335 = vmatpush1.msra.mxu0 0.0
      %1336 = vmatprep.subr.mxu0 0.0
      %1337 = vmatpush1.msra.mxu0 0.0
      %1338 = vmatprep.subr.mxu0 0.0
      %1339 = vmatpush1.msra.mxu0 0.0
      %1340 = vmatprep.subr.mxu0 0.0
      %1341 = vmatpush1.msra.mxu0 0.0
      %1342 = vmatprep.subr.mxu0 0.0
      %1343 = vmatpush1.msra.mxu0 0.0
      %1344 = vmatprep.subr.mxu0 0.0
      %1345 = vmatpush1.msra.mxu0 0.0
      %1346 = vmatprep.subr.mxu0 0.0
      %1347 = vmatpush1.msra.mxu0 0.0
      %1348 = vmatprep.mubr.f32.mxu0 0.0
      %1349 = vmatmul.mubr.f32.gmra.mrb[0].mxu0 %v1258
      %v1350 = vpop.f32.mrb[0].mxu0
      %v1351 = vadd.f32 0.0, %v1350
      %v1352 = vpop.f32.mrb[0].mxu0
      %1353 = vmatprep.mubr.f32.mxu0 0.0
      %1354 = vmatmul.mubr.f32.gmra.mrb[0].mxu0 %v1261
      %v1355 = vpop.f32.mrb[0].mxu0
      %v1356 = vadd.f32 0.0, %v1355
      %v1357 = vpop.f32.mrb[0].mxu0
      %1358 = vmatprep.mubr.f32.mxu0 0.0
      %1359 = vmatmul.mubr.f32.gmra.mrb[0].mxu0 %v1264
      %v1360 = vpop.f32.mrb[0].mxu0
      %v1361 = vadd.f32 0.0, %v1360
      %v1362 = vpop.f32.mrb[0].mxu0
      %1363 = vmatprep.mubr.f32.mxu0 0.0
      %1364 = vmatmul.mubr.f32.gmra.mrb[0].mxu0 %v1267
      %v1365 = vpop.f32.mrb[0].mxu0
      %v1366 = vadd.f32 0.0, %v1365
      %v1367 = vpop.f32.mrb[0].mxu0
      %1368 = vmatprep.mubr.f32.mxu0 0.0
      %1369 = vmatmul.mubr.f32.gmra.mrb[0].mxu0 %v1270
      %v1370 = vpop.f32.mrb[0].mxu0
      %v1371 = vadd.f32 0.0, %v1370
      %v1372 = vpop.f32.mrb[0].mxu0
      %1373 = vmatprep.mubr.f32.mxu0 0.0
      %1374 = vmatmul.mubr.f32.gmra.mrb[0].mxu0 %v1273
      %v1375 = vpop.f32.mrb[0].mxu0
      %v1376 = vadd.f32 0.0, %v1375
      %v1377 = vpop.f32.mrb[0].mxu0
      %1378 = vmatprep.mubr.f32.mxu0 0.0
      %1379 = vmatmul.mubr.f32.gmra.mrb[0].mxu0 %v1276
      %v1380 = vpop.f32.mrb[0].mxu0
      %v1381 = vadd.f32 0.0, %v1380
      %v1382 = vpop.f32.mrb[0].mxu0
      %1383 = vmatprep.mubr.f32.mxu0 0.0
      %1384 = vmatmul.mubr.f32.gmra.mrb[0].mxu0 %v1279
      %v1385 = vpop.f32.mrb[0].mxu0
      %v1386 = vadd.f32 0.0, %v1385
      %v1387 = vpop.f32.mrb[0].mxu0
      %1388 = vdwg.mxu0
      %v1389 = vadd.f32 %v1239, %v1351
      %v1390 = vadd.f32 %v1240, %v1356
      %v1391 = vadd.f32 %v1241, %v1361
      %v1392 = vadd.f32 %v1242, %v1366
      %v1393 = vadd.f32 %v1243, %v1371
      %v1394 = vadd.f32 %v1244, %v1376
      %v1395 = vadd.f32 %v1245, %v1381
      %v1396 = vadd.f32 %v1246, %v1386
      %v1397 = vld [vmem:[%s612 + $0x1] sm:$0xff]
      %v1398 = vld [vmem:[%s612 + $0x11] sm:$0xff]
      %v1399 = vld [vmem:[%s612 + $0x21] sm:$0xff]
      %v1400 = vld [vmem:[%s612 + $0x31] sm:$0xff]
      %v1401 = vld [vmem:[%s612 + $0x41] sm:$0xff]
      %v1402 = vld [vmem:[%s612 + $0x51] sm:$0xff]
      %v1403 = vld [vmem:[%s612 + $0x61] sm:$0xff]
      %v1404 = vld [vmem:[%s612 + $0x71] sm:$0xff]
      %s1405 = scalar_lea.vmem %s4, 10
      %v1406 = vld [vmem:[%s1405] sm:$0x3]
      %v1408 = vsel %vm410, %v1397, 0
      %v1411 = vsel %vm410, %v1398, 0
      %v1414 = vsel %vm410, %v1399, 0
      %v1417 = vsel %vm410, %v1400, 0
      %v1420 = vsel %vm410, %v1401, 0
      %v1423 = vsel %vm410, %v1402, 0
      %v1426 = vsel %vm410, %v1403, 0
      %v1429 = vsel %vm410, %v1404, 0
      %v1432 = vsel %vm706, %v1406, 0
      %1434 = vmatprep.subr.mxu0 0.0
      %1435 = vmatpush1.msra.mxu0 %v1432
      %1436 = vmatprep.subr.mxu0 0.0
      %1437 = vmatpush1.msra.mxu0 0.0
      %1438 = vmatprep.subr.mxu0 0.0
      %1439 = vmatpush1.msra.mxu0 0.0
      %1440 = vmatprep.subr.mxu0 0.0
      %1441 = vmatpush1.msra.mxu0 0.0
      %1442 = vmatprep.subr.mxu0 0.0
      %1443 = vmatpush1.msra.mxu0 0.0
      %1444 = vmatprep.subr.mxu0 0.0
      %1445 = vmatpush1.msra.mxu0 0.0
      %1446 = vmatprep.subr.mxu0 0.0
      %1447 = vmatpush1.msra.mxu0 0.0
      %1448 = vmatprep.subr.mxu0 0.0
      %1449 = vmatpush1.msra.mxu0 0.0
      %1450 = vmatprep.subr.mxu0 0.0
      %1451 = vmatpush1.msra.mxu0 0.0
      %1452 = vmatprep.subr.mxu0 0.0
      %1453 = vmatpush1.msra.mxu0 0.0
      %1454 = vmatprep.subr.mxu0 0.0
      %1455 = vmatpush1.msra.mxu0 0.0
      %1456 = vmatprep.subr.mxu0 0.0
      %1457 = vmatpush1.msra.mxu0 0.0
      %1458 = vmatprep.subr.mxu0 0.0
      %1459 = vmatpush1.msra.mxu0 0.0
      %1460 = vmatprep.subr.mxu0 0.0
      %1461 = vmatpush1.msra.mxu0 0.0
      %1462 = vmatprep.subr.mxu0 0.0
      %1463 = vmatpush1.msra.mxu0 0.0
      %1464 = vmatprep.subr.mxu0 0.0
      %1465 = vmatpush1.msra.mxu0 0.0
      %1466 = vmatprep.subr.mxu0 0.0
      %1467 = vmatpush1.msra.mxu0 0.0
      %1468 = vmatprep.subr.mxu0 0.0
      %1469 = vmatpush1.msra.mxu0 0.0
      %1470 = vmatprep.subr.mxu0 0.0
      %1471 = vmatpush1.msra.mxu0 0.0
      %1472 = vmatprep.subr.mxu0 0.0
      %1473 = vmatpush1.msra.mxu0 0.0
      %1474 = vmatprep.subr.mxu0 0.0
      %1475 = vmatpush1.msra.mxu0 0.0
      %1476 = vmatprep.subr.mxu0 0.0
      %1477 = vmatpush1.msra.mxu0 0.0
      %1478 = vmatprep.subr.mxu0 0.0
      %1479 = vmatpush1.msra.mxu0 0.0
      %1480 = vmatprep.subr.mxu0 0.0
      %1481 = vmatpush1.msra.mxu0 0.0
      %1482 = vmatprep.subr.mxu0 0.0
      %1483 = vmatpush1.msra.mxu0 0.0
      %1484 = vmatprep.subr.mxu0 0.0
      %1485 = vmatpush1.msra.mxu0 0.0
      %1486 = vmatprep.subr.mxu0 0.0
      %1487 = vmatpush1.msra.mxu0 0.0
      %1488 = vmatprep.subr.mxu0 0.0
      %1489 = vmatpush1.msra.mxu0 0.0
      %1490 = vmatprep.subr.mxu0 0.0
      %1491 = vmatpush1.msra.mxu0 0.0
      %1492 = vmatprep.subr.mxu0 0.0
      %1493 = vmatpush1.msra.mxu0 0.0
      %1494 = vmatprep.subr.mxu0 0.0
      %1495 = vmatpush1.msra.mxu0 0.0
      %1496 = vmatprep.subr.mxu0 0.0
      %1497 = vmatpush1.msra.mxu0 0.0
      %1498 = vmatprep.mubr.f32.mxu0 0.0
      %1499 = vmatmul.mubr.f32.gmra.mrb[0].mxu0 %v1408
      %v1500 = vpop.f32.mrb[0].mxu0
      %v1501 = vadd.f32 0.0, %v1500
      %v1502 = vpop.f32.mrb[0].mxu0
      %1503 = vmatprep.mubr.f32.mxu0 0.0
      %1504 = vmatmul.mubr.f32.gmra.mrb[0].mxu0 %v1411
      %v1505 = vpop.f32.mrb[0].mxu0
      %v1506 = vadd.f32 0.0, %v1505
      %v1507 = vpop.f32.mrb[0].mxu0
      %1508 = vmatprep.mubr.f32.mxu0 0.0
      %1509 = vmatmul.mubr.f32.gmra.mrb[0].mxu0 %v1414
      %v1510 = vpop.f32.mrb[0].mxu0
      %v1511 = vadd.f32 0.0, %v1510
      %v1512 = vpop.f32.mrb[0].mxu0
      %1513 = vmatprep.mubr.f32.mxu0 0.0
      %1514 = vmatmul.mubr.f32.gmra.mrb[0].mxu0 %v1417
      %v1515 = vpop.f32.mrb[0].mxu0
      %v1516 = vadd.f32 0.0, %v1515
      %v1517 = vpop.f32.mrb[0].mxu0
      %1518 = vmatprep.mubr.f32.mxu0 0.0
      %1519 = vmatmul.mubr.f32.gmra.mrb[0].mxu0 %v1420
      %v1520 = vpop.f32.mrb[0].mxu0
      %v1521 = vadd.f32 0.0, %v1520
      %v1522 = vpop.f32.mrb[0].mxu0
      %1523 = vmatprep.mubr.f32.mxu0 0.0
      %1524 = vmatmul.mubr.f32.gmra.mrb[0].mxu0 %v1423
      %v1525 = vpop.f32.mrb[0].mxu0
      %v1526 = vadd.f32 0.0, %v1525
      %v1527 = vpop.f32.mrb[0].mxu0
      %1528 = vmatprep.mubr.f32.mxu0 0.0
      %1529 = vmatmul.mubr.f32.gmra.mrb[0].mxu0 %v1426
      %v1530 = vpop.f32.mrb[0].mxu0
      %v1531 = vadd.f32 0.0, %v1530
      %v1532 = vpop.f32.mrb[0].mxu0
      %1533 = vmatprep.mubr.f32.mxu0 0.0
      %1534 = vmatmul.mubr.f32.gmra.mrb[0].mxu0 %v1429
      %v1535 = vpop.f32.mrb[0].mxu0
      %v1536 = vadd.f32 0.0, %v1535
      %v1537 = vpop.f32.mrb[0].mxu0
      %1538 = vdwg.mxu0
      %v1539 = vadd.f32 %v1389, %v1501
      %v1540 = vadd.f32 %v1390, %v1506
      %v1541 = vadd.f32 %v1391, %v1511
      %v1542 = vadd.f32 %v1392, %v1516
      %v1543 = vadd.f32 %v1393, %v1521
      %v1544 = vadd.f32 %v1394, %v1526
      %v1545 = vadd.f32 %v1395, %v1531
      %v1546 = vadd.f32 %v1396, %v1536
      %v1547 = vld [vmem:[%s530] sm:$0xff]
      %v1548 = vld [vmem:[%s530 + $0x10] sm:$0xff]
      %v1549 = vld [vmem:[%s530 + $0x20] sm:$0xff]
      %v1550 = vld [vmem:[%s530 + $0x30] sm:$0xff]
      %v1551 = vld [vmem:[%s530 + $0x40] sm:$0xff]
      %v1552 = vld [vmem:[%s530 + $0x50] sm:$0xff]
      %v1553 = vld [vmem:[%s530 + $0x60] sm:$0xff]
      %v1554 = vld [vmem:[%s530 + $0x70] sm:$0xff]
      %s1555 = scalar_lea.vmem %s4, 12
      %v1556 = vld [vmem:[%s1555] sm:$0x3]
      %v1558 = vsel %vm410, %v1547, 0
      %v1561 = vsel %vm410, %v1548, 0
      %v1564 = vsel %vm410, %v1549, 0
      %v1567 = vsel %vm410, %v1550, 0
      %v1570 = vsel %vm410, %v1551, 0
      %v1573 = vsel %vm410, %v1552, 0
      %v1576 = vsel %vm410, %v1553, 0
      %v1579 = vsel %vm410, %v1554, 0
      %v1582 = vsel %vm706, %v1556, 0
      %1584 = vmatprep.subr.mxu0 0.0
      %1585 = vmatpush1.msra.mxu0 %v1582
      %1586 = vmatprep.subr.mxu0 0.0
      %1587 = vmatpush1.msra.mxu0 0.0
      %1588 = vmatprep.subr.mxu0 0.0
      %1589 = vmatpush1.msra.mxu0 0.0
      %1590 = vmatprep.subr.mxu0 0.0
      %1591 = vmatpush1.msra.mxu0 0.0
      %1592 = vmatprep.subr.mxu0 0.0
      %1593 = vmatpush1.msra.mxu0 0.0
      %1594 = vmatprep.subr.mxu0 0.0
      %1595 = vmatpush1.msra.mxu0 0.0
      %1596 = vmatprep.subr.mxu0 0.0
      %1597 = vmatpush1.msra.mxu0 0.0
      %1598 = vmatprep.subr.mxu0 0.0
      %1599 = vmatpush1.msra.mxu0 0.0
      %1600 = vmatprep.subr.mxu0 0.0
      %1601 = vmatpush1.msra.mxu0 0.0
      %1602 = vmatprep.subr.mxu0 0.0
      %1603 = vmatpush1.msra.mxu0 0.0
      %1604 = vmatprep.subr.mxu0 0.0
      %1605 = vmatpush1.msra.mxu0 0.0
      %1606 = vmatprep.subr.mxu0 0.0
      %1607 = vmatpush1.msra.mxu0 0.0
      %1608 = vmatprep.subr.mxu0 0.0
      %1609 = vmatpush1.msra.mxu0 0.0
      %1610 = vmatprep.subr.mxu0 0.0
      %1611 = vmatpush1.msra.mxu0 0.0
      %1612 = vmatprep.subr.mxu0 0.0
      %1613 = vmatpush1.msra.mxu0 0.0
      %1614 = vmatprep.subr.mxu0 0.0
      %1615 = vmatpush1.msra.mxu0 0.0
      %1616 = vmatprep.subr.mxu0 0.0
      %1617 = vmatpush1.msra.mxu0 0.0
      %1618 = vmatprep.subr.mxu0 0.0
      %1619 = vmatpush1.msra.mxu0 0.0
      %1620 = vmatprep.subr.mxu0 0.0
      %1621 = vmatpush1.msra.mxu0 0.0
      %1622 = vmatprep.subr.mxu0 0.0
      %1623 = vmatpush1.msra.mxu0 0.0
      %1624 = vmatprep.subr.mxu0 0.0
      %1625 = vmatpush1.msra.mxu0 0.0
      %1626 = vmatprep.subr.mxu0 0.0
      %1627 = vmatpush1.msra.mxu0 0.0
      %1628 = vmatprep.subr.mxu0 0.0
      %1629 = vmatpush1.msra.mxu0 0.0
      %1630 = vmatprep.subr.mxu0 0.0
      %1631 = vmatpush1.msra.mxu0 0.0
      %1632 = vmatprep.subr.mxu0 0.0
      %1633 = vmatpush1.msra.mxu0 0.0
      %1634 = vmatprep.subr.mxu0 0.0
      %1635 = vmatpush1.msra.mxu0 0.0
      %1636 = vmatprep.subr.mxu0 0.0
      %1637 = vmatpush1.msra.mxu0 0.0
      %1638 = vmatprep.subr.mxu0 0.0
      %1639 = vmatpush1.msra.mxu0 0.0
      %1640 = vmatprep.subr.mxu0 0.0
      %1641 = vmatpush1.msra.mxu0 0.0
      %1642 = vmatprep.subr.mxu0 0.0
      %1643 = vmatpush1.msra.mxu0 0.0
      %1644 = vmatprep.subr.mxu0 0.0
      %1645 = vmatpush1.msra.mxu0 0.0
      %1646 = vmatprep.subr.mxu0 0.0
      %1647 = vmatpush1.msra.mxu0 0.0
      %1648 = vmatprep.mubr.f32.mxu0 0.0
      %1649 = vmatmul.mubr.f32.gmra.mrb[0].mxu0 %v1558
      %v1650 = vpop.f32.mrb[0].mxu0
      %v1651 = vadd.f32 0.0, %v1650
      %v1652 = vpop.f32.mrb[0].mxu0
      %1653 = vmatprep.mubr.f32.mxu0 0.0
      %1654 = vmatmul.mubr.f32.gmra.mrb[0].mxu0 %v1561
      %v1655 = vpop.f32.mrb[0].mxu0
      %v1656 = vadd.f32 0.0, %v1655
      %v1657 = vpop.f32.mrb[0].mxu0
      %1658 = vmatprep.mubr.f32.mxu0 0.0
      %1659 = vmatmul.mubr.f32.gmra.mrb[0].mxu0 %v1564
      %v1660 = vpop.f32.mrb[0].mxu0
      %v1661 = vadd.f32 0.0, %v1660
      %v1662 = vpop.f32.mrb[0].mxu0
      %1663 = vmatprep.mubr.f32.mxu0 0.0
      %1664 = vmatmul.mubr.f32.gmra.mrb[0].mxu0 %v1567
      %v1665 = vpop.f32.mrb[0].mxu0
      %v1666 = vadd.f32 0.0, %v1665
      %v1667 = vpop.f32.mrb[0].mxu0
      %1668 = vmatprep.mubr.f32.mxu0 0.0
      %1669 = vmatmul.mubr.f32.gmra.mrb[0].mxu0 %v1570
      %v1670 = vpop.f32.mrb[0].mxu0
      %v1671 = vadd.f32 0.0, %v1670
      %v1672 = vpop.f32.mrb[0].mxu0
      %1673 = vmatprep.mubr.f32.mxu0 0.0
      %1674 = vmatmul.mubr.f32.gmra.mrb[0].mxu0 %v1573
      %v1675 = vpop.f32.mrb[0].mxu0
      %v1676 = vadd.f32 0.0, %v1675
      %v1677 = vpop.f32.mrb[0].mxu0
      %1678 = vmatprep.mubr.f32.mxu0 0.0
      %1679 = vmatmul.mubr.f32.gmra.mrb[0].mxu0 %v1576
      %v1680 = vpop.f32.mrb[0].mxu0
      %v1681 = vadd.f32 0.0, %v1680
      %v1682 = vpop.f32.mrb[0].mxu0
      %1683 = vmatprep.mubr.f32.mxu0 0.0
      %1684 = vmatmul.mubr.f32.gmra.mrb[0].mxu0 %v1579
      %v1685 = vpop.f32.mrb[0].mxu0
      %v1686 = vadd.f32 0.0, %v1685
      %v1687 = vpop.f32.mrb[0].mxu0
      %1688 = vdwg.mxu0
      %v1689 = vadd.f32 %v1539, %v1651
      %v1690 = vadd.f32 %v1540, %v1656
      %v1691 = vadd.f32 %v1541, %v1661
      %v1692 = vadd.f32 %v1542, %v1666
      %v1693 = vadd.f32 %v1543, %v1671
      %v1694 = vadd.f32 %v1544, %v1676
      %v1695 = vadd.f32 %v1545, %v1681
      %v1696 = vadd.f32 %v1546, %v1686
      %v1697 = vld [vmem:[%s571] sm:$0xff]
      %v1698 = vld [vmem:[%s571 + $0x10] sm:$0xff]
      %v1699 = vld [vmem:[%s571 + $0x20] sm:$0xff]
      %v1700 = vld [vmem:[%s571 + $0x30] sm:$0xff]
      %v1701 = vld [vmem:[%s571 + $0x40] sm:$0xff]
      %v1702 = vld [vmem:[%s571 + $0x50] sm:$0xff]
      %v1703 = vld [vmem:[%s571 + $0x60] sm:$0xff]
      %v1704 = vld [vmem:[%s571 + $0x70] sm:$0xff]
      %s1705 = scalar_lea.vmem %s4, 14
      %v1706 = vld [vmem:[%s1705] sm:$0x3]
      %v1708 = vsel %vm410, %v1697, 0
      %v1711 = vsel %vm410, %v1698, 0
      %v1714 = vsel %vm410, %v1699, 0
      %v1717 = vsel %vm410, %v1700, 0
      %v1720 = vsel %vm410, %v1701, 0
      %v1723 = vsel %vm410, %v1702, 0
      %v1726 = vsel %vm410, %v1703, 0
      %v1729 = vsel %vm410, %v1704, 0
      %v1732 = vsel %vm706, %v1706, 0
      %1734 = vmatprep.subr.mxu0 0.0
      %1735 = vmatpush1.msra.mxu0 %v1732
      %1736 = vmatprep.subr.mxu0 0.0
      %1737 = vmatpush1.msra.mxu0 0.0
      %1738 = vmatprep.subr.mxu0 0.0
      %1739 = vmatpush1.msra.mxu0 0.0
      %1740 = vmatprep.subr.mxu0 0.0
      %1741 = vmatpush1.msra.mxu0 0.0
      %1742 = vmatprep.subr.mxu0 0.0
      %1743 = vmatpush1.msra.mxu0 0.0
      %1744 = vmatprep.subr.mxu0 0.0
      %1745 = vmatpush1.msra.mxu0 0.0
      %1746 = vmatprep.subr.mxu0 0.0
      %1747 = vmatpush1.msra.mxu0 0.0
      %1748 = vmatprep.subr.mxu0 0.0
      %1749 = vmatpush1.msra.mxu0 0.0
      %1750 = vmatprep.subr.mxu0 0.0
      %1751 = vmatpush1.msra.mxu0 0.0
      %1752 = vmatprep.subr.mxu0 0.0
      %1753 = vmatpush1.msra.mxu0 0.0
      %1754 = vmatprep.subr.mxu0 0.0
      %1755 = vmatpush1.msra.mxu0 0.0
      %1756 = vmatprep.subr.mxu0 0.0
      %1757 = vmatpush1.msra.mxu0 0.0
      %1758 = vmatprep.subr.mxu0 0.0
      %1759 = vmatpush1.msra.mxu0 0.0
      %1760 = vmatprep.subr.mxu0 0.0
      %1761 = vmatpush1.msra.mxu0 0.0
      %1762 = vmatprep.subr.mxu0 0.0
      %1763 = vmatpush1.msra.mxu0 0.0
      %1764 = vmatprep.subr.mxu0 0.0
      %1765 = vmatpush1.msra.mxu0 0.0
      %1766 = vmatprep.subr.mxu0 0.0
      %1767 = vmatpush1.msra.mxu0 0.0
      %1768 = vmatprep.subr.mxu0 0.0
      %1769 = vmatpush1.msra.mxu0 0.0
      %1770 = vmatprep.subr.mxu0 0.0
      %1771 = vmatpush1.msra.mxu0 0.0
      %1772 = vmatprep.subr.mxu0 0.0
      %1773 = vmatpush1.msra.mxu0 0.0
      %1774 = vmatprep.subr.mxu0 0.0
      %1775 = vmatpush1.msra.mxu0 0.0
      %1776 = vmatprep.subr.mxu0 0.0
      %1777 = vmatpush1.msra.mxu0 0.0
      %1778 = vmatprep.subr.mxu0 0.0
      %1779 = vmatpush1.msra.mxu0 0.0
      %1780 = vmatprep.subr.mxu0 0.0
      %1781 = vmatpush1.msra.mxu0 0.0
      %1782 = vmatprep.subr.mxu0 0.0
      %1783 = vmatpush1.msra.mxu0 0.0
      %1784 = vmatprep.subr.mxu0 0.0
      %1785 = vmatpush1.msra.mxu0 0.0
      %1786 = vmatprep.subr.mxu0 0.0
      %1787 = vmatpush1.msra.mxu0 0.0
      %1788 = vmatprep.subr.mxu0 0.0
      %1789 = vmatpush1.msra.mxu0 0.0
      %1790 = vmatprep.subr.mxu0 0.0
      %1791 = vmatpush1.msra.mxu0 0.0
      %1792 = vmatprep.subr.mxu0 0.0
      %1793 = vmatpush1.msra.mxu0 0.0
      %1794 = vmatprep.subr.mxu0 0.0
      %1795 = vmatpush1.msra.mxu0 0.0
      %1796 = vmatprep.subr.mxu0 0.0
      %1797 = vmatpush1.msra.mxu0 0.0
      %1798 = vmatprep.mubr.f32.mxu0 0.0
      %1799 = vmatmul.mubr.f32.gmra.mrb[0].mxu0 %v1708
      %v1800 = vpop.f32.mrb[0].mxu0
      %v1801 = vadd.f32 0.0, %v1800
      %v1802 = vpop.f32.mrb[0].mxu0
      %1803 = vmatprep.mubr.f32.mxu0 0.0
      %1804 = vmatmul.mubr.f32.gmra.mrb[0].mxu0 %v1711
      %v1805 = vpop.f32.mrb[0].mxu0
      %v1806 = vadd.f32 0.0, %v1805
      %v1807 = vpop.f32.mrb[0].mxu0
      %1808 = vmatprep.mubr.f32.mxu0 0.0
      %1809 = vmatmul.mubr.f32.gmra.mrb[0].mxu0 %v1714
      %v1810 = vpop.f32.mrb[0].mxu0
      %v1811 = vadd.f32 0.0, %v1810
      %v1812 = vpop.f32.mrb[0].mxu0
      %1813 = vmatprep.mubr.f32.mxu0 0.0
      %1814 = vmatmul.mubr.f32.gmra.mrb[0].mxu0 %v1717
      %v1815 = vpop.f32.mrb[0].mxu0
      %v1816 = vadd.f32 0.0, %v1815
      %v1817 = vpop.f32.mrb[0].mxu0
      %1818 = vmatprep.mubr.f32.mxu0 0.0
      %1819 = vmatmul.mubr.f32.gmra.mrb[0].mxu0 %v1720
      %v1820 = vpop.f32.mrb[0].mxu0
      %v1821 = vadd.f32 0.0, %v1820
      %v1822 = vpop.f32.mrb[0].mxu0
      %1823 = vmatprep.mubr.f32.mxu0 0.0
      %1824 = vmatmul.mubr.f32.gmra.mrb[0].mxu0 %v1723
      %v1825 = vpop.f32.mrb[0].mxu0
      %v1826 = vadd.f32 0.0, %v1825
      %v1827 = vpop.f32.mrb[0].mxu0
      %1828 = vmatprep.mubr.f32.mxu0 0.0
      %1829 = vmatmul.mubr.f32.gmra.mrb[0].mxu0 %v1726
      %v1830 = vpop.f32.mrb[0].mxu0
      %v1831 = vadd.f32 0.0, %v1830
      %v1832 = vpop.f32.mrb[0].mxu0
      %1833 = vmatprep.mubr.f32.mxu0 0.0
      %1834 = vmatmul.mubr.f32.gmra.mrb[0].mxu0 %v1729
      %v1835 = vpop.f32.mrb[0].mxu0
      %v1836 = vadd.f32 0.0, %v1835
      %v1837 = vpop.f32.mrb[0].mxu0
      %1838 = vdwg.mxu0
      %v1839 = vadd.f32 %v1689, %v1801
      %v1840 = vadd.f32 %v1690, %v1806
      %v1841 = vadd.f32 %v1691, %v1811
      %v1842 = vadd.f32 %v1692, %v1816
      %v1843 = vadd.f32 %v1693, %v1821
      %v1844 = vadd.f32 %v1694, %v1826
      %v1845 = vadd.f32 %v1695, %v1831
      %v1846 = vadd.f32 %v1696, %v1836
      %v1847 = vld [vmem:[%s530 + $0x1] sm:$0xff]
      %v1848 = vld [vmem:[%s530 + $0x11] sm:$0xff]
      %v1849 = vld [vmem:[%s530 + $0x21] sm:$0xff]
      %v1850 = vld [vmem:[%s530 + $0x31] sm:$0xff]
      %v1851 = vld [vmem:[%s530 + $0x41] sm:$0xff]
      %v1852 = vld [vmem:[%s530 + $0x51] sm:$0xff]
      %v1853 = vld [vmem:[%s530 + $0x61] sm:$0xff]
      %v1854 = vld [vmem:[%s530 + $0x71] sm:$0xff]
      %s1855 = scalar_lea.vmem %s4, 16
      %v1856 = vld [vmem:[%s1855] sm:$0x3]
      %v1858 = vsel %vm410, %v1847, 0
      %v1861 = vsel %vm410, %v1848, 0
      %v1864 = vsel %vm410, %v1849, 0
      %v1867 = vsel %vm410, %v1850, 0
      %v1870 = vsel %vm410, %v1851, 0
      %v1873 = vsel %vm410, %v1852, 0
      %v1876 = vsel %vm410, %v1853, 0
      %v1879 = vsel %vm410, %v1854, 0
      %v1882 = vsel %vm706, %v1856, 0
      %1884 = vmatprep.subr.mxu0 0.0
      %1885 = vmatpush1.msra.mxu0 %v1882
      %1886 = vmatprep.subr.mxu0 0.0
      %1887 = vmatpush1.msra.mxu0 0.0
      %1888 = vmatprep.subr.mxu0 0.0
      %1889 = vmatpush1.msra.mxu0 0.0
      %1890 = vmatprep.subr.mxu0 0.0
      %1891 = vmatpush1.msra.mxu0 0.0
      %1892 = vmatprep.subr.mxu0 0.0
      %1893 = vmatpush1.msra.mxu0 0.0
      %1894 = vmatprep.subr.mxu0 0.0
      %1895 = vmatpush1.msra.mxu0 0.0
      %1896 = vmatprep.subr.mxu0 0.0
      %1897 = vmatpush1.msra.mxu0 0.0
      %1898 = vmatprep.subr.mxu0 0.0
      %1899 = vmatpush1.msra.mxu0 0.0
      %1900 = vmatprep.subr.mxu0 0.0
      %1901 = vmatpush1.msra.mxu0 0.0
      %1902 = vmatprep.subr.mxu0 0.0
      %1903 = vmatpush1.msra.mxu0 0.0
      %1904 = vmatprep.subr.mxu0 0.0
      %1905 = vmatpush1.msra.mxu0 0.0
      %1906 = vmatprep.subr.mxu0 0.0
      %1907 = vmatpush1.msra.mxu0 0.0
      %1908 = vmatprep.subr.mxu0 0.0
      %1909 = vmatpush1.msra.mxu0 0.0
      %1910 = vmatprep.subr.mxu0 0.0
      %1911 = vmatpush1.msra.mxu0 0.0
      %1912 = vmatprep.subr.mxu0 0.0
      %1913 = vmatpush1.msra.mxu0 0.0
      %1914 = vmatprep.subr.mxu0 0.0
      %1915 = vmatpush1.msra.mxu0 0.0
      %1916 = vmatprep.subr.mxu0 0.0
      %1917 = vmatpush1.msra.mxu0 0.0
      %1918 = vmatprep.subr.mxu0 0.0
      %1919 = vmatpush1.msra.mxu0 0.0
      %1920 = vmatprep.subr.mxu0 0.0
      %1921 = vmatpush1.msra.mxu0 0.0
      %1922 = vmatprep.subr.mxu0 0.0
      %1923 = vmatpush1.msra.mxu0 0.0
      %1924 = vmatprep.subr.mxu0 0.0
      %1925 = vmatpush1.msra.mxu0 0.0
      %1926 = vmatprep.subr.mxu0 0.0
      %1927 = vmatpush1.msra.mxu0 0.0
      %1928 = vmatprep.subr.mxu0 0.0
      %1929 = vmatpush1.msra.mxu0 0.0
      %1930 = vmatprep.subr.mxu0 0.0
      %1931 = vmatpush1.msra.mxu0 0.0
      %1932 = vmatprep.subr.mxu0 0.0
      %1933 = vmatpush1.msra.mxu0 0.0
      %1934 = vmatprep.subr.mxu0 0.0
      %1935 = vmatpush1.msra.mxu0 0.0
      %1936 = vmatprep.subr.mxu0 0.0
      %1937 = vmatpush1.msra.mxu0 0.0
      %1938 = vmatprep.subr.mxu0 0.0
      %1939 = vmatpush1.msra.mxu0 0.0
      %1940 = vmatprep.subr.mxu0 0.0
      %1941 = vmatpush1.msra.mxu0 0.0
      %1942 = vmatprep.subr.mxu0 0.0
      %1943 = vmatpush1.msra.mxu0 0.0
      %1944 = vmatprep.subr.mxu0 0.0
      %1945 = vmatpush1.msra.mxu0 0.0
      %1946 = vmatprep.subr.mxu0 0.0
      %1947 = vmatpush1.msra.mxu0 0.0
      %1948 = vmatprep.mubr.f32.mxu0 0.0
      %1949 = vmatmul.mubr.f32.gmra.mrb[0].mxu0 %v1858
      %v1950 = vpop.f32.mrb[0].mxu0
      %v1951 = vadd.f32 0.0, %v1950
      %v1952 = vpop.f32.mrb[0].mxu0
      %1953 = vmatprep.mubr.f32.mxu0 0.0
      %1954 = vmatmul.mubr.f32.gmra.mrb[0].mxu0 %v1861
      %v1955 = vpop.f32.mrb[0].mxu0
      %v1956 = vadd.f32 0.0, %v1955
      %v1957 = vpop.f32.mrb[0].mxu0
      %1958 = vmatprep.mubr.f32.mxu0 0.0
      %1959 = vmatmul.mubr.f32.gmra.mrb[0].mxu0 %v1864
      %v1960 = vpop.f32.mrb[0].mxu0
      %v1961 = vadd.f32 0.0, %v1960
      %v1962 = vpop.f32.mrb[0].mxu0
      %1963 = vmatprep.mubr.f32.mxu0 0.0
      %1964 = vmatmul.mubr.f32.gmra.mrb[0].mxu0 %v1867
      %v1965 = vpop.f32.mrb[0].mxu0
      %v1966 = vadd.f32 0.0, %v1965
      %v1967 = vpop.f32.mrb[0].mxu0
      %1968 = vmatprep.mubr.f32.mxu0 0.0
      %1969 = vmatmul.mubr.f32.gmra.mrb[0].mxu0 %v1870
      %v1970 = vpop.f32.mrb[0].mxu0
      %v1971 = vadd.f32 0.0, %v1970
      %v1972 = vpop.f32.mrb[0].mxu0
      %1973 = vmatprep.mubr.f32.mxu0 0.0
      %1974 = vmatmul.mubr.f32.gmra.mrb[0].mxu0 %v1873
      %v1975 = vpop.f32.mrb[0].mxu0
      %v1976 = vadd.f32 0.0, %v1975
      %v1977 = vpop.f32.mrb[0].mxu0
      %1978 = vmatprep.mubr.f32.mxu0 0.0
      %1979 = vmatmul.mubr.f32.gmra.mrb[0].mxu0 %v1876
      %v1980 = vpop.f32.mrb[0].mxu0
      %v1981 = vadd.f32 0.0, %v1980
      %v1982 = vpop.f32.mrb[0].mxu0
      %1983 = vmatprep.mubr.f32.mxu0 0.0
      %1984 = vmatmul.mubr.f32.gmra.mrb[0].mxu0 %v1879
      %v1985 = vpop.f32.mrb[0].mxu0
      %v1986 = vadd.f32 0.0, %v1985
      %v1987 = vpop.f32.mrb[0].mxu0
      %1988 = vdwg.mxu0
      %v1989 = vadd.f32 %v1839, %v1951
      %v1990 = vadd.f32 %v1840, %v1956
      %v1991 = vadd.f32 %v1841, %v1961
      %v1992 = vadd.f32 %v1842, %v1966
      %v1993 = vadd.f32 %v1843, %v1971
      %v1994 = vadd.f32 %v1844, %v1976
      %v1995 = vadd.f32 %v1845, %v1981
      %v1996 = vadd.f32 %v1846, %v1986
      %1997 = vst.msk [vmem:[%s403] sm:$0xff] %vm410, %v1989
      %1998 = vst.msk [vmem:[%s403 + $0x8] sm:$0xff] %vm410, %v1990
      %1999 = vst.msk [vmem:[%s403 + $0x10] sm:$0xff] %vm410, %v1991
      %2000 = vst.msk [vmem:[%s403 + $0x18] sm:$0xff] %vm410, %v1992
      %2001 = vst.msk [vmem:[%s403 + $0x20] sm:$0xff] %vm410, %v1993
      %2002 = vst.msk [vmem:[%s403 + $0x28] sm:$0xff] %vm410, %v1994
      %2003 = vst.msk [vmem:[%s403 + $0x30] sm:$0xff] %vm410, %v1995
      %2004 = vst.msk [vmem:[%s403 + $0x38] sm:$0xff] %vm410, %v1996
      %v2005 = vsel %vm410, %v1989, 0.0
      %v2006 = vsel %vm410, %v1990, 0.0
      %v2007 = vadd.f32 %v2005, %v2006
      %v2008 = vsel %vm410, %v1991, 0.0
      %v2009 = vadd.f32 %v2007, %v2008
      %v2010 = vsel %vm410, %v1992, 0.0
      %v2011 = vadd.f32 %v2009, %v2010
      %v2012 = vsel %vm410, %v1993, 0.0
      %v2013 = vadd.f32 %v2011, %v2012
      %v2014 = vsel %vm410, %v1994, 0.0
      %v2015 = vadd.f32 %v2013, %v2014
      %v2016 = vsel %vm410, %v1995, 0.0
      %v2017 = vadd.f32 %v2015, %v2016
      %v2018 = vsel %vm410, %v1996, 0.0
      %v2019 = vadd.f32 %v2017, %v2018
      %v2020 = vrot.slane %v2019, 4
      %v2021 = vadd.f32 %v2019, %v2020
      %v2022 = vrot.slane %v2021, 2
      %v2023 = vadd.f32 %v2021, %v2022
      %v2024 = vrot.slane %v2023, 1
      %v2025 = vadd.f32 %v2023, %v2024
      %2026 = vst.msk [vmem:[%s406] sm:$0x1] %vm412, %v2025
      %v2027 = vmul.f32 %v1989, %v1989
      %v2028 = vmul.f32 %v1990, %v1990
      %v2029 = vmul.f32 %v1991, %v1991
      %v2030 = vmul.f32 %v1992, %v1992
      %v2031 = vmul.f32 %v1993, %v1993
      %v2032 = vmul.f32 %v1994, %v1994
      %v2033 = vmul.f32 %v1995, %v1995
      %v2034 = vmul.f32 %v1996, %v1996
      %v2035 = vsel %vm410, %v2027, 0.0
      %v2036 = vsel %vm410, %v2028, 0.0
      %v2037 = vadd.f32 %v2035, %v2036
      %v2038 = vsel %vm410, %v2029, 0.0
      %v2039 = vadd.f32 %v2037, %v2038
      %v2040 = vsel %vm410, %v2030, 0.0
      %v2041 = vadd.f32 %v2039, %v2040
      %v2042 = vsel %vm410, %v2031, 0.0
      %v2043 = vadd.f32 %v2041, %v2042
      %v2044 = vsel %vm410, %v2032, 0.0
      %v2045 = vadd.f32 %v2043, %v2044
      %v2046 = vsel %vm410, %v2033, 0.0
      %v2047 = vadd.f32 %v2045, %v2046
      %v2048 = vsel %vm410, %v2034, 0.0
      %v2049 = vadd.f32 %v2047, %v2048
      %v2050 = vrot.slane %v2049, 4
      %v2051 = vadd.f32 %v2049, %v2050
      %v2052 = vrot.slane %v2051, 2
      %v2053 = vadd.f32 %v2051, %v2052
      %v2054 = vrot.slane %v2053, 1
      %v2055 = vadd.f32 %v2053, %v2054
      %2056 = vst.msk [vmem:[%s409] sm:$0x1] %vm412, %v2055
      %p2057 = scmp.lt.s32.totalorder %s21, 1
      %s2058 = scalar_select %p2057, %s21, 1
      %s2059 = smul.addr %s2058, 8
      %s2060 = smul.addr %s2059, 8
      %s2061 = scalar_lea.vmem %s7, %s2060
      %p2062 = scmp.lt.s32.totalorder %s21, 1
      %s2063 = scalar_select %p2062, %s21, 1
      %s2064 = scalar_lea.vmem %s8, %s2063
      %p2065 = scmp.lt.s32.totalorder %s21, 1
      %s2066 = scalar_select %p2065, %s21, 1
      %s2067 = scalar_lea.vmem %s9, %s2066
      // Predicated region
      $region49: #{res_bottleneck_block.6} parent=47 // pred_check
        %p2068 = pneg %p206
      $region50: #{res_bottleneck_block.6} parent=47 // pred_check_branch
        %2070 = sbr.rel (%p2068) target = $region52
      $region51: #{res_bottleneck_block.6} parent=47 // pred_region
        _
      $region52: #{res_bottleneck_block.6} parent=47 // pred_fallthru
        _
      // Predicated region
      $region53: #{res_bottleneck_block.6} parent=47 // pred_check
        %p2071 = pneg %p232
      $region54: #{res_bottleneck_block.6} parent=47 // pred_check_branch
        %2073 = sbr.rel (%p2071) target = $region56
      $region55: #{res_bottleneck_block.6} parent=47 // pred_region
        _
      $region56: #{res_bottleneck_block.6} parent=47 // pred_fallthru
        _
      // Predicated region
      $region57: #{res_bottleneck_block.6} parent=47 // pred_check
        %p2074 = pneg %p258
      $region58: #{res_bottleneck_block.6} parent=47 // pred_check_branch
        %2076 = sbr.rel (%p2074) target = $region60
      $region59: #{res_bottleneck_block.6} parent=47 // pred_region
        _
      $region60: #{res_bottleneck_block.6} parent=47 // pred_fallthru
        _
    $region48: #{res_bottleneck_block.6} parent=5 // pred_fallthru
      _
    %p2077 = scmp.le.s32.totalorder 2, %s16
    // Predicated region
    $region61: #{res_bottleneck_block.6} parent=5 // pred_check
      %p2078 = pneg %p2077
    $region62: #{res_bottleneck_block.6} parent=5 // pred_check_branch
      %2080 = sbr.rel (%p2078) target = $region64
    $region63: #{res_bottleneck_block.6} parent=5 // pred_region
      %s2081 = ssub.s32 %s16, 2
      // Predicated region
      $region65: #{res_bottleneck_block.6} parent=63 // pred_check
        %p2082 = pneg %p212
      $region66: #{res_bottleneck_block.6} parent=63 // pred_check_branch
        %2084 = sbr.rel (%p2082) target = $region68
      $region67: #{res_bottleneck_block.6} parent=63 // pred_region
        %p2085 = scmp.lt.s32.totalorder %s22, 1
        %s2086 = scalar_select %p2085, %s22, 1
        %s2087 = smul.addr %s2086, 8
        %s2088 = smul.addr %s2087, 8
        %s2089 = scalar_lea.vmem %s7, %s2088
      $region68: #{res_bottleneck_block.6} parent=63 // pred_fallthru
        _
      // Predicated region
      $region69: #{res_bottleneck_block.6} parent=63 // pred_check
        %p2090 = pneg %p238
      $region70: #{res_bottleneck_block.6} parent=63 // pred_check_branch
        %2092 = sbr.rel (%p2090) target = $region72
      $region71: #{res_bottleneck_block.6} parent=63 // pred_region
        %p2093 = scmp.lt.s32.totalorder %s22, 1
        %s2094 = scalar_select %p2093, %s22, 1
        %s2095 = scalar_lea.vmem %s8, %s2094
      $region72: #{res_bottleneck_block.6} parent=63 // pred_fallthru
        _
      // Predicated region
      $region73: #{res_bottleneck_block.6} parent=63 // pred_check
        %p2096 = pneg %p264
      $region74: #{res_bottleneck_block.6} parent=63 // pred_check_branch
        %2098 = sbr.rel (%p2096) target = $region76
      $region75: #{res_bottleneck_block.6} parent=63 // pred_region
        %p2099 = scmp.lt.s32.totalorder %s22, 1
        %s2100 = scalar_select %p2099, %s22, 1
        %s2101 = scalar_lea.vmem %s9, %s2100
      $region76: #{res_bottleneck_block.6} parent=63 // pred_fallthru
        _
    $region64: #{res_bottleneck_block.6} parent=5 // pred_fallthru
      _
  $region6: #{res_bottleneck_block.6} parent=0 // loop_footer
    %s20 = sadd.s32 1, %s16
  $region7: #{res_bottleneck_block.6} parent=0 // loop_footer_branch
    %15 = sbr.rel target = $region3
  $region8: #{res_bottleneck_block.6} parent=0 // loop_exit
    _

</llo_original>
